<compile_context>
chip_gen: v7x
topology: tpu7x:2x2x1
jax: 0.10.0
libtpu: 0.0.40
codegen_flags: <defaults>
</compile_context>

<pallas_src>
import math

import jax
import jax.numpy as jnp
from jax.experimental import pallas as pl
from jax.experimental.pallas import tpu as pltpu


IN_FEATURES = 1600
H1 = 784
H1_PAD = 896          # 784 padded to a multiple of 128 (exact-zero columns/rows)
H2 = 256
H3 = 32
POSE_IN = 2
POSE_OUT = 32
OUT = 4

# Row layout of the packed small-parameter buffer (one fp32 DMA).
(_ROW_B1, _ROW_B2, _ROW_B3, _ROW_BP, _ROW_BPOL,
 _ROW_WP0, _ROW_WP1, _ROW_S1, _ROW_S2) = range(9)
SMALL_ROWS = 16       # padded to a sublane-friendly row count


def dqn_kernel(frame_ref, pose_ref, w1_ref, w2_ref, w3_ref, wpol_ref, small_ref,
               q_ref):
    # Unpack the consolidated small-parameter buffer (one DMA instead of many).
    smalls = small_ref[...]                              # (16, 896) f32
    b1   = smalls[_ROW_B1:_ROW_B1 + 1, :]                # (1, 896) zero past 784
    b2   = smalls[_ROW_B2:_ROW_B2 + 1, :H2]              # (1, 256)
    b3   = smalls[_ROW_B3:_ROW_B3 + 1, :H3]              # (1, 32)
    bp   = smalls[_ROW_BP:_ROW_BP + 1, :POSE_OUT]        # (1, 32)
    bpol = smalls[_ROW_BPOL:_ROW_BPOL + 1, :OUT]         # (1, 4)
    wp0  = smalls[_ROW_WP0:_ROW_WP0 + 1, :POSE_OUT]      # (1, 32) fc_pose row 0
    wp1  = smalls[_ROW_WP1:_ROW_WP1 + 1, :POSE_OUT]      # (1, 32) fc_pose row 1
    s1   = smalls[_ROW_S1:_ROW_S1 + 1, :]                # (1, 896) fc1 dequant scale
    s2   = smalls[_ROW_S2:_ROW_S2 + 1, :H2]              # (1, 256) fc2 dequant scale

    # fc1 + relu: int8 weight -> bf16 (exact), fp32 MXU accumulation, then
    # per-output-channel dequant scale applied after the dot.
    w1 = w1_ref[...].astype(jnp.bfloat16)                # (1600, 896)
    h = jnp.dot(frame_ref[...], w1, preferred_element_type=jnp.float32)
    h = jnp.maximum(h * s1 + b1, 0.0)                    # (TB, 896) f32

    # fc2 + relu (same int8 dequant-after-dot scheme)
    w2 = w2_ref[...].astype(jnp.bfloat16)                # (896, 256)
    h = jnp.dot(h.astype(jnp.bfloat16), w2, preferred_element_type=jnp.float32)
    h = jnp.maximum(h * s2 + b2, 0.0)                    # (TB, 256)

    # fc3 + relu (tiny, stays bf16)
    h = jnp.dot(h.astype(jnp.bfloat16), w3_ref[...],
                preferred_element_type=jnp.float32)
    h = jnp.maximum(h + b3, 0.0)                         # (TB, 32)

    # fc_pose + relu on the VPU (a K=2 MXU matmul would be a wasted pass)
    pose = pose_ref[...]                                 # (TB, 2) f32
    hp = pose[:, 0:1] * wp0 + pose[:, 1:2] * wp1 + bp
    hp = jnp.maximum(hp, 0.0)                            # (TB, 32)

    # fc_pol on concat([h, hp], axis=1)  ==  split matmul (no lane concatenate)
    wpol = wpol_ref[...]                                 # (64, 4) bf16
    q = (jnp.dot(h.astype(jnp.bfloat16), wpol[0:H3, :],
                 preferred_element_type=jnp.float32)
         + jnp.dot(hp.astype(jnp.bfloat16), wpol[H3:, :],
                   preferred_element_type=jnp.float32)
         + bpol)
    q_ref[...] = q.astype(q_ref.dtype)


def init_linear(key, fan_in, fan_out):
    """PyTorch-style default init: U(-1/sqrt(fan_in), 1/sqrt(fan_in)).
    Weight stored transposed vs. PyTorch, i.e. (fan_in, fan_out): y = x @ W + b."""
    kw, kb = jax.random.split(key)
    bound = 1.0 / math.sqrt(fan_in)
    w = jax.random.uniform(kw, (fan_in, fan_out), jnp.float32, -bound, bound)
    b = jax.random.uniform(kb, (fan_out,), jnp.float32, -bound, bound)
    return w, b


def init_params(key):
    k1, k2, k3, kp, kpol = jax.random.split(key, 5)
    w1, b1 = init_linear(k1, IN_FEATURES, H1)
    w2, b2 = init_linear(k2, H1, H2)
    w3, b3 = init_linear(k3, H2, H3)
    wp, bp = init_linear(kp, POSE_IN, POSE_OUT)
    wpol, bpol = init_linear(kpol, H3 + POSE_OUT, OUT)
    return dict(w1=w1, b1=b1, w2=w2, b2=b2, w3=w3, b3=b3,
                wp=wp, bp=bp, wpol=wpol, bpol=bpol)


def _quantize_per_out_channel(w):
    """Symmetric per-output-column int8 quantization of a (K, N) fp32 weight."""
    amax = jnp.max(jnp.abs(w), axis=0)                       # (N,)
    scale = jnp.where(amax > 0, amax / 127.0, 1.0).astype(jnp.float32)
    q = jnp.clip(jnp.round(w / scale), -127, 127).astype(jnp.int8)
    return q, scale


def prepare_kernel_params(p):
    """Pack / pad / quantize the fp32 params into the kernel layout."""
    bf16 = jnp.bfloat16
    # fc1/fc2: int8 per-output-channel quantization, padded so the hidden width
    # is a multiple of 128 (pad entries are exact zeros -> no fc2 contamination).
    w1_q, s1 = _quantize_per_out_channel(p["w1"])            # (1600,784) i8
    w2_q, s2 = _quantize_per_out_channel(p["w2"])            # (784,256)  i8
    w1 = jnp.zeros((IN_FEATURES, H1_PAD), jnp.int8).at[:, :H1].set(w1_q)
    w2 = jnp.zeros((H1_PAD, H2), jnp.int8).at[:H1, :].set(w2_q)
    w3 = p["w3"].astype(bf16)
    wpol = p["wpol"].astype(bf16)
    # All tiny tensors + dequant scales packed into one fp32 buffer.
    smalls = jnp.zeros((SMALL_ROWS, H1_PAD), jnp.float32)
    smalls = smalls.at[_ROW_B1, :H1].set(p["b1"])
    smalls = smalls.at[_ROW_B2, :H2].set(p["b2"])
    smalls = smalls.at[_ROW_B3, :H3].set(p["b3"])
    smalls = smalls.at[_ROW_BP, :POSE_OUT].set(p["bp"])
    smalls = smalls.at[_ROW_BPOL, :OUT].set(p["bpol"])
    smalls = smalls.at[_ROW_WP0, :POSE_OUT].set(p["wp"][0])  # fc_pose kept fp32
    smalls = smalls.at[_ROW_WP1, :POSE_OUT].set(p["wp"][1])
    smalls = smalls.at[_ROW_S1, :H1].set(s1)
    smalls = smalls.at[_ROW_S2, :H2].set(s2)
    return dict(w1=w1, w2=w2, w3=w3, wpol=wpol, smalls=smalls)


def _batch_tile_cap():
    """Batch-tile cap = MXU M-width: 128 on v5e, 256 on v6e/v7x."""
    try:
        kind = jax.devices()[0].device_kind.lower()
    except Exception:
        return 256
    if "v5e" in kind or "v5 lite" in kind or "v5litepod" in kind:
        return 128
    return 256


def linear_dqn_forward(frame, robot_pose, kparams):
    B = frame.shape[0]
    frame2d = frame.reshape(B, -1).astype(jnp.bfloat16)       # (B, 1600)
    pose2d = robot_pose.reshape(B, -1).astype(jnp.float32)    # (B, 2)

    # Batch tiling: weights get constant block indices (fetched once, resident
    # in VMEM) while activation tiles stream; the "parallel" batch axis shards
    # across TensorCores when there are >=2 grid steps.  Non-multiple batches
    # are handled with a zero-padded last tile (cdiv grid), not a giant block.
    TB = min(_batch_tile_cap(), B)
    num_tiles = pl.cdiv(B, TB)
    Bp = num_tiles * TB
    if Bp != B:
        frame2d = jnp.pad(frame2d, ((0, Bp - B), (0, 0)))
        pose2d = jnp.pad(pose2d, ((0, Bp - B), (0, 0)))

    w1, w2, w3 = kparams["w1"], kparams["w2"], kparams["w3"]
    wpol, smalls = kparams["wpol"], kparams["smalls"]

    q = pl.pallas_call(
        dqn_kernel,
        out_shape=jax.ShapeDtypeStruct((Bp, OUT), jnp.float32),
        grid_spec=pltpu.PrefetchScalarGridSpec(
            num_scalar_prefetch=0,
            grid=(num_tiles,),
            in_specs=[
                pl.BlockSpec((TB, IN_FEATURES), lambda i: (i, 0)),   # frame tile
                pl.BlockSpec((TB, POSE_IN), lambda i: (i, 0)),       # pose tile
                pl.BlockSpec(w1.shape, lambda i: (0, 0)),            # resident
                pl.BlockSpec(w2.shape, lambda i: (0, 0)),
                pl.BlockSpec(w3.shape, lambda i: (0, 0)),
                pl.BlockSpec(wpol.shape, lambda i: (0, 0)),
                pl.BlockSpec(smalls.shape, lambda i: (0, 0)),
            ],
            out_specs=pl.BlockSpec((TB, OUT), lambda i: (i, 0)),
        ),
        compiler_params=pltpu.CompilerParams(
            dimension_semantics=("parallel",),
        ),
    )(frame2d, pose2d, w1, w2, w3, wpol, smalls)
    return q[:B] if Bp != B else q


def reference_forward(frame, robot_pose, kp):
    """Pure-JAX fp32 reference using exactly the weights the kernel sees
    (int8*scale for fc1/fc2, bf16-rounded fc3/fc_pol, fp32 fc_pose).  Remaining
    kernel drift is only bf16 activation rounding at layer boundaries, which the
    2e-2 tolerance covers."""
    B = frame.shape[0]
    x = frame.reshape(B, -1).astype(jnp.float32)
    pose = robot_pose.reshape(B, -1).astype(jnp.float32)
    sm = kp["smalls"]
    w1 = kp["w1"].astype(jnp.float32) * sm[_ROW_S1:_ROW_S1 + 1, :]        # (1600,896)
    w2 = kp["w2"].astype(jnp.float32) * sm[_ROW_S2:_ROW_S2 + 1, :H2]      # (896,256)
    w3 = kp["w3"].astype(jnp.float32)
    wpol = kp["wpol"].astype(jnp.float32)

    h = jnp.maximum(x @ w1 + sm[_ROW_B1:_ROW_B1 + 1, :], 0.0)             # (B,896)
    h = jnp.maximum(h @ w2 + sm[_ROW_B2:_ROW_B2 + 1, :H2], 0.0)           # (B,256)
    h = jnp.maximum(h @ w3 + sm[_ROW_B3:_ROW_B3 + 1, :H3], 0.0)           # (B,32)
    hp = jnp.maximum(pose[:, 0:1] * sm[_ROW_WP0:_ROW_WP0 + 1, :POSE_OUT]
                     + pose[:, 1:2] * sm[_ROW_WP1:_ROW_WP1 + 1, :POSE_OUT]
                     + sm[_ROW_BP:_ROW_BP + 1, :POSE_OUT], 0.0)           # (B,32)
    cat = jnp.concatenate([h, hp], axis=1)                                # (B,64)
    return cat @ wpol + sm[_ROW_BPOL:_ROW_BPOL + 1, :OUT]


if __name__ == "__main__":
    key = jax.random.PRNGKey(0)
    kf, kpose, kparams_key = jax.random.split(key, 3)

    B = 2
    # frame flattens to 1600 features -> (B, 1, 40, 40); pose is (B, 2).
    frame = jax.random.normal(kf, (B, 1, 40, 40), jnp.float32)
    robot_pose = jax.random.normal(kpose, (B, 2), jnp.float32)

    params = init_params(kparams_key)
    kernel_params = prepare_kernel_params(params)

    q = linear_dqn_forward(frame, robot_pose, kernel_params)
    q = jax.block_until_ready(q)

    q_ref = reference_forward(frame, robot_pose, kernel_params)
    assert q.shape == (B, OUT)
    max_err = jnp.max(jnp.abs(q - q_ref))
    assert jnp.allclose(q, q_ref, atol=2e-2, rtol=2e-2), \
        f"mismatch vs JAX reference (max abs err {max_err})"

    print("KERNEL_OK")
</pallas_src>

<mosaic_0001>
module attributes {stable_mosaic.version = 11 : i64} {
  func.func @dqn_kernel(%arg0: i32, %arg1: memref<2x1600xbf16, #tpu.memory_space<vmem>>, %arg2: memref<2x2xf32, #tpu.memory_space<vmem>>, %arg3: memref<1600x896xi8, #tpu.memory_space<vmem>>, %arg4: memref<896x256xi8, #tpu.memory_space<vmem>>, %arg5: memref<256x32xbf16, #tpu.memory_space<vmem>>, %arg6: memref<64x4xbf16, #tpu.memory_space<vmem>>, %arg7: memref<16x896xf32, #tpu.memory_space<vmem>>, %arg8: memref<2x4xf32, #tpu.memory_space<vmem>>) attributes {dimension_semantics = [#tpu.dimension_semantics<parallel>], iteration_bounds = array<i64: 1>, scalar_prefetch = 0 : i64, scratch_operands = 0 : i64, tpu.core_type = #tpu.core_type<tc>, window_params = [{transform_indices = @transform_0, window_bounds = array<i64: 2, 1600>}, {transform_indices = @transform_1, window_bounds = array<i64: 2, 2>}, {pipeline_mode = #tpu.pipeline_mode<synchronous>, transform_indices = @transform_2, window_bounds = array<i64: 1600, 896>}, {pipeline_mode = #tpu.pipeline_mode<synchronous>, transform_indices = @transform_3, window_bounds = array<i64: 896, 256>}, {pipeline_mode = #tpu.pipeline_mode<synchronous>, transform_indices = @transform_4, window_bounds = array<i64: 256, 32>}, {pipeline_mode = #tpu.pipeline_mode<synchronous>, transform_indices = @transform_5, window_bounds = array<i64: 64, 4>}, {pipeline_mode = #tpu.pipeline_mode<synchronous>, transform_indices = @transform_6, window_bounds = array<i64: 16, 896>}, {transform_indices = @transform_7, window_bounds = array<i64: 2, 4>}]} {
    %c0 = arith.constant 0 : index
    %c0_0 = arith.constant 0 : index
    %0 = vector.load %arg7[%c0, %c0_0] : memref<16x896xf32, #tpu.memory_space<vmem>>, vector<16x896xf32>
    %1 = vector.extract_strided_slice %0 {offsets = [0, 0], sizes = [1, 896], strides = [1, 1]} : vector<16x896xf32> to vector<1x896xf32>
    %2 = vector.extract_strided_slice %0 {offsets = [1, 0], sizes = [1, 256], strides = [1, 1]} : vector<16x896xf32> to vector<1x256xf32>
    %3 = vector.extract_strided_slice %0 {offsets = [2, 0], sizes = [1, 32], strides = [1, 1]} : vector<16x896xf32> to vector<1x32xf32>
    %4 = vector.extract_strided_slice %0 {offsets = [3, 0], sizes = [1, 32], strides = [1, 1]} : vector<16x896xf32> to vector<1x32xf32>
    %5 = vector.extract_strided_slice %0 {offsets = [4, 0], sizes = [1, 4], strides = [1, 1]} : vector<16x896xf32> to vector<1x4xf32>
    %6 = vector.extract_strided_slice %0 {offsets = [5, 0], sizes = [1, 32], strides = [1, 1]} : vector<16x896xf32> to vector<1x32xf32>
    %7 = vector.extract_strided_slice %0 {offsets = [6, 0], sizes = [1, 32], strides = [1, 1]} : vector<16x896xf32> to vector<1x32xf32>
    %8 = vector.extract_strided_slice %0 {offsets = [7, 0], sizes = [1, 896], strides = [1, 1]} : vector<16x896xf32> to vector<1x896xf32>
    %9 = vector.extract_strided_slice %0 {offsets = [8, 0], sizes = [1, 256], strides = [1, 1]} : vector<16x896xf32> to vector<1x256xf32>
    %c0_1 = arith.constant 0 : index
    %c0_2 = arith.constant 0 : index
    %10 = vector.load %arg3[%c0_1, %c0_2] : memref<1600x896xi8, #tpu.memory_space<vmem>>, vector<1600x896xi8>
    %11 = arith.sitofp %10 : vector<1600x896xi8> to vector<1600x896xbf16>
    %c0_3 = arith.constant 0 : index
    %c0_4 = arith.constant 0 : index
    %12 = vector.load %arg1[%c0_3, %c0_4] : memref<2x1600xbf16, #tpu.memory_space<vmem>>, vector<2x1600xbf16>
    %cst = arith.constant dense<0.000000e+00> : vector<2x896xf32>
    %13 = tpu.matmul %12, %11, %cst {dimension_numbers = #tpu.dot_dimension_numbers<[1], [0], [0], [1], [0, 0, 1, 1], [], []>} : vector<2x1600xbf16>, vector<1600x896xbf16>, vector<2x896xf32> -> vector<2x896xf32>
    %14 = vector.broadcast %8 : vector<1x896xf32> to vector<2x896xf32>
    %15 = arith.mulf %13, %14 : vector<2x896xf32>
    %16 = vector.broadcast %1 : vector<1x896xf32> to vector<2x896xf32>
    %17 = arith.addf %15, %16 : vector<2x896xf32>
    %cst_5 = arith.constant 0.000000e+00 : f32
    %18 = vector.broadcast %cst_5 : f32 to vector<2x896xf32>
    %19 = arith.maximumf %17, %18 : vector<2x896xf32>
    %c0_6 = arith.constant 0 : index
    %c0_7 = arith.constant 0 : index
    %20 = vector.load %arg4[%c0_6, %c0_7] : memref<896x256xi8, #tpu.memory_space<vmem>>, vector<896x256xi8>
    %21 = arith.sitofp %20 : vector<896x256xi8> to vector<896x256xbf16>
    %22 = arith.truncf %19 : vector<2x896xf32> to vector<2x896xbf16>
    %cst_8 = arith.constant dense<0.000000e+00> : vector<2x256xf32>
    %23 = tpu.matmul %22, %21, %cst_8 {dimension_numbers = #tpu.dot_dimension_numbers<[1], [0], [0], [1], [0, 0, 1, 1], [], []>} : vector<2x896xbf16>, vector<896x256xbf16>, vector<2x256xf32> -> vector<2x256xf32>
    %24 = vector.broadcast %9 : vector<1x256xf32> to vector<2x256xf32>
    %25 = arith.mulf %23, %24 : vector<2x256xf32>
    %26 = vector.broadcast %2 : vector<1x256xf32> to vector<2x256xf32>
    %27 = arith.addf %25, %26 : vector<2x256xf32>
    %cst_9 = arith.constant 0.000000e+00 : f32
    %28 = vector.broadcast %cst_9 : f32 to vector<2x256xf32>
    %29 = arith.maximumf %27, %28 : vector<2x256xf32>
    %30 = arith.truncf %29 : vector<2x256xf32> to vector<2x256xbf16>
    %c0_10 = arith.constant 0 : index
    %c0_11 = arith.constant 0 : index
    %31 = vector.load %arg5[%c0_10, %c0_11] : memref<256x32xbf16, #tpu.memory_space<vmem>>, vector<256x32xbf16>
    %cst_12 = arith.constant dense<0.000000e+00> : vector<2x32xf32>
    %32 = tpu.matmul %30, %31, %cst_12 {dimension_numbers = #tpu.dot_dimension_numbers<[1], [0], [0], [1], [0, 0, 1, 1], [], []>} : vector<2x256xbf16>, vector<256x32xbf16>, vector<2x32xf32> -> vector<2x32xf32>
    %33 = vector.broadcast %3 : vector<1x32xf32> to vector<2x32xf32>
    %34 = arith.addf %32, %33 : vector<2x32xf32>
    %cst_13 = arith.constant 0.000000e+00 : f32
    %35 = vector.broadcast %cst_13 : f32 to vector<2x32xf32>
    %36 = arith.maximumf %34, %35 : vector<2x32xf32>
    %c0_14 = arith.constant 0 : index
    %c0_15 = arith.constant 0 : index
    %37 = vector.load %arg2[%c0_14, %c0_15] : memref<2x2xf32, #tpu.memory_space<vmem>>, vector<2x2xf32>
    %38 = vector.extract_strided_slice %37 {offsets = [0, 0], sizes = [2, 1], strides = [1, 1]} : vector<2x2xf32> to vector<2x1xf32>
    %39 = vector.broadcast %38 : vector<2x1xf32> to vector<2x32xf32>
    %40 = vector.broadcast %6 : vector<1x32xf32> to vector<2x32xf32>
    %41 = arith.mulf %39, %40 : vector<2x32xf32>
    %42 = vector.extract_strided_slice %37 {offsets = [0, 1], sizes = [2, 1], strides = [1, 1]} : vector<2x2xf32> to vector<2x1xf32>
    %43 = vector.broadcast %42 : vector<2x1xf32> to vector<2x32xf32>
    %44 = vector.broadcast %7 : vector<1x32xf32> to vector<2x32xf32>
    %45 = arith.mulf %43, %44 : vector<2x32xf32>
    %46 = arith.addf %41, %45 : vector<2x32xf32>
    %47 = vector.broadcast %4 : vector<1x32xf32> to vector<2x32xf32>
    %48 = arith.addf %46, %47 : vector<2x32xf32>
    %cst_16 = arith.constant 0.000000e+00 : f32
    %49 = vector.broadcast %cst_16 : f32 to vector<2x32xf32>
    %50 = arith.maximumf %48, %49 : vector<2x32xf32>
    %c0_17 = arith.constant 0 : index
    %c0_18 = arith.constant 0 : index
    %51 = vector.load %arg6[%c0_17, %c0_18] : memref<64x4xbf16, #tpu.memory_space<vmem>>, vector<64x4xbf16>
    %52 = arith.truncf %36 : vector<2x32xf32> to vector<2x32xbf16>
    %53 = vector.extract_strided_slice %51 {offsets = [0, 0], sizes = [32, 4], strides = [1, 1]} : vector<64x4xbf16> to vector<32x4xbf16>
    %cst_19 = arith.constant dense<0.000000e+00> : vector<2x4xf32>
    %54 = tpu.matmul %52, %53, %cst_19 {dimension_numbers = #tpu.dot_dimension_numbers<[1], [0], [0], [1], [0, 0, 1, 1], [], []>} : vector<2x32xbf16>, vector<32x4xbf16>, vector<2x4xf32> -> vector<2x4xf32>
    %55 = arith.truncf %50 : vector<2x32xf32> to vector<2x32xbf16>
    %56 = vector.extract_strided_slice %51 {offsets = [32, 0], sizes = [32, 4], strides = [1, 1]} : vector<64x4xbf16> to vector<32x4xbf16>
    %cst_20 = arith.constant dense<0.000000e+00> : vector<2x4xf32>
    %57 = tpu.matmul %55, %56, %cst_20 {dimension_numbers = #tpu.dot_dimension_numbers<[1], [0], [0], [1], [0, 0, 1, 1], [], []>} : vector<2x32xbf16>, vector<32x4xbf16>, vector<2x4xf32> -> vector<2x4xf32>
    %58 = arith.addf %54, %57 : vector<2x4xf32>
    %59 = vector.broadcast %5 : vector<1x4xf32> to vector<2x4xf32>
    %60 = arith.addf %58, %59 : vector<2x4xf32>
    %c0_21 = arith.constant 0 : index
    %c0_22 = arith.constant 0 : index
    %61 = vector.load %arg8[%c0_21, %c0_22] : memref<2x4xf32, #tpu.memory_space<vmem>>, vector<2x4xf32>
    tpu.vector_store %arg8[%c0_21, %c0_22], %60 {strides = array<i32>} : memref<2x4xf32, #tpu.memory_space<vmem>>, vector<2x4xf32>,
    return
  }
  func.func @transform_0(%arg0: i32) -> (i32, i32) {
    %c0_i32 = arith.constant 0 : i32
    %c0_i32_0 = arith.constant 0 : i32
    return %arg0, %c0_i32 : i32, i32
  }
  func.func @transform_1(%arg0: i32) -> (i32, i32) {
    %c0_i32 = arith.constant 0 : i32
    %c0_i32_0 = arith.constant 0 : i32
    return %arg0, %c0_i32 : i32, i32
  }
  func.func @transform_2(%arg0: i32) -> (i32, i32) {
    %c0_i32 = arith.constant 0 : i32
    %c0_i32_0 = arith.constant 0 : i32
    %c0_i32_1 = arith.constant 0 : i32
    return %c0_i32, %c0_i32_0 : i32, i32
  }
  func.func @transform_3(%arg0: i32) -> (i32, i32) {
    %c0_i32 = arith.constant 0 : i32
    %c0_i32_0 = arith.constant 0 : i32
    %c0_i32_1 = arith.constant 0 : i32
    return %c0_i32, %c0_i32_0 : i32, i32
  }
  func.func @transform_4(%arg0: i32) -> (i32, i32) {
    %c0_i32 = arith.constant 0 : i32
    %c0_i32_0 = arith.constant 0 : i32
    %c0_i32_1 = arith.constant 0 : i32
    return %c0_i32, %c0_i32_0 : i32, i32
  }
  func.func @transform_5(%arg0: i32) -> (i32, i32) {
    %c0_i32 = arith.constant 0 : i32
    %c0_i32_0 = arith.constant 0 : i32
    %c0_i32_1 = arith.constant 0 : i32
    return %c0_i32, %c0_i32_0 : i32, i32
  }
  func.func @transform_6(%arg0: i32) -> (i32, i32) {
    %c0_i32 = arith.constant 0 : i32
    %c0_i32_0 = arith.constant 0 : i32
    %c0_i32_1 = arith.constant 0 : i32
    return %c0_i32, %c0_i32_0 : i32, i32
  }
  func.func @transform_7(%arg0: i32) -> (i32, i32) {
    %c0_i32 = arith.constant 0 : i32
    %c0_i32_0 = arith.constant 0 : i32
    return %arg0, %c0_i32 : i32, i32
  }
}

</mosaic_0001>

<llo_original>
// kernel: tpu_custom_call.1
$region0: #{tpu_custom_call.1}
  #allocation0 [shape = 'u32[]', space=smem, size = 0x4, offset = 0x4, fixed_abs, tag = 'smem constant byte address 0x4 - core index']
  #allocation1 [shape = 'u32[144,128]{1,0:T(1,128)}', space=vmem, size = 0x12000, scoped, tag = 'internal scratch']
  %s0 = inlined_call_operand.hbm [shape: bf16[2,1600], index: 0, kind: input, shape index: {}]
  %s1 = inlined_call_operand.hbm [shape: f32[2,2], index: 1, kind: input, shape index: {}]
  %s2 = inlined_call_operand.hbm [shape: s8[1600,896], index: 2, kind: input, shape index: {}]
  %s3 = inlined_call_operand.hbm [shape: s8[896,256], index: 3, kind: input, shape index: {}]
  %s4 = inlined_call_operand.vmem [shape: bf16[256,32], index: 4, kind: input, shape index: {}]
  %s5 = inlined_call_operand.vmem [shape: bf16[64,4], index: 5, kind: input, shape index: {}]
  %s6 = inlined_call_operand.hbm [shape: f32[16,896], index: 6, kind: input, shape index: {}]
  %s7 = inlined_call_operand.hbm [shape: f32[2,4], index: 7, kind: output, shape index: {}]
  %s8 = sld [smem:[#allocation0]]
  $region58: #{tpu_custom_call.1} parent=0
    _
  %s10 = ssub.s32 1, %s8
  %s11 = scalar_select 0, %s10, %s8
  $region1: #{tpu_custom_call.1} parent=0
    #allocation2 [shape = 'u8[6656]{0}', space=vmem, size = 0x1c00, scoped, tag = 'input window, operand 0, single buffered']
    #allocation3 [shape = 's32[1]{0}', space=sflag, size = 0x4, scoped, tag = 'scoped memory for tpu_custom_call.1']
    #allocation4 [shape = 's32[1]{0}', space=sflag, size = 0x4, scoped, tag = 'scoped memory for tpu_custom_call.1']
    #allocation5 [shape = 'u8[1024]{0}', space=vmem, size = 0x400, scoped, tag = 'input window, operand 1, single buffered']
    #allocation6 [shape = 's32[1]{0}', space=sflag, size = 0x4, scoped, tag = 'scoped memory for tpu_custom_call.1']
    #allocation7 [shape = 'u8[1433600]{0}', space=vmem, size = 0x15e000, scoped, tag = 'input window, operand 2, single buffered']
    #allocation8 [shape = 'u8[229376]{0}', space=vmem, size = 0x38000, scoped, tag = 'input window, operand 3, single buffered']
    #allocation9 [shape = 's32[1]{0}', space=sflag, size = 0x4, scoped, tag = 'scoped memory for tpu_custom_call.1']
    #allocation10 [shape = 'u8[57344]{0}', space=vmem, size = 0xe000, scoped, tag = 'input window, operand 6, single buffered']
    #allocation11 [shape = 'u8[1024]{0}', space=vmem, size = 0x400, scoped, tag = 'output window, operand 0, single buffered']
    %12 = vsyncpa [#allocation3], 0
    %13 = vsyncpa [#allocation6], 0
    %14 = vsyncpa [#allocation9], 0
    %15 = vsyncpa [#allocation4], 0
    // Predicated region
    $region2: #{tpu_custom_call.1} parent=1 // pred_check
      _
    $region3: #{tpu_custom_call.1} parent=1 // pred_check_branch
      %17 = sbr.rel (0) target = $region5
    $region4: #{tpu_custom_call.1} parent=1 // pred_region
      %s19 = ssub.s32 208, 208
      %20 = vsyncadd [#allocation3], %s19
      %s22 = sshll.u32 [#allocation2], 4
      %s23 = int_to_ptr.vmem [resolvable:$true] %s22
      %25 = dma.hbm_to_vmem [thread:$0]  %s0, 208, %s23, [#allocation3]
    $region5: #{tpu_custom_call.1} parent=1 // pred_fallthru
      _
    // Predicated region
    $region6: #{tpu_custom_call.1} parent=1 // pred_check
      _
    $region7: #{tpu_custom_call.1} parent=1 // pred_check_branch
      %27 = sbr.rel (0) target = $region9
    $region8: #{tpu_custom_call.1} parent=1 // pred_region
      %s29 = ssub.s32 32, 32
      %30 = vsyncadd [#allocation6], %s29
      %s32 = sshll.u32 [#allocation5], 4
      %s33 = int_to_ptr.vmem [resolvable:$true] %s32
      %35 = dma.hbm_to_vmem [thread:$0]  %s1, 32, %s33, [#allocation6]
    $region9: #{tpu_custom_call.1} parent=1 // pred_fallthru
      _
    // Predicated region
    $region10: #{tpu_custom_call.1} parent=1 // pred_check
      _
    $region11: #{tpu_custom_call.1} parent=1 // pred_check_branch
      %37 = sbr.rel (0) target = $region13
    $region12: #{tpu_custom_call.1} parent=1 // pred_region
      %s39 = ssub.s32 44800, 44800
      %40 = vsyncadd [#allocation6], %s39
      %s41 = sshll.u32 [#allocation7], 4
      %s42 = int_to_ptr.vmem [resolvable:$true] %s41
      %47 = dma.hbm_to_vmem [thread:$0]  %s2, 44800, %s42, [#allocation6], 896, 896, 56
    $region13: #{tpu_custom_call.1} parent=1 // pred_fallthru
      _
    // Predicated region
    $region14: #{tpu_custom_call.1} parent=1 // pred_check
      _
    $region15: #{tpu_custom_call.1} parent=1 // pred_check_branch
      %49 = sbr.rel (0) target = $region17
    $region16: #{tpu_custom_call.1} parent=1 // pred_region
      %s51 = ssub.s32 7168, 7168
      %52 = vsyncadd [#allocation9], %s51
      %s53 = sshll.u32 [#allocation8], 4
      %s54 = int_to_ptr.vmem [resolvable:$true] %s53
      %59 = dma.hbm_to_vmem [thread:$0]  %s3, 7168, %s54, [#allocation9], 256, 256, 16
    $region17: #{tpu_custom_call.1} parent=1 // pred_fallthru
      _
    // Predicated region
    $region18: #{tpu_custom_call.1} parent=1 // pred_check
      _
    $region19: #{tpu_custom_call.1} parent=1 // pred_check_branch
      %61 = sbr.rel (0) target = $region21
    $region20: #{tpu_custom_call.1} parent=1 // pred_region
      _
    $region21: #{tpu_custom_call.1} parent=1 // pred_fallthru
      _
    // Predicated region
    $region22: #{tpu_custom_call.1} parent=1 // pred_check
      _
    $region23: #{tpu_custom_call.1} parent=1 // pred_check_branch
      %63 = sbr.rel (0) target = $region25
    $region24: #{tpu_custom_call.1} parent=1 // pred_region
      _
    $region25: #{tpu_custom_call.1} parent=1 // pred_fallthru
      _
    // Predicated region
    $region26: #{tpu_custom_call.1} parent=1 // pred_check
      _
    $region27: #{tpu_custom_call.1} parent=1 // pred_check_branch
      %65 = sbr.rel (0) target = $region29
    $region28: #{tpu_custom_call.1} parent=1 // pred_region
      %s67 = ssub.s32 1792, 1792
      %68 = vsyncadd [#allocation9], %s67
      %s69 = sshll.u32 [#allocation10], 4
      %s70 = int_to_ptr.vmem [resolvable:$true] %s69
      %75 = dma.hbm_to_vmem [thread:$0]  %s6, 1792, %s70, [#allocation9], 896, 896, 56
    $region29: #{tpu_custom_call.1} parent=1 // pred_fallthru
      _
    // Predicated region
    $region30: #{tpu_custom_call.1} parent=1 // pred_check
      _
    $region31: #{tpu_custom_call.1} parent=1 // pred_check_branch
      %77 = sbr.rel (0) target = $region33
    $region32: #{tpu_custom_call.1} parent=1 // pred_region
      %78 = dma.done [#allocation3], 208
    $region33: #{tpu_custom_call.1} parent=1 // pred_fallthru
      _
    // Predicated region
    $region34: #{tpu_custom_call.1} parent=1 // pred_check
      _
    $region35: #{tpu_custom_call.1} parent=1 // pred_check_branch
      %80 = sbr.rel (0) target = $region37
    $region36: #{tpu_custom_call.1} parent=1 // pred_region
      %81 = dma.done [#allocation6], 32
    $region37: #{tpu_custom_call.1} parent=1 // pred_fallthru
      _
    // Predicated region
    $region38: #{tpu_custom_call.1} parent=1 // pred_check
      _
    $region39: #{tpu_custom_call.1} parent=1 // pred_check_branch
      %83 = sbr.rel (0) target = $region41
    $region40: #{tpu_custom_call.1} parent=1 // pred_region
      %84 = dma.done [#allocation6], 44800
    $region41: #{tpu_custom_call.1} parent=1 // pred_fallthru
      _
    // Predicated region
    $region42: #{tpu_custom_call.1} parent=1 // pred_check
      _
    $region43: #{tpu_custom_call.1} parent=1 // pred_check_branch
      %86 = sbr.rel (0) target = $region45
    $region44: #{tpu_custom_call.1} parent=1 // pred_region
      %87 = dma.done [#allocation9], 7168
    $region45: #{tpu_custom_call.1} parent=1 // pred_fallthru
      _
    // Predicated region
    $region46: #{tpu_custom_call.1} parent=1 // pred_check
      _
    $region47: #{tpu_custom_call.1} parent=1 // pred_check_branch
      %89 = sbr.rel (0) target = $region49
    $region48: #{tpu_custom_call.1} parent=1 // pred_region
      %90 = dma.done [#allocation9], 1792
    $region49: #{tpu_custom_call.1} parent=1 // pred_fallthru
      _
    %v92 = vld [vmem:[#allocation10] sm:$0xff]
    %v93 = vld [vmem:[#allocation10 + $0x8] sm:$0xff]
    %v94 = vld [vmem:[#allocation10 + $0x10] sm:$0xff]
    %v95 = vld [vmem:[#allocation10 + $0x18] sm:$0xff]
    %v96 = vld [vmem:[#allocation10 + $0x20] sm:$0xff]
    %v97 = vld [vmem:[#allocation10 + $0x28] sm:$0xff]
    %v98 = vld [vmem:[#allocation10 + $0x30] sm:$0xff]
    %v99 = vld [vmem:[#allocation10 + $0x38] sm:$0xff]
    %v100 = vld [vmem:[#allocation10 + $0x40] sm:$0xff]
    %v101 = vld [vmem:[#allocation7] sm:$0xff]
    %v102 = vld [vmem:[#allocation7 + $0x8] sm:$0xff]
    %v103 = vld [vmem:[#allocation7 + $0x10] sm:$0xff]
    %v104 = vld [vmem:[#allocation7 + $0x18] sm:$0xff]
    %v105 = vld [vmem:[#allocation7 + $0x20] sm:$0xff]
    %v106 = vld [vmem:[#allocation7 + $0x28] sm:$0xff]
    %v107 = vld [vmem:[#allocation7 + $0x30] sm:$0xff]
    %v108 = vld [vmem:[#allocation7 + $0x38] sm:$0xff]
    %v109 = vld [vmem:[#allocation7 + $0x40] sm:$0xff]
    %v110 = vld [vmem:[#allocation7 + $0x48] sm:$0xff]
    %v111 = vld [vmem:[#allocation7 + $0x50] sm:$0xff]
    %v112 = vld [vmem:[#allocation7 + $0x58] sm:$0xff]
    %v113 = vld [vmem:[#allocation7 + $0x60] sm:$0xff]
    %v114 = vld [vmem:[#allocation7 + $0x68] sm:$0xff]
    %v115 = vld [vmem:[#allocation7 + $0x70] sm:$0xff]
    %v116 = vld [vmem:[#allocation7 + $0x78] sm:$0xff]
    %v117 = vld [vmem:[#allocation7 + $0x80] sm:$0xff]
    %v118 = vld [vmem:[#allocation7 + $0x88] sm:$0xff]
    %v119 = vld [vmem:[#allocation7 + $0x90] sm:$0xff]
    %v120 = vld [vmem:[#allocation7 + $0x98] sm:$0xff]
    %v121 = vld [vmem:[#allocation7 + $0xa0] sm:$0xff]
    %v122 = vld [vmem:[#allocation7 + $0xa8] sm:$0xff]
    %v123 = vld [vmem:[#allocation7 + $0xb0] sm:$0xff]
    %v124 = vld [vmem:[#allocation7 + $0xb8] sm:$0xff]
    %v125 = vld [vmem:[#allocation7 + $0xc0] sm:$0xff]
    %v126 = vld [vmem:[#allocation7 + $0xc8] sm:$0xff]
    %v127 = vld [vmem:[#allocation7 + $0xd0] sm:$0xff]
    %v128 = vld [vmem:[#allocation7 + $0xd8] sm:$0xff]
    %v129 = vld [vmem:[#allocation7 + $0xe0] sm:$0xff]
    %v130 = vld [vmem:[#allocation7 + $0xe8] sm:$0xff]
    %v131 = vld [vmem:[#allocation7 + $0xf0] sm:$0xff]
    %v132 = vld [vmem:[#allocation7 + $0xf8] sm:$0xff]
    %v133 = vld [vmem:[#allocation7 + $0x100] sm:$0xff]
    %v134 = vld [vmem:[#allocation7 + $0x108] sm:$0xff]
    %v135 = vld [vmem:[#allocation7 + $0x110] sm:$0xff]
    %v136 = vld [vmem:[#allocation7 + $0x118] sm:$0xff]
    %v137 = vld [vmem:[#allocation7 + $0x120] sm:$0xff]
    %v138 = vld [vmem:[#allocation7 + $0x128] sm:$0xff]
    %v139 = vld [vmem:[#allocation7 + $0x130] sm:$0xff]
    %v140 = vld [vmem:[#allocation7 + $0x138] sm:$0xff]
    %v141 = vld [vmem:[#allocation7 + $0x140] sm:$0xff]
    %v142 = vld [vmem:[#allocation7 + $0x148] sm:$0xff]
    %v143 = vld [vmem:[#allocation7 + $0x150] sm:$0xff]
    %v144 = vld [vmem:[#allocation7 + $0x158] sm:$0xff]
    %v145 = vld [vmem:[#allocation7 + $0x160] sm:$0xff]
    %v146 = vld [vmem:[#allocation7 + $0x168] sm:$0xff]
    %v147 = vld [vmem:[#allocation7 + $0x170] sm:$0xff]
    %v148 = vld [vmem:[#allocation7 + $0x178] sm:$0xff]
    %v149 = vld [vmem:[#allocation7 + $0x180] sm:$0xff]
    %v150 = vld [vmem:[#allocation7 + $0x188] sm:$0xff]
    %v151 = vld [vmem:[#allocation7 + $0x190] sm:$0xff]
    %v152 = vld [vmem:[#allocation7 + $0x198] sm:$0xff]
    %v153 = vld [vmem:[#allocation7 + $0x1a0] sm:$0xff]
    %v154 = vld [vmem:[#allocation7 + $0x1a8] sm:$0xff]
    %v155 = vld [vmem:[#allocation7 + $0x1b0] sm:$0xff]
    %v156 = vld [vmem:[#allocation7 + $0x1b8] sm:$0xff]
    %v157 = vld [vmem:[#allocation7 + $0x1c0] sm:$0xff]
    %v158 = vld [vmem:[#allocation7 + $0x1c8] sm:$0xff]
    %v159 = vld [vmem:[#allocation7 + $0x1d0] sm:$0xff]
    %v160 = vld [vmem:[#allocation7 + $0x1d8] sm:$0xff]
    %v161 = vld [vmem:[#allocation7 + $0x1e0] sm:$0xff]
    %v162 = vld [vmem:[#allocation7 + $0x1e8] sm:$0xff]
    %v163 = vld [vmem:[#allocation7 + $0x1f0] sm:$0xff]
    %v164 = vld [vmem:[#allocation7 + $0x1f8] sm:$0xff]
    %v165 = vld [vmem:[#allocation7 + $0x200] sm:$0xff]
    %v166 = vld [vmem:[#allocation7 + $0x208] sm:$0xff]
    %v167 = vld [vmem:[#allocation7 + $0x210] sm:$0xff]
    %v168 = vld [vmem:[#allocation7 + $0x218] sm:$0xff]
    %v169 = vld [vmem:[#allocation7 + $0x220] sm:$0xff]
    %v170 = vld [vmem:[#allocation7 + $0x228] sm:$0xff]
    %v171 = vld [vmem:[#allocation7 + $0x230] sm:$0xff]
    %v172 = vld [vmem:[#allocation7 + $0x238] sm:$0xff]
    %v173 = vld [vmem:[#allocation7 + $0x240] sm:$0xff]
    %v174 = vld [vmem:[#allocation7 + $0x248] sm:$0xff]
    %v175 = vld [vmem:[#allocation7 + $0x250] sm:$0xff]
    %v176 = vld [vmem:[#allocation7 + $0x258] sm:$0xff]
    %v177 = vld [vmem:[#allocation7 + $0x260] sm:$0xff]
    %v178 = vld [vmem:[#allocation7 + $0x268] sm:$0xff]
    %v179 = vld [vmem:[#allocation7 + $0x270] sm:$0xff]
    %v180 = vld [vmem:[#allocation7 + $0x278] sm:$0xff]
    %v181 = vld [vmem:[#allocation7 + $0x280] sm:$0xff]
    %v182 = vld [vmem:[#allocation7 + $0x288] sm:$0xff]
    %v183 = vld [vmem:[#allocation7 + $0x290] sm:$0xff]
    %v184 = vld [vmem:[#allocation7 + $0x298] sm:$0xff]
    %v185 = vld [vmem:[#allocation7 + $0x2a0] sm:$0xff]
    %v186 = vld [vmem:[#allocation7 + $0x2a8] sm:$0xff]
    %v187 = vld [vmem:[#allocation7 + $0x2b0] sm:$0xff]
    %v188 = vld [vmem:[#allocation7 + $0x2b8] sm:$0xff]
    %v189 = vld [vmem:[#allocation7 + $0x2c0] sm:$0xff]
    %v190 = vld [vmem:[#allocation7 + $0x2c8] sm:$0xff]
    %v191 = vld [vmem:[#allocation7 + $0x2d0] sm:$0xff]
    %v192 = vld [vmem:[#allocation7 + $0x2d8] sm:$0xff]
    %v193 = vld [vmem:[#allocation7 + $0x2e0] sm:$0xff]
    %v194 = vld [vmem:[#allocation7 + $0x2e8] sm:$0xff]
    %v195 = vld [vmem:[#allocation7 + $0x2f0] sm:$0xff]
    %v196 = vld [vmem:[#allocation7 + $0x2f8] sm:$0xff]
    %v197 = vld [vmem:[#allocation7 + $0x300] sm:$0xff]
    %v198 = vld [vmem:[#allocation7 + $0x308] sm:$0xff]
    %v199 = vld [vmem:[#allocation7 + $0x310] sm:$0xff]
    %v200 = vld [vmem:[#allocation7 + $0x318] sm:$0xff]
    %v201 = vld [vmem:[#allocation7 + $0x320] sm:$0xff]
    %v202 = vld [vmem:[#allocation7 + $0x328] sm:$0xff]
    %v203 = vld [vmem:[#allocation7 + $0x330] sm:$0xff]
    %v204 = vld [vmem:[#allocation7 + $0x338] sm:$0xff]
    %v205 = vld [vmem:[#allocation7 + $0x340] sm:$0xff]
    %v206 = vld [vmem:[#allocation7 + $0x348] sm:$0xff]
    %v207 = vld [vmem:[#allocation7 + $0x350] sm:$0xff]
    %v208 = vld [vmem:[#allocation7 + $0x358] sm:$0xff]
    %v209 = vld [vmem:[#allocation7 + $0x360] sm:$0xff]
    %v210 = vld [vmem:[#allocation7 + $0x368] sm:$0xff]
    %v211 = vld [vmem:[#allocation7 + $0x370] sm:$0xff]
    %v212 = vld [vmem:[#allocation7 + $0x378] sm:$0xff]
    %v213 = vld [vmem:[#allocation7 + $0x380] sm:$0xff]
    %v214 = vld [vmem:[#allocation7 + $0x388] sm:$0xff]
    %v215 = vld [vmem:[#allocation7 + $0x390] sm:$0xff]
    %v216 = vld [vmem:[#allocation7 + $0x398] sm:$0xff]
    %v217 = vld [vmem:[#allocation7 + $0x3a0] sm:$0xff]
    %v218 = vld [vmem:[#allocation7 + $0x3a8] sm:$0xff]
    %v219 = vld [vmem:[#allocation7 + $0x3b0] sm:$0xff]
    %v220 = vld [vmem:[#allocation7 + $0x3b8] sm:$0xff]
    %v221 = vld [vmem:[#allocation7 + $0x3c0] sm:$0xff]
    %v222 = vld [vmem:[#allocation7 + $0x3c8] sm:$0xff]
    %v223 = vld [vmem:[#allocation7 + $0x3d0] sm:$0xff]
    %v224 = vld [vmem:[#allocation7 + $0x3d8] sm:$0xff]
    %v225 = vld [vmem:[#allocation7 + $0x3e0] sm:$0xff]
    %v226 = vld [vmem:[#allocation7 + $0x3e8] sm:$0xff]
    %v227 = vld [vmem:[#allocation7 + $0x3f0] sm:$0xff]
    %v228 = vld [vmem:[#allocation7 + $0x3f8] sm:$0xff]
    %v229 = vld [vmem:[#allocation7 + $0x400] sm:$0xff]
    %v230 = vld [vmem:[#allocation7 + $0x408] sm:$0xff]
    %v231 = vld [vmem:[#allocation7 + $0x410] sm:$0xff]
    %v232 = vld [vmem:[#allocation7 + $0x418] sm:$0xff]
    %v233 = vld [vmem:[#allocation7 + $0x420] sm:$0xff]
    %v234 = vld [vmem:[#allocation7 + $0x428] sm:$0xff]
    %v235 = vld [vmem:[#allocation7 + $0x430] sm:$0xff]
    %v236 = vld [vmem:[#allocation7 + $0x438] sm:$0xff]
    %v237 = vld [vmem:[#allocation7 + $0x440] sm:$0xff]
    %v238 = vld [vmem:[#allocation7 + $0x448] sm:$0xff]
    %v239 = vld [vmem:[#allocation7 + $0x450] sm:$0xff]
    %v240 = vld [vmem:[#allocation7 + $0x458] sm:$0xff]
    %v241 = vld [vmem:[#allocation7 + $0x460] sm:$0xff]
    %v242 = vld [vmem:[#allocation7 + $0x468] sm:$0xff]
    %v243 = vld [vmem:[#allocation7 + $0x470] sm:$0xff]
    %v244 = vld [vmem:[#allocation7 + $0x478] sm:$0xff]
    %v245 = vld [vmem:[#allocation7 + $0x480] sm:$0xff]
    %v246 = vld [vmem:[#allocation7 + $0x488] sm:$0xff]
    %v247 = vld [vmem:[#allocation7 + $0x490] sm:$0xff]
    %v248 = vld [vmem:[#allocation7 + $0x498] sm:$0xff]
    %v249 = vld [vmem:[#allocation7 + $0x4a0] sm:$0xff]
    %v250 = vld [vmem:[#allocation7 + $0x4a8] sm:$0xff]
    %v251 = vld [vmem:[#allocation7 + $0x4b0] sm:$0xff]
    %v252 = vld [vmem:[#allocation7 + $0x4b8] sm:$0xff]
    %v253 = vld [vmem:[#allocation7 + $0x4c0] sm:$0xff]
    %v254 = vld [vmem:[#allocation7 + $0x4c8] sm:$0xff]
    %v255 = vld [vmem:[#allocation7 + $0x4d0] sm:$0xff]
    %v256 = vld [vmem:[#allocation7 + $0x4d8] sm:$0xff]
    %v257 = vld [vmem:[#allocation7 + $0x4e0] sm:$0xff]
    %v258 = vld [vmem:[#allocation7 + $0x4e8] sm:$0xff]
    %v259 = vld [vmem:[#allocation7 + $0x4f0] sm:$0xff]
    %v260 = vld [vmem:[#allocation7 + $0x4f8] sm:$0xff]
    %v261 = vld [vmem:[#allocation7 + $0x500] sm:$0xff]
    %v262 = vld [vmem:[#allocation7 + $0x508] sm:$0xff]
    %v263 = vld [vmem:[#allocation7 + $0x510] sm:$0xff]
    %v264 = vld [vmem:[#allocation7 + $0x518] sm:$0xff]
    %v265 = vld [vmem:[#allocation7 + $0x520] sm:$0xff]
    %v266 = vld [vmem:[#allocation7 + $0x528] sm:$0xff]
    %v267 = vld [vmem:[#allocation7 + $0x530] sm:$0xff]
    %v268 = vld [vmem:[#allocation7 + $0x538] sm:$0xff]
    %v269 = vld [vmem:[#allocation7 + $0x540] sm:$0xff]
    %v270 = vld [vmem:[#allocation7 + $0x548] sm:$0xff]
    %v271 = vld [vmem:[#allocation7 + $0x550] sm:$0xff]
    %v272 = vld [vmem:[#allocation7 + $0x558] sm:$0xff]
    %v273 = vld [vmem:[#allocation7 + $0x560] sm:$0xff]
    %v274 = vld [vmem:[#allocation7 + $0x568] sm:$0xff]
    %v275 = vld [vmem:[#allocation7 + $0x570] sm:$0xff]
    %v276 = vld [vmem:[#allocation7 + $0x578] sm:$0xff]
    %v277 = vld [vmem:[#allocation7 + $0x580] sm:$0xff]
    %v278 = vld [vmem:[#allocation7 + $0x588] sm:$0xff]
    %v279 = vld [vmem:[#allocation7 + $0x590] sm:$0xff]
    %v280 = vld [vmem:[#allocation7 + $0x598] sm:$0xff]
    %v281 = vld [vmem:[#allocation7 + $0x5a0] sm:$0xff]
    %v282 = vld [vmem:[#allocation7 + $0x5a8] sm:$0xff]
    %v283 = vld [vmem:[#allocation7 + $0x5b0] sm:$0xff]
    %v284 = vld [vmem:[#allocation7 + $0x5b8] sm:$0xff]
    %v285 = vld [vmem:[#allocation7 + $0x5c0] sm:$0xff]
    %v286 = vld [vmem:[#allocation7 + $0x5c8] sm:$0xff]
    %v287 = vld [vmem:[#allocation7 + $0x5d0] sm:$0xff]
    %v288 = vld [vmem:[#allocation7 + $0x5d8] sm:$0xff]
    %v289 = vld [vmem:[#allocation7 + $0x5e0] sm:$0xff]
    %v290 = vld [vmem:[#allocation7 + $0x5e8] sm:$0xff]
    %v291 = vld [vmem:[#allocation7 + $0x5f0] sm:$0xff]
    %v292 = vld [vmem:[#allocation7 + $0x5f8] sm:$0xff]
    %v293 = vld [vmem:[#allocation7 + $0x600] sm:$0xff]
    %v294 = vld [vmem:[#allocation7 + $0x608] sm:$0xff]
    %v295 = vld [vmem:[#allocation7 + $0x610] sm:$0xff]
    %v296 = vld [vmem:[#allocation7 + $0x618] sm:$0xff]
    %v297 = vld [vmem:[#allocation7 + $0x620] sm:$0xff]
    %v298 = vld [vmem:[#allocation7 + $0x628] sm:$0xff]
    %v299 = vld [vmem:[#allocation7 + $0x630] sm:$0xff]
    %v300 = vld [vmem:[#allocation7 + $0x638] sm:$0xff]
    %v301 = vld [vmem:[#allocation7 + $0x640] sm:$0xff]
    %v302 = vld [vmem:[#allocation7 + $0x648] sm:$0xff]
    %v303 = vld [vmem:[#allocation7 + $0x650] sm:$0xff]
    %v304 = vld [vmem:[#allocation7 + $0x658] sm:$0xff]
    %v305 = vld [vmem:[#allocation7 + $0x660] sm:$0xff]
    %v306 = vld [vmem:[#allocation7 + $0x668] sm:$0xff]
    %v307 = vld [vmem:[#allocation7 + $0x670] sm:$0xff]
    %v308 = vld [vmem:[#allocation7 + $0x678] sm:$0xff]
    %v309 = vld [vmem:[#allocation7 + $0x680] sm:$0xff]
    %v310 = vld [vmem:[#allocation7 + $0x688] sm:$0xff]
    %v311 = vld [vmem:[#allocation7 + $0x690] sm:$0xff]
    %v312 = vld [vmem:[#allocation7 + $0x698] sm:$0xff]
    %v313 = vld [vmem:[#allocation7 + $0x6a0] sm:$0xff]
    %v314 = vld [vmem:[#allocation7 + $0x6a8] sm:$0xff]
    %v315 = vld [vmem:[#allocation7 + $0x6b0] sm:$0xff]
    %v316 = vld [vmem:[#allocation7 + $0x6b8] sm:$0xff]
    %v317 = vld [vmem:[#allocation7 + $0x6c0] sm:$0xff]
    %v318 = vld [vmem:[#allocation7 + $0x6c8] sm:$0xff]
    %v319 = vld [vmem:[#allocation7 + $0x6d0] sm:$0xff]
    %v320 = vld [vmem:[#allocation7 + $0x6d8] sm:$0xff]
    %v321 = vld [vmem:[#allocation7 + $0x6e0] sm:$0xff]
    %v322 = vld [vmem:[#allocation7 + $0x6e8] sm:$0xff]
    %v323 = vld [vmem:[#allocation7 + $0x6f0] sm:$0xff]
    %v324 = vld [vmem:[#allocation7 + $0x6f8] sm:$0xff]
    %v325 = vld [vmem:[#allocation7 + $0x700] sm:$0xff]
    %v326 = vld [vmem:[#allocation7 + $0x708] sm:$0xff]
    %v327 = vld [vmem:[#allocation7 + $0x710] sm:$0xff]
    %v328 = vld [vmem:[#allocation7 + $0x718] sm:$0xff]
    %v329 = vld [vmem:[#allocation7 + $0x720] sm:$0xff]
    %v330 = vld [vmem:[#allocation7 + $0x728] sm:$0xff]
    %v331 = vld [vmem:[#allocation7 + $0x730] sm:$0xff]
    %v332 = vld [vmem:[#allocation7 + $0x738] sm:$0xff]
    %v333 = vld [vmem:[#allocation7 + $0x740] sm:$0xff]
    %v334 = vld [vmem:[#allocation7 + $0x748] sm:$0xff]
    %v335 = vld [vmem:[#allocation7 + $0x750] sm:$0xff]
    %v336 = vld [vmem:[#allocation7 + $0x758] sm:$0xff]
    %v337 = vld [vmem:[#allocation7 + $0x760] sm:$0xff]
    %v338 = vld [vmem:[#allocation7 + $0x768] sm:$0xff]
    %v339 = vld [vmem:[#allocation7 + $0x770] sm:$0xff]
    %v340 = vld [vmem:[#allocation7 + $0x778] sm:$0xff]
    %v341 = vld [vmem:[#allocation7 + $0x780] sm:$0xff]
    %v342 = vld [vmem:[#allocation7 + $0x788] sm:$0xff]
    %v343 = vld [vmem:[#allocation7 + $0x790] sm:$0xff]
    %v344 = vld [vmem:[#allocation7 + $0x798] sm:$0xff]
    %v345 = vld [vmem:[#allocation7 + $0x7a0] sm:$0xff]
    %v346 = vld [vmem:[#allocation7 + $0x7a8] sm:$0xff]
    %v347 = vld [vmem:[#allocation7 + $0x7b0] sm:$0xff]
    %v348 = vld [vmem:[#allocation7 + $0x7b8] sm:$0xff]
    %v349 = vld [vmem:[#allocation7 + $0x7c0] sm:$0xff]
    %v350 = vld [vmem:[#allocation7 + $0x7c8] sm:$0xff]
    %v351 = vld [vmem:[#allocation7 + $0x7d0] sm:$0xff]
    %v352 = vld [vmem:[#allocation7 + $0x7d8] sm:$0xff]
    %v353 = vld [vmem:[#allocation7 + $0x7e0] sm:$0xff]
    %v354 = vld [vmem:[#allocation7 + $0x7e8] sm:$0xff]
    %v355 = vld [vmem:[#allocation7 + $0x7f0] sm:$0xff]
    %v356 = vld [vmem:[#allocation7 + $0x7f8] sm:$0xff]
    %v357 = vld [vmem:[#allocation7 + $0x800] sm:$0xff]
    %v358 = vld [vmem:[#allocation7 + $0x808] sm:$0xff]
    %v359 = vld [vmem:[#allocation7 + $0x810] sm:$0xff]
    %v360 = vld [vmem:[#allocation7 + $0x818] sm:$0xff]
    %v361 = vld [vmem:[#allocation7 + $0x820] sm:$0xff]
    %v362 = vld [vmem:[#allocation7 + $0x828] sm:$0xff]
    %v363 = vld [vmem:[#allocation7 + $0x830] sm:$0xff]
    %v364 = vld [vmem:[#allocation7 + $0x838] sm:$0xff]
    %v365 = vld [vmem:[#allocation7 + $0x840] sm:$0xff]
    %v366 = vld [vmem:[#allocation7 + $0x848] sm:$0xff]
    %v367 = vld [vmem:[#allocation7 + $0x850] sm:$0xff]
    %v368 = vld [vmem:[#allocation7 + $0x858] sm:$0xff]
    %v369 = vld [vmem:[#allocation7 + $0x860] sm:$0xff]
    %v370 = vld [vmem:[#allocation7 + $0x868] sm:$0xff]
    %v371 = vld [vmem:[#allocation7 + $0x870] sm:$0xff]
    %v372 = vld [vmem:[#allocation7 + $0x878] sm:$0xff]
    %v373 = vld [vmem:[#allocation7 + $0x880] sm:$0xff]
    %v374 = vld [vmem:[#allocation7 + $0x888] sm:$0xff]
    %v375 = vld [vmem:[#allocation7 + $0x890] sm:$0xff]
    %v376 = vld [vmem:[#allocation7 + $0x898] sm:$0xff]
    %v377 = vld [vmem:[#allocation7 + $0x8a0] sm:$0xff]
    %v378 = vld [vmem:[#allocation7 + $0x8a8] sm:$0xff]
    %v379 = vld [vmem:[#allocation7 + $0x8b0] sm:$0xff]
    %v380 = vld [vmem:[#allocation7 + $0x8b8] sm:$0xff]
    %v381 = vld [vmem:[#allocation7 + $0x8c0] sm:$0xff]
    %v382 = vld [vmem:[#allocation7 + $0x8c8] sm:$0xff]
    %v383 = vld [vmem:[#allocation7 + $0x8d0] sm:$0xff]
    %v384 = vld [vmem:[#allocation7 + $0x8d8] sm:$0xff]
    %v385 = vld [vmem:[#allocation7 + $0x8e0] sm:$0xff]
    %v386 = vld [vmem:[#allocation7 + $0x8e8] sm:$0xff]
    %v387 = vld [vmem:[#allocation7 + $0x8f0] sm:$0xff]
    %v388 = vld [vmem:[#allocation7 + $0x8f8] sm:$0xff]
    %v389 = vld [vmem:[#allocation7 + $0x900] sm:$0xff]
    %v390 = vld [vmem:[#allocation7 + $0x908] sm:$0xff]
    %v391 = vld [vmem:[#allocation7 + $0x910] sm:$0xff]
    %v392 = vld [vmem:[#allocation7 + $0x918] sm:$0xff]
    %v393 = vld [vmem:[#allocation7 + $0x920] sm:$0xff]
    %v394 = vld [vmem:[#allocation7 + $0x928] sm:$0xff]
    %v395 = vld [vmem:[#allocation7 + $0x930] sm:$0xff]
    %v396 = vld [vmem:[#allocation7 + $0x938] sm:$0xff]
    %v397 = vld [vmem:[#allocation7 + $0x940] sm:$0xff]
    %v398 = vld [vmem:[#allocation7 + $0x948] sm:$0xff]
    %v399 = vld [vmem:[#allocation7 + $0x950] sm:$0xff]
    %v400 = vld [vmem:[#allocation7 + $0x958] sm:$0xff]
    %v401 = vld [vmem:[#allocation7 + $0x960] sm:$0xff]
    %v402 = vld [vmem:[#allocation7 + $0x968] sm:$0xff]
    %v403 = vld [vmem:[#allocation7 + $0x970] sm:$0xff]
    %v404 = vld [vmem:[#allocation7 + $0x978] sm:$0xff]
    %v405 = vld [vmem:[#allocation7 + $0x980] sm:$0xff]
    %v406 = vld [vmem:[#allocation7 + $0x988] sm:$0xff]
    %v407 = vld [vmem:[#allocation7 + $0x990] sm:$0xff]
    %v408 = vld [vmem:[#allocation7 + $0x998] sm:$0xff]
    %v409 = vld [vmem:[#allocation7 + $0x9a0] sm:$0xff]
    %v410 = vld [vmem:[#allocation7 + $0x9a8] sm:$0xff]
    %v411 = vld [vmem:[#allocation7 + $0x9b0] sm:$0xff]
    %v412 = vld [vmem:[#allocation7 + $0x9b8] sm:$0xff]
    %v413 = vld [vmem:[#allocation7 + $0x9c0] sm:$0xff]
    %v414 = vld [vmem:[#allocation7 + $0x9c8] sm:$0xff]
    %v415 = vld [vmem:[#allocation7 + $0x9d0] sm:$0xff]
    %v416 = vld [vmem:[#allocation7 + $0x9d8] sm:$0xff]
    %v417 = vld [vmem:[#allocation7 + $0x9e0] sm:$0xff]
    %v418 = vld [vmem:[#allocation7 + $0x9e8] sm:$0xff]
    %v419 = vld [vmem:[#allocation7 + $0x9f0] sm:$0xff]
    %v420 = vld [vmem:[#allocation7 + $0x9f8] sm:$0xff]
    %v421 = vld [vmem:[#allocation7 + $0xa00] sm:$0xff]
    %v422 = vld [vmem:[#allocation7 + $0xa08] sm:$0xff]
    %v423 = vld [vmem:[#allocation7 + $0xa10] sm:$0xff]
    %v424 = vld [vmem:[#allocation7 + $0xa18] sm:$0xff]
    %v425 = vld [vmem:[#allocation7 + $0xa20] sm:$0xff]
    %v426 = vld [vmem:[#allocation7 + $0xa28] sm:$0xff]
    %v427 = vld [vmem:[#allocation7 + $0xa30] sm:$0xff]
    %v428 = vld [vmem:[#allocation7 + $0xa38] sm:$0xff]
    %v429 = vld [vmem:[#allocation7 + $0xa40] sm:$0xff]
    %v430 = vld [vmem:[#allocation7 + $0xa48] sm:$0xff]
    %v431 = vld [vmem:[#allocation7 + $0xa50] sm:$0xff]
    %v432 = vld [vmem:[#allocation7 + $0xa58] sm:$0xff]
    %v433 = vld [vmem:[#allocation7 + $0xa60] sm:$0xff]
    %v434 = vld [vmem:[#allocation7 + $0xa68] sm:$0xff]
    %v435 = vld [vmem:[#allocation7 + $0xa70] sm:$0xff]
    %v436 = vld [vmem:[#allocation7 + $0xa78] sm:$0xff]
    %v437 = vld [vmem:[#allocation7 + $0xa80] sm:$0xff]
    %v438 = vld [vmem:[#allocation7 + $0xa88] sm:$0xff]
    %v439 = vld [vmem:[#allocation7 + $0xa90] sm:$0xff]
    %v440 = vld [vmem:[#allocation7 + $0xa98] sm:$0xff]
    %v441 = vld [vmem:[#allocation7 + $0xaa0] sm:$0xff]
    %v442 = vld [vmem:[#allocation7 + $0xaa8] sm:$0xff]
    %v443 = vld [vmem:[#allocation7 + $0xab0] sm:$0xff]
    %v444 = vld [vmem:[#allocation7 + $0xab8] sm:$0xff]
    %v445 = vld [vmem:[#allocation7 + $0xac0] sm:$0xff]
    %v446 = vld [vmem:[#allocation7 + $0xac8] sm:$0xff]
    %v447 = vld [vmem:[#allocation7 + $0xad0] sm:$0xff]
    %v448 = vld [vmem:[#allocation7 + $0xad8] sm:$0xff]
    %v449 = vld [vmem:[#allocation7 + $0xae0] sm:$0xff]
    %v450 = vld [vmem:[#allocation7 + $0xae8] sm:$0xff]
    %v451 = vunpack.c.l.s8.bf16 %v101
    %v452 = vunpack.c.l.s8.bf16 %v102
    %v453 = vunpack.c.l.s8.bf16 %v103
    %v454 = vunpack.c.l.s8.bf16 %v104
    %v455 = vunpack.c.l.s8.bf16 %v105
    %v456 = vunpack.c.l.s8.bf16 %v106
    %v457 = vunpack.c.l.s8.bf16 %v107
    %v458 = vunpack.c.h.s8.bf16 %v101
    %v459 = vunpack.c.h.s8.bf16 %v102
    %v460 = vunpack.c.h.s8.bf16 %v103
    %v461 = vunpack.c.h.s8.bf16 %v104
    %v462 = vunpack.c.h.s8.bf16 %v105
    %v463 = vunpack.c.h.s8.bf16 %v106
    %v464 = vunpack.c.h.s8.bf16 %v107
    %v465 = vunpack.c.l.s8.bf16 %v108
    %v466 = vunpack.c.l.s8.bf16 %v109
    %v467 = vunpack.c.l.s8.bf16 %v110
    %v468 = vunpack.c.l.s8.bf16 %v111
    %v469 = vunpack.c.l.s8.bf16 %v112
    %v470 = vunpack.c.l.s8.bf16 %v113
    %v471 = vunpack.c.l.s8.bf16 %v114
    %v472 = vunpack.c.h.s8.bf16 %v108
    %v473 = vunpack.c.h.s8.bf16 %v109
    %v474 = vunpack.c.h.s8.bf16 %v110
    %v475 = vunpack.c.h.s8.bf16 %v111
    %v476 = vunpack.c.h.s8.bf16 %v112
    %v477 = vunpack.c.h.s8.bf16 %v113
    %v478 = vunpack.c.h.s8.bf16 %v114
    %v479 = vunpack.c.l.s8.bf16 %v115
    %v480 = vunpack.c.l.s8.bf16 %v116
    %v481 = vunpack.c.l.s8.bf16 %v117
    %v482 = vunpack.c.l.s8.bf16 %v118
    %v483 = vunpack.c.l.s8.bf16 %v119
    %v484 = vunpack.c.l.s8.bf16 %v120
    %v485 = vunpack.c.l.s8.bf16 %v121
    %v486 = vunpack.c.h.s8.bf16 %v115
    %v487 = vunpack.c.h.s8.bf16 %v116
    %v488 = vunpack.c.h.s8.bf16 %v117
    %v489 = vunpack.c.h.s8.bf16 %v118
    %v490 = vunpack.c.h.s8.bf16 %v119
    %v491 = vunpack.c.h.s8.bf16 %v120
    %v492 = vunpack.c.h.s8.bf16 %v121
    %v493 = vunpack.c.l.s8.bf16 %v122
    %v494 = vunpack.c.l.s8.bf16 %v123
    %v495 = vunpack.c.l.s8.bf16 %v124
    %v496 = vunpack.c.l.s8.bf16 %v125
    %v497 = vunpack.c.l.s8.bf16 %v126
    %v498 = vunpack.c.l.s8.bf16 %v127
    %v499 = vunpack.c.l.s8.bf16 %v128
    %v500 = vunpack.c.h.s8.bf16 %v122
    %v501 = vunpack.c.h.s8.bf16 %v123
    %v502 = vunpack.c.h.s8.bf16 %v124
    %v503 = vunpack.c.h.s8.bf16 %v125
    %v504 = vunpack.c.h.s8.bf16 %v126
    %v505 = vunpack.c.h.s8.bf16 %v127
    %v506 = vunpack.c.h.s8.bf16 %v128
    %v507 = vunpack.c.l.s8.bf16 %v129
    %v508 = vunpack.c.l.s8.bf16 %v130
    %v509 = vunpack.c.l.s8.bf16 %v131
    %v510 = vunpack.c.l.s8.bf16 %v132
    %v511 = vunpack.c.l.s8.bf16 %v133
    %v512 = vunpack.c.l.s8.bf16 %v134
    %v513 = vunpack.c.l.s8.bf16 %v135
    %v514 = vunpack.c.h.s8.bf16 %v129
    %v515 = vunpack.c.h.s8.bf16 %v130
    %v516 = vunpack.c.h.s8.bf16 %v131
    %v517 = vunpack.c.h.s8.bf16 %v132
    %v518 = vunpack.c.h.s8.bf16 %v133
    %v519 = vunpack.c.h.s8.bf16 %v134
    %v520 = vunpack.c.h.s8.bf16 %v135
    %v521 = vunpack.c.l.s8.bf16 %v136
    %v522 = vunpack.c.l.s8.bf16 %v137
    %v523 = vunpack.c.l.s8.bf16 %v138
    %v524 = vunpack.c.l.s8.bf16 %v139
    %v525 = vunpack.c.l.s8.bf16 %v140
    %v526 = vunpack.c.l.s8.bf16 %v141
    %v527 = vunpack.c.l.s8.bf16 %v142
    %v528 = vunpack.c.h.s8.bf16 %v136
    %v529 = vunpack.c.h.s8.bf16 %v137
    %v530 = vunpack.c.h.s8.bf16 %v138
    %v531 = vunpack.c.h.s8.bf16 %v139
    %v532 = vunpack.c.h.s8.bf16 %v140
    %v533 = vunpack.c.h.s8.bf16 %v141
    %v534 = vunpack.c.h.s8.bf16 %v142
    %v535 = vunpack.c.l.s8.bf16 %v143
    %v536 = vunpack.c.l.s8.bf16 %v144
    %v537 = vunpack.c.l.s8.bf16 %v145
    %v538 = vunpack.c.l.s8.bf16 %v146
    %v539 = vunpack.c.l.s8.bf16 %v147
    %v540 = vunpack.c.l.s8.bf16 %v148
    %v541 = vunpack.c.l.s8.bf16 %v149
    %v542 = vunpack.c.h.s8.bf16 %v143
    %v543 = vunpack.c.h.s8.bf16 %v144
    %v544 = vunpack.c.h.s8.bf16 %v145
    %v545 = vunpack.c.h.s8.bf16 %v146
    %v546 = vunpack.c.h.s8.bf16 %v147
    %v547 = vunpack.c.h.s8.bf16 %v148
    %v548 = vunpack.c.h.s8.bf16 %v149
    %v549 = vunpack.c.l.s8.bf16 %v150
    %v550 = vunpack.c.l.s8.bf16 %v151
    %v551 = vunpack.c.l.s8.bf16 %v152
    %v552 = vunpack.c.l.s8.bf16 %v153
    %v553 = vunpack.c.l.s8.bf16 %v154
    %v554 = vunpack.c.l.s8.bf16 %v155
    %v555 = vunpack.c.l.s8.bf16 %v156
    %v556 = vunpack.c.h.s8.bf16 %v150
    %v557 = vunpack.c.h.s8.bf16 %v151
    %v558 = vunpack.c.h.s8.bf16 %v152
    %v559 = vunpack.c.h.s8.bf16 %v153
    %v560 = vunpack.c.h.s8.bf16 %v154
    %v561 = vunpack.c.h.s8.bf16 %v155
    %v562 = vunpack.c.h.s8.bf16 %v156
    %v563 = vunpack.c.l.s8.bf16 %v157
    %v564 = vunpack.c.l.s8.bf16 %v158
    %v565 = vunpack.c.l.s8.bf16 %v159
    %v566 = vunpack.c.l.s8.bf16 %v160
    %v567 = vunpack.c.l.s8.bf16 %v161
    %v568 = vunpack.c.l.s8.bf16 %v162
    %v569 = vunpack.c.l.s8.bf16 %v163
    %v570 = vunpack.c.h.s8.bf16 %v157
    %v571 = vunpack.c.h.s8.bf16 %v158
    %v572 = vunpack.c.h.s8.bf16 %v159
    %v573 = vunpack.c.h.s8.bf16 %v160
    %v574 = vunpack.c.h.s8.bf16 %v161
    %v575 = vunpack.c.h.s8.bf16 %v162
    %v576 = vunpack.c.h.s8.bf16 %v163
    %v577 = vunpack.c.l.s8.bf16 %v164
    %v578 = vunpack.c.l.s8.bf16 %v165
    %v579 = vunpack.c.l.s8.bf16 %v166
    %v580 = vunpack.c.l.s8.bf16 %v167
    %v581 = vunpack.c.l.s8.bf16 %v168
    %v582 = vunpack.c.l.s8.bf16 %v169
    %v583 = vunpack.c.l.s8.bf16 %v170
    %v584 = vunpack.c.h.s8.bf16 %v164
    %v585 = vunpack.c.h.s8.bf16 %v165
    %v586 = vunpack.c.h.s8.bf16 %v166
    %v587 = vunpack.c.h.s8.bf16 %v167
    %v588 = vunpack.c.h.s8.bf16 %v168
    %v589 = vunpack.c.h.s8.bf16 %v169
    %v590 = vunpack.c.h.s8.bf16 %v170
    %v591 = vunpack.c.l.s8.bf16 %v171
    %v592 = vunpack.c.l.s8.bf16 %v172
    %v593 = vunpack.c.l.s8.bf16 %v173
    %v594 = vunpack.c.l.s8.bf16 %v174
    %v595 = vunpack.c.l.s8.bf16 %v175
    %v596 = vunpack.c.l.s8.bf16 %v176
    %v597 = vunpack.c.l.s8.bf16 %v177
    %v598 = vunpack.c.h.s8.bf16 %v171
    %v599 = vunpack.c.h.s8.bf16 %v172
    %v600 = vunpack.c.h.s8.bf16 %v173
    %v601 = vunpack.c.h.s8.bf16 %v174
    %v602 = vunpack.c.h.s8.bf16 %v175
    %v603 = vunpack.c.h.s8.bf16 %v176
    %v604 = vunpack.c.h.s8.bf16 %v177
    %v605 = vunpack.c.l.s8.bf16 %v178
    %v606 = vunpack.c.l.s8.bf16 %v179
    %v607 = vunpack.c.l.s8.bf16 %v180
    %v608 = vunpack.c.l.s8.bf16 %v181
    %v609 = vunpack.c.l.s8.bf16 %v182
    %v610 = vunpack.c.l.s8.bf16 %v183
    %v611 = vunpack.c.l.s8.bf16 %v184
    %v612 = vunpack.c.h.s8.bf16 %v178
    %v613 = vunpack.c.h.s8.bf16 %v179
    %v614 = vunpack.c.h.s8.bf16 %v180
    %v615 = vunpack.c.h.s8.bf16 %v181
    %v616 = vunpack.c.h.s8.bf16 %v182
    %v617 = vunpack.c.h.s8.bf16 %v183
    %v618 = vunpack.c.h.s8.bf16 %v184
    %v619 = vunpack.c.l.s8.bf16 %v185
    %v620 = vunpack.c.l.s8.bf16 %v186
    %v621 = vunpack.c.l.s8.bf16 %v187
    %v622 = vunpack.c.l.s8.bf16 %v188
    %v623 = vunpack.c.l.s8.bf16 %v189
    %v624 = vunpack.c.l.s8.bf16 %v190
    %v625 = vunpack.c.l.s8.bf16 %v191
    %v626 = vunpack.c.h.s8.bf16 %v185
    %v627 = vunpack.c.h.s8.bf16 %v186
    %v628 = vunpack.c.h.s8.bf16 %v187
    %v629 = vunpack.c.h.s8.bf16 %v188
    %v630 = vunpack.c.h.s8.bf16 %v189
    %v631 = vunpack.c.h.s8.bf16 %v190
    %v632 = vunpack.c.h.s8.bf16 %v191
    %v633 = vunpack.c.l.s8.bf16 %v192
    %v634 = vunpack.c.l.s8.bf16 %v193
    %v635 = vunpack.c.l.s8.bf16 %v194
    %v636 = vunpack.c.l.s8.bf16 %v195
    %v637 = vunpack.c.l.s8.bf16 %v196
    %v638 = vunpack.c.l.s8.bf16 %v197
    %v639 = vunpack.c.l.s8.bf16 %v198
    %v640 = vunpack.c.h.s8.bf16 %v192
    %v641 = vunpack.c.h.s8.bf16 %v193
    %v642 = vunpack.c.h.s8.bf16 %v194
    %v643 = vunpack.c.h.s8.bf16 %v195
    %v644 = vunpack.c.h.s8.bf16 %v196
    %v645 = vunpack.c.h.s8.bf16 %v197
    %v646 = vunpack.c.h.s8.bf16 %v198
    %v647 = vunpack.c.l.s8.bf16 %v199
    %v648 = vunpack.c.l.s8.bf16 %v200
    %v649 = vunpack.c.l.s8.bf16 %v201
    %v650 = vunpack.c.l.s8.bf16 %v202
    %v651 = vunpack.c.l.s8.bf16 %v203
    %v652 = vunpack.c.l.s8.bf16 %v204
    %v653 = vunpack.c.l.s8.bf16 %v205
    %v654 = vunpack.c.h.s8.bf16 %v199
    %v655 = vunpack.c.h.s8.bf16 %v200
    %v656 = vunpack.c.h.s8.bf16 %v201
    %v657 = vunpack.c.h.s8.bf16 %v202
    %v658 = vunpack.c.h.s8.bf16 %v203
    %v659 = vunpack.c.h.s8.bf16 %v204
    %v660 = vunpack.c.h.s8.bf16 %v205
    %v661 = vunpack.c.l.s8.bf16 %v206
    %v662 = vunpack.c.l.s8.bf16 %v207
    %v663 = vunpack.c.l.s8.bf16 %v208
    %v664 = vunpack.c.l.s8.bf16 %v209
    %v665 = vunpack.c.l.s8.bf16 %v210
    %v666 = vunpack.c.l.s8.bf16 %v211
    %v667 = vunpack.c.l.s8.bf16 %v212
    %v668 = vunpack.c.h.s8.bf16 %v206
    %v669 = vunpack.c.h.s8.bf16 %v207
    %v670 = vunpack.c.h.s8.bf16 %v208
    %v671 = vunpack.c.h.s8.bf16 %v209
    %v672 = vunpack.c.h.s8.bf16 %v210
    %v673 = vunpack.c.h.s8.bf16 %v211
    %v674 = vunpack.c.h.s8.bf16 %v212
    %v675 = vunpack.c.l.s8.bf16 %v213
    %v676 = vunpack.c.l.s8.bf16 %v214
    %v677 = vunpack.c.l.s8.bf16 %v215
    %v678 = vunpack.c.l.s8.bf16 %v216
    %v679 = vunpack.c.l.s8.bf16 %v217
    %v680 = vunpack.c.l.s8.bf16 %v218
    %v681 = vunpack.c.l.s8.bf16 %v219
    %v682 = vunpack.c.h.s8.bf16 %v213
    %v683 = vunpack.c.h.s8.bf16 %v214
    %v684 = vunpack.c.h.s8.bf16 %v215
    %v685 = vunpack.c.h.s8.bf16 %v216
    %v686 = vunpack.c.h.s8.bf16 %v217
    %v687 = vunpack.c.h.s8.bf16 %v218
    %v688 = vunpack.c.h.s8.bf16 %v219
    %v689 = vunpack.c.l.s8.bf16 %v220
    %v690 = vunpack.c.l.s8.bf16 %v221
    %v691 = vunpack.c.l.s8.bf16 %v222
    %v692 = vunpack.c.l.s8.bf16 %v223
    %v693 = vunpack.c.l.s8.bf16 %v224
    %v694 = vunpack.c.l.s8.bf16 %v225
    %v695 = vunpack.c.l.s8.bf16 %v226
    %v696 = vunpack.c.h.s8.bf16 %v220
    %v697 = vunpack.c.h.s8.bf16 %v221
    %v698 = vunpack.c.h.s8.bf16 %v222
    %v699 = vunpack.c.h.s8.bf16 %v223
    %v700 = vunpack.c.h.s8.bf16 %v224
    %v701 = vunpack.c.h.s8.bf16 %v225
    %v702 = vunpack.c.h.s8.bf16 %v226
    %v703 = vunpack.c.l.s8.bf16 %v227
    %v704 = vunpack.c.l.s8.bf16 %v228
    %v705 = vunpack.c.l.s8.bf16 %v229
    %v706 = vunpack.c.l.s8.bf16 %v230
    %v707 = vunpack.c.l.s8.bf16 %v231
    %v708 = vunpack.c.l.s8.bf16 %v232
    %v709 = vunpack.c.l.s8.bf16 %v233
    %v710 = vunpack.c.h.s8.bf16 %v227
    %v711 = vunpack.c.h.s8.bf16 %v228
    %v712 = vunpack.c.h.s8.bf16 %v229
    %v713 = vunpack.c.h.s8.bf16 %v230
    %v714 = vunpack.c.h.s8.bf16 %v231
    %v715 = vunpack.c.h.s8.bf16 %v232
    %v716 = vunpack.c.h.s8.bf16 %v233
    %v717 = vunpack.c.l.s8.bf16 %v234
    %v718 = vunpack.c.l.s8.bf16 %v235
    %v719 = vunpack.c.l.s8.bf16 %v236
    %v720 = vunpack.c.l.s8.bf16 %v237
    %v721 = vunpack.c.l.s8.bf16 %v238
    %v722 = vunpack.c.l.s8.bf16 %v239
    %v723 = vunpack.c.l.s8.bf16 %v240
    %v724 = vunpack.c.h.s8.bf16 %v234
    %v725 = vunpack.c.h.s8.bf16 %v235
    %v726 = vunpack.c.h.s8.bf16 %v236
    %v727 = vunpack.c.h.s8.bf16 %v237
    %v728 = vunpack.c.h.s8.bf16 %v238
    %v729 = vunpack.c.h.s8.bf16 %v239
    %v730 = vunpack.c.h.s8.bf16 %v240
    %v731 = vunpack.c.l.s8.bf16 %v241
    %v732 = vunpack.c.l.s8.bf16 %v242
    %v733 = vunpack.c.l.s8.bf16 %v243
    %v734 = vunpack.c.l.s8.bf16 %v244
    %v735 = vunpack.c.l.s8.bf16 %v245
    %v736 = vunpack.c.l.s8.bf16 %v246
    %v737 = vunpack.c.l.s8.bf16 %v247
    %v738 = vunpack.c.h.s8.bf16 %v241
    %v739 = vunpack.c.h.s8.bf16 %v242
    %v740 = vunpack.c.h.s8.bf16 %v243
    %v741 = vunpack.c.h.s8.bf16 %v244
    %v742 = vunpack.c.h.s8.bf16 %v245
    %v743 = vunpack.c.h.s8.bf16 %v246
    %v744 = vunpack.c.h.s8.bf16 %v247
    %v745 = vunpack.c.l.s8.bf16 %v248
    %v746 = vunpack.c.l.s8.bf16 %v249
    %v747 = vunpack.c.l.s8.bf16 %v250
    %v748 = vunpack.c.l.s8.bf16 %v251
    %v749 = vunpack.c.l.s8.bf16 %v252
    %v750 = vunpack.c.l.s8.bf16 %v253
    %v751 = vunpack.c.l.s8.bf16 %v254
    %v752 = vunpack.c.h.s8.bf16 %v248
    %v753 = vunpack.c.h.s8.bf16 %v249
    %v754 = vunpack.c.h.s8.bf16 %v250
    %v755 = vunpack.c.h.s8.bf16 %v251
    %v756 = vunpack.c.h.s8.bf16 %v252
    %v757 = vunpack.c.h.s8.bf16 %v253
    %v758 = vunpack.c.h.s8.bf16 %v254
    %v759 = vunpack.c.l.s8.bf16 %v255
    %v760 = vunpack.c.l.s8.bf16 %v256
    %v761 = vunpack.c.l.s8.bf16 %v257
    %v762 = vunpack.c.l.s8.bf16 %v258
    %v763 = vunpack.c.l.s8.bf16 %v259
    %v764 = vunpack.c.l.s8.bf16 %v260
    %v765 = vunpack.c.l.s8.bf16 %v261
    %v766 = vunpack.c.h.s8.bf16 %v255
    %v767 = vunpack.c.h.s8.bf16 %v256
    %v768 = vunpack.c.h.s8.bf16 %v257
    %v769 = vunpack.c.h.s8.bf16 %v258
    %v770 = vunpack.c.h.s8.bf16 %v259
    %v771 = vunpack.c.h.s8.bf16 %v260
    %v772 = vunpack.c.h.s8.bf16 %v261
    %v773 = vunpack.c.l.s8.bf16 %v262
    %v774 = vunpack.c.l.s8.bf16 %v263
    %v775 = vunpack.c.l.s8.bf16 %v264
    %v776 = vunpack.c.l.s8.bf16 %v265
    %v777 = vunpack.c.l.s8.bf16 %v266
    %v778 = vunpack.c.l.s8.bf16 %v267
    %v779 = vunpack.c.l.s8.bf16 %v268
    %v780 = vunpack.c.h.s8.bf16 %v262
    %v781 = vunpack.c.h.s8.bf16 %v263
    %v782 = vunpack.c.h.s8.bf16 %v264
    %v783 = vunpack.c.h.s8.bf16 %v265
    %v784 = vunpack.c.h.s8.bf16 %v266
    %v785 = vunpack.c.h.s8.bf16 %v267
    %v786 = vunpack.c.h.s8.bf16 %v268
    %v787 = vunpack.c.l.s8.bf16 %v269
    %v788 = vunpack.c.l.s8.bf16 %v270
    %v789 = vunpack.c.l.s8.bf16 %v271
    %v790 = vunpack.c.l.s8.bf16 %v272
    %v791 = vunpack.c.l.s8.bf16 %v273
    %v792 = vunpack.c.l.s8.bf16 %v274
    %v793 = vunpack.c.l.s8.bf16 %v275
    %v794 = vunpack.c.h.s8.bf16 %v269
    %v795 = vunpack.c.h.s8.bf16 %v270
    %v796 = vunpack.c.h.s8.bf16 %v271
    %v797 = vunpack.c.h.s8.bf16 %v272
    %v798 = vunpack.c.h.s8.bf16 %v273
    %v799 = vunpack.c.h.s8.bf16 %v274
    %v800 = vunpack.c.h.s8.bf16 %v275
    %v801 = vunpack.c.l.s8.bf16 %v276
    %v802 = vunpack.c.l.s8.bf16 %v277
    %v803 = vunpack.c.l.s8.bf16 %v278
    %v804 = vunpack.c.l.s8.bf16 %v279
    %v805 = vunpack.c.l.s8.bf16 %v280
    %v806 = vunpack.c.l.s8.bf16 %v281
    %v807 = vunpack.c.l.s8.bf16 %v282
    %v808 = vunpack.c.h.s8.bf16 %v276
    %v809 = vunpack.c.h.s8.bf16 %v277
    %v810 = vunpack.c.h.s8.bf16 %v278
    %v811 = vunpack.c.h.s8.bf16 %v279
    %v812 = vunpack.c.h.s8.bf16 %v280
    %v813 = vunpack.c.h.s8.bf16 %v281
    %v814 = vunpack.c.h.s8.bf16 %v282
    %v815 = vunpack.c.l.s8.bf16 %v283
    %v816 = vunpack.c.l.s8.bf16 %v284
    %v817 = vunpack.c.l.s8.bf16 %v285
    %v818 = vunpack.c.l.s8.bf16 %v286
    %v819 = vunpack.c.l.s8.bf16 %v287
    %v820 = vunpack.c.l.s8.bf16 %v288
    %v821 = vunpack.c.l.s8.bf16 %v289
    %v822 = vunpack.c.h.s8.bf16 %v283
    %v823 = vunpack.c.h.s8.bf16 %v284
    %v824 = vunpack.c.h.s8.bf16 %v285
    %v825 = vunpack.c.h.s8.bf16 %v286
    %v826 = vunpack.c.h.s8.bf16 %v287
    %v827 = vunpack.c.h.s8.bf16 %v288
    %v828 = vunpack.c.h.s8.bf16 %v289
    %v829 = vunpack.c.l.s8.bf16 %v290
    %v830 = vunpack.c.l.s8.bf16 %v291
    %v831 = vunpack.c.l.s8.bf16 %v292
    %v832 = vunpack.c.l.s8.bf16 %v293
    %v833 = vunpack.c.l.s8.bf16 %v294
    %v834 = vunpack.c.l.s8.bf16 %v295
    %v835 = vunpack.c.l.s8.bf16 %v296
    %v836 = vunpack.c.h.s8.bf16 %v290
    %v837 = vunpack.c.h.s8.bf16 %v291
    %v838 = vunpack.c.h.s8.bf16 %v292
    %v839 = vunpack.c.h.s8.bf16 %v293
    %v840 = vunpack.c.h.s8.bf16 %v294
    %v841 = vunpack.c.h.s8.bf16 %v295
    %v842 = vunpack.c.h.s8.bf16 %v296
    %v843 = vunpack.c.l.s8.bf16 %v297
    %v844 = vunpack.c.l.s8.bf16 %v298
    %v845 = vunpack.c.l.s8.bf16 %v299
    %v846 = vunpack.c.l.s8.bf16 %v300
    %v847 = vunpack.c.l.s8.bf16 %v301
    %v848 = vunpack.c.l.s8.bf16 %v302
    %v849 = vunpack.c.l.s8.bf16 %v303
    %v850 = vunpack.c.h.s8.bf16 %v297
    %v851 = vunpack.c.h.s8.bf16 %v298
    %v852 = vunpack.c.h.s8.bf16 %v299
    %v853 = vunpack.c.h.s8.bf16 %v300
    %v854 = vunpack.c.h.s8.bf16 %v301
    %v855 = vunpack.c.h.s8.bf16 %v302
    %v856 = vunpack.c.h.s8.bf16 %v303
    %v857 = vunpack.c.l.s8.bf16 %v304
    %v858 = vunpack.c.l.s8.bf16 %v305
    %v859 = vunpack.c.l.s8.bf16 %v306
    %v860 = vunpack.c.l.s8.bf16 %v307
    %v861 = vunpack.c.l.s8.bf16 %v308
    %v862 = vunpack.c.l.s8.bf16 %v309
    %v863 = vunpack.c.l.s8.bf16 %v310
    %v864 = vunpack.c.h.s8.bf16 %v304
    %v865 = vunpack.c.h.s8.bf16 %v305
    %v866 = vunpack.c.h.s8.bf16 %v306
    %v867 = vunpack.c.h.s8.bf16 %v307
    %v868 = vunpack.c.h.s8.bf16 %v308
    %v869 = vunpack.c.h.s8.bf16 %v309
    %v870 = vunpack.c.h.s8.bf16 %v310
    %v871 = vunpack.c.l.s8.bf16 %v311
    %v872 = vunpack.c.l.s8.bf16 %v312
    %v873 = vunpack.c.l.s8.bf16 %v313
    %v874 = vunpack.c.l.s8.bf16 %v314
    %v875 = vunpack.c.l.s8.bf16 %v315
    %v876 = vunpack.c.l.s8.bf16 %v316
    %v877 = vunpack.c.l.s8.bf16 %v317
    %v878 = vunpack.c.h.s8.bf16 %v311
    %v879 = vunpack.c.h.s8.bf16 %v312
    %v880 = vunpack.c.h.s8.bf16 %v313
    %v881 = vunpack.c.h.s8.bf16 %v314
    %v882 = vunpack.c.h.s8.bf16 %v315
    %v883 = vunpack.c.h.s8.bf16 %v316
    %v884 = vunpack.c.h.s8.bf16 %v317
    %v885 = vunpack.c.l.s8.bf16 %v318
    %v886 = vunpack.c.l.s8.bf16 %v319
    %v887 = vunpack.c.l.s8.bf16 %v320
    %v888 = vunpack.c.l.s8.bf16 %v321
    %v889 = vunpack.c.l.s8.bf16 %v322
    %v890 = vunpack.c.l.s8.bf16 %v323
    %v891 = vunpack.c.l.s8.bf16 %v324
    %v892 = vunpack.c.h.s8.bf16 %v318
    %v893 = vunpack.c.h.s8.bf16 %v319
    %v894 = vunpack.c.h.s8.bf16 %v320
    %v895 = vunpack.c.h.s8.bf16 %v321
    %v896 = vunpack.c.h.s8.bf16 %v322
    %v897 = vunpack.c.h.s8.bf16 %v323
    %v898 = vunpack.c.h.s8.bf16 %v324
    %v899 = vunpack.c.l.s8.bf16 %v325
    %v900 = vunpack.c.l.s8.bf16 %v326
    %v901 = vunpack.c.l.s8.bf16 %v327
    %v902 = vunpack.c.l.s8.bf16 %v328
    %v903 = vunpack.c.l.s8.bf16 %v329
    %v904 = vunpack.c.l.s8.bf16 %v330
    %v905 = vunpack.c.l.s8.bf16 %v331
    %v906 = vunpack.c.h.s8.bf16 %v325
    %v907 = vunpack.c.h.s8.bf16 %v326
    %v908 = vunpack.c.h.s8.bf16 %v327
    %v909 = vunpack.c.h.s8.bf16 %v328
    %v910 = vunpack.c.h.s8.bf16 %v329
    %v911 = vunpack.c.h.s8.bf16 %v330
    %v912 = vunpack.c.h.s8.bf16 %v331
    %v913 = vunpack.c.l.s8.bf16 %v332
    %v914 = vunpack.c.l.s8.bf16 %v333
    %v915 = vunpack.c.l.s8.bf16 %v334
    %v916 = vunpack.c.l.s8.bf16 %v335
    %v917 = vunpack.c.l.s8.bf16 %v336
    %v918 = vunpack.c.l.s8.bf16 %v337
    %v919 = vunpack.c.l.s8.bf16 %v338
    %v920 = vunpack.c.h.s8.bf16 %v332
    %v921 = vunpack.c.h.s8.bf16 %v333
    %v922 = vunpack.c.h.s8.bf16 %v334
    %v923 = vunpack.c.h.s8.bf16 %v335
    %v924 = vunpack.c.h.s8.bf16 %v336
    %v925 = vunpack.c.h.s8.bf16 %v337
    %v926 = vunpack.c.h.s8.bf16 %v338
    %v927 = vunpack.c.l.s8.bf16 %v339
    %v928 = vunpack.c.l.s8.bf16 %v340
    %v929 = vunpack.c.l.s8.bf16 %v341
    %v930 = vunpack.c.l.s8.bf16 %v342
    %v931 = vunpack.c.l.s8.bf16 %v343
    %v932 = vunpack.c.l.s8.bf16 %v344
    %v933 = vunpack.c.l.s8.bf16 %v345
    %v934 = vunpack.c.h.s8.bf16 %v339
    %v935 = vunpack.c.h.s8.bf16 %v340
    %v936 = vunpack.c.h.s8.bf16 %v341
    %v937 = vunpack.c.h.s8.bf16 %v342
    %v938 = vunpack.c.h.s8.bf16 %v343
    %v939 = vunpack.c.h.s8.bf16 %v344
    %v940 = vunpack.c.h.s8.bf16 %v345
    %v941 = vunpack.c.l.s8.bf16 %v346
    %v942 = vunpack.c.l.s8.bf16 %v347
    %v943 = vunpack.c.l.s8.bf16 %v348
    %v944 = vunpack.c.l.s8.bf16 %v349
    %v945 = vunpack.c.l.s8.bf16 %v350
    %v946 = vunpack.c.l.s8.bf16 %v351
    %v947 = vunpack.c.l.s8.bf16 %v352
    %v948 = vunpack.c.h.s8.bf16 %v346
    %v949 = vunpack.c.h.s8.bf16 %v347
    %v950 = vunpack.c.h.s8.bf16 %v348
    %v951 = vunpack.c.h.s8.bf16 %v349
    %v952 = vunpack.c.h.s8.bf16 %v350
    %v953 = vunpack.c.h.s8.bf16 %v351
    %v954 = vunpack.c.h.s8.bf16 %v352
    %v955 = vunpack.c.l.s8.bf16 %v353
    %v956 = vunpack.c.l.s8.bf16 %v354
    %v957 = vunpack.c.l.s8.bf16 %v355
    %v958 = vunpack.c.l.s8.bf16 %v356
    %v959 = vunpack.c.l.s8.bf16 %v357
    %v960 = vunpack.c.l.s8.bf16 %v358
    %v961 = vunpack.c.l.s8.bf16 %v359
    %v962 = vunpack.c.h.s8.bf16 %v353
    %v963 = vunpack.c.h.s8.bf16 %v354
    %v964 = vunpack.c.h.s8.bf16 %v355
    %v965 = vunpack.c.h.s8.bf16 %v356
    %v966 = vunpack.c.h.s8.bf16 %v357
    %v967 = vunpack.c.h.s8.bf16 %v358
    %v968 = vunpack.c.h.s8.bf16 %v359
    %v969 = vunpack.c.l.s8.bf16 %v360
    %v970 = vunpack.c.l.s8.bf16 %v361
    %v971 = vunpack.c.l.s8.bf16 %v362
    %v972 = vunpack.c.l.s8.bf16 %v363
    %v973 = vunpack.c.l.s8.bf16 %v364
    %v974 = vunpack.c.l.s8.bf16 %v365
    %v975 = vunpack.c.l.s8.bf16 %v366
    %v976 = vunpack.c.h.s8.bf16 %v360
    %v977 = vunpack.c.h.s8.bf16 %v361
    %v978 = vunpack.c.h.s8.bf16 %v362
    %v979 = vunpack.c.h.s8.bf16 %v363
    %v980 = vunpack.c.h.s8.bf16 %v364
    %v981 = vunpack.c.h.s8.bf16 %v365
    %v982 = vunpack.c.h.s8.bf16 %v366
    %v983 = vunpack.c.l.s8.bf16 %v367
    %v984 = vunpack.c.l.s8.bf16 %v368
    %v985 = vunpack.c.l.s8.bf16 %v369
    %v986 = vunpack.c.l.s8.bf16 %v370
    %v987 = vunpack.c.l.s8.bf16 %v371
    %v988 = vunpack.c.l.s8.bf16 %v372
    %v989 = vunpack.c.l.s8.bf16 %v373
    %v990 = vunpack.c.h.s8.bf16 %v367
    %v991 = vunpack.c.h.s8.bf16 %v368
    %v992 = vunpack.c.h.s8.bf16 %v369
    %v993 = vunpack.c.h.s8.bf16 %v370
    %v994 = vunpack.c.h.s8.bf16 %v371
    %v995 = vunpack.c.h.s8.bf16 %v372
    %v996 = vunpack.c.h.s8.bf16 %v373
    %v997 = vunpack.c.l.s8.bf16 %v374
    %v998 = vunpack.c.l.s8.bf16 %v375
    %v999 = vunpack.c.l.s8.bf16 %v376
    %v1000 = vunpack.c.l.s8.bf16 %v377
    %v1001 = vunpack.c.l.s8.bf16 %v378
    %v1002 = vunpack.c.l.s8.bf16 %v379
    %v1003 = vunpack.c.l.s8.bf16 %v380
    %v1004 = vunpack.c.h.s8.bf16 %v374
    %v1005 = vunpack.c.h.s8.bf16 %v375
    %v1006 = vunpack.c.h.s8.bf16 %v376
    %v1007 = vunpack.c.h.s8.bf16 %v377
    %v1008 = vunpack.c.h.s8.bf16 %v378
    %v1009 = vunpack.c.h.s8.bf16 %v379
    %v1010 = vunpack.c.h.s8.bf16 %v380
    %v1011 = vunpack.c.l.s8.bf16 %v381
    %v1012 = vunpack.c.l.s8.bf16 %v382
    %v1013 = vunpack.c.l.s8.bf16 %v383
    %v1014 = vunpack.c.l.s8.bf16 %v384
    %v1015 = vunpack.c.l.s8.bf16 %v385
    %v1016 = vunpack.c.l.s8.bf16 %v386
    %v1017 = vunpack.c.l.s8.bf16 %v387
    %v1018 = vunpack.c.h.s8.bf16 %v381
    %v1019 = vunpack.c.h.s8.bf16 %v382
    %v1020 = vunpack.c.h.s8.bf16 %v383
    %v1021 = vunpack.c.h.s8.bf16 %v384
    %v1022 = vunpack.c.h.s8.bf16 %v385
    %v1023 = vunpack.c.h.s8.bf16 %v386
    %v1024 = vunpack.c.h.s8.bf16 %v387
    %v1025 = vunpack.c.l.s8.bf16 %v388
    %v1026 = vunpack.c.l.s8.bf16 %v389
    %v1027 = vunpack.c.l.s8.bf16 %v390
    %v1028 = vunpack.c.l.s8.bf16 %v391
    %v1029 = vunpack.c.l.s8.bf16 %v392
    %v1030 = vunpack.c.l.s8.bf16 %v393
    %v1031 = vunpack.c.l.s8.bf16 %v394
    %v1032 = vunpack.c.h.s8.bf16 %v388
    %v1033 = vunpack.c.h.s8.bf16 %v389
    %v1034 = vunpack.c.h.s8.bf16 %v390
    %v1035 = vunpack.c.h.s8.bf16 %v391
    %v1036 = vunpack.c.h.s8.bf16 %v392
    %v1037 = vunpack.c.h.s8.bf16 %v393
    %v1038 = vunpack.c.h.s8.bf16 %v394
    %v1039 = vunpack.c.l.s8.bf16 %v395
    %v1040 = vunpack.c.l.s8.bf16 %v396
    %v1041 = vunpack.c.l.s8.bf16 %v397
    %v1042 = vunpack.c.l.s8.bf16 %v398
    %v1043 = vunpack.c.l.s8.bf16 %v399
    %v1044 = vunpack.c.l.s8.bf16 %v400
    %v1045 = vunpack.c.l.s8.bf16 %v401
    %v1046 = vunpack.c.h.s8.bf16 %v395
    %v1047 = vunpack.c.h.s8.bf16 %v396
    %v1048 = vunpack.c.h.s8.bf16 %v397
    %v1049 = vunpack.c.h.s8.bf16 %v398
    %v1050 = vunpack.c.h.s8.bf16 %v399
    %v1051 = vunpack.c.h.s8.bf16 %v400
    %v1052 = vunpack.c.h.s8.bf16 %v401
    %v1053 = vunpack.c.l.s8.bf16 %v402
    %v1054 = vunpack.c.l.s8.bf16 %v403
    %v1055 = vunpack.c.l.s8.bf16 %v404
    %v1056 = vunpack.c.l.s8.bf16 %v405
    %v1057 = vunpack.c.l.s8.bf16 %v406
    %v1058 = vunpack.c.l.s8.bf16 %v407
    %v1059 = vunpack.c.l.s8.bf16 %v408
    %v1060 = vunpack.c.h.s8.bf16 %v402
    %v1061 = vunpack.c.h.s8.bf16 %v403
    %v1062 = vunpack.c.h.s8.bf16 %v404
    %v1063 = vunpack.c.h.s8.bf16 %v405
    %v1064 = vunpack.c.h.s8.bf16 %v406
    %v1065 = vunpack.c.h.s8.bf16 %v407
    %v1066 = vunpack.c.h.s8.bf16 %v408
    %v1067 = vunpack.c.l.s8.bf16 %v409
    %v1068 = vunpack.c.l.s8.bf16 %v410
    %v1069 = vunpack.c.l.s8.bf16 %v411
    %v1070 = vunpack.c.l.s8.bf16 %v412
    %v1071 = vunpack.c.l.s8.bf16 %v413
    %v1072 = vunpack.c.l.s8.bf16 %v414
    %v1073 = vunpack.c.l.s8.bf16 %v415
    %v1074 = vunpack.c.h.s8.bf16 %v409
    %v1075 = vunpack.c.h.s8.bf16 %v410
    %v1076 = vunpack.c.h.s8.bf16 %v411
    %v1077 = vunpack.c.h.s8.bf16 %v412
    %v1078 = vunpack.c.h.s8.bf16 %v413
    %v1079 = vunpack.c.h.s8.bf16 %v414
    %v1080 = vunpack.c.h.s8.bf16 %v415
    %v1081 = vunpack.c.l.s8.bf16 %v416
    %v1082 = vunpack.c.l.s8.bf16 %v417
    %v1083 = vunpack.c.l.s8.bf16 %v418
    %v1084 = vunpack.c.l.s8.bf16 %v419
    %v1085 = vunpack.c.l.s8.bf16 %v420
    %v1086 = vunpack.c.l.s8.bf16 %v421
    %v1087 = vunpack.c.l.s8.bf16 %v422
    %v1088 = vunpack.c.h.s8.bf16 %v416
    %v1089 = vunpack.c.h.s8.bf16 %v417
    %v1090 = vunpack.c.h.s8.bf16 %v418
    %v1091 = vunpack.c.h.s8.bf16 %v419
    %v1092 = vunpack.c.h.s8.bf16 %v420
    %v1093 = vunpack.c.h.s8.bf16 %v421
    %v1094 = vunpack.c.h.s8.bf16 %v422
    %v1095 = vunpack.c.l.s8.bf16 %v423
    %v1096 = vunpack.c.l.s8.bf16 %v424
    %v1097 = vunpack.c.l.s8.bf16 %v425
    %v1098 = vunpack.c.l.s8.bf16 %v426
    %v1099 = vunpack.c.l.s8.bf16 %v427
    %v1100 = vunpack.c.l.s8.bf16 %v428
    %v1101 = vunpack.c.l.s8.bf16 %v429
    %v1102 = vunpack.c.h.s8.bf16 %v423
    %v1103 = vunpack.c.h.s8.bf16 %v424
    %v1104 = vunpack.c.h.s8.bf16 %v425
    %v1105 = vunpack.c.h.s8.bf16 %v426
    %v1106 = vunpack.c.h.s8.bf16 %v427
    %v1107 = vunpack.c.h.s8.bf16 %v428
    %v1108 = vunpack.c.h.s8.bf16 %v429
    %v1109 = vunpack.c.l.s8.bf16 %v430
    %v1110 = vunpack.c.l.s8.bf16 %v431
    %v1111 = vunpack.c.l.s8.bf16 %v432
    %v1112 = vunpack.c.l.s8.bf16 %v433
    %v1113 = vunpack.c.l.s8.bf16 %v434
    %v1114 = vunpack.c.l.s8.bf16 %v435
    %v1115 = vunpack.c.l.s8.bf16 %v436
    %v1116 = vunpack.c.h.s8.bf16 %v430
    %v1117 = vunpack.c.h.s8.bf16 %v431
    %v1118 = vunpack.c.h.s8.bf16 %v432
    %v1119 = vunpack.c.h.s8.bf16 %v433
    %v1120 = vunpack.c.h.s8.bf16 %v434
    %v1121 = vunpack.c.h.s8.bf16 %v435
    %v1122 = vunpack.c.h.s8.bf16 %v436
    %v1123 = vunpack.c.l.s8.bf16 %v437
    %v1124 = vunpack.c.l.s8.bf16 %v438
    %v1125 = vunpack.c.l.s8.bf16 %v439
    %v1126 = vunpack.c.l.s8.bf16 %v440
    %v1127 = vunpack.c.l.s8.bf16 %v441
    %v1128 = vunpack.c.l.s8.bf16 %v442
    %v1129 = vunpack.c.l.s8.bf16 %v443
    %v1130 = vunpack.c.h.s8.bf16 %v437
    %v1131 = vunpack.c.h.s8.bf16 %v438
    %v1132 = vunpack.c.h.s8.bf16 %v439
    %v1133 = vunpack.c.h.s8.bf16 %v440
    %v1134 = vunpack.c.h.s8.bf16 %v441
    %v1135 = vunpack.c.h.s8.bf16 %v442
    %v1136 = vunpack.c.h.s8.bf16 %v443
    %v1137 = vunpack.c.l.s8.bf16 %v444
    %v1138 = vunpack.c.l.s8.bf16 %v445
    %v1139 = vunpack.c.l.s8.bf16 %v446
    %v1140 = vunpack.c.l.s8.bf16 %v447
    %v1141 = vunpack.c.l.s8.bf16 %v448
    %v1142 = vunpack.c.l.s8.bf16 %v449
    %v1143 = vunpack.c.l.s8.bf16 %v450
    %v1144 = vunpack.c.h.s8.bf16 %v444
    %v1145 = vunpack.c.h.s8.bf16 %v445
    %v1146 = vunpack.c.h.s8.bf16 %v446
    %v1147 = vunpack.c.h.s8.bf16 %v447
    %v1148 = vunpack.c.h.s8.bf16 %v448
    %v1149 = vunpack.c.h.s8.bf16 %v449
    %v1150 = vunpack.c.h.s8.bf16 %v450
    %v1151 = vld [vmem:[#allocation2] sm:$0xff]
    %v1152 = vld [vmem:[#allocation2 + $0x8] sm:$0x1f]
    %v1155 = vcombine.high %v1151, %v1151
    %v1157 = vunpack.c.l.s4 1966171168
    %v1158 = vunpack.c.0.s8 %v1157
    %v1159 = vlaneseq
    %v1160 = vshrl.u32 %v1159, 7
    %v1161 = vsub.s32 %v1158, %v1160
    %v1162 = vrot.slane %v1151, %v1161
    %v1164 = vunpack.c.l.s4 1966171168
    %v1165 = vunpack.c.0.s8 %v1164
    %v1166 = vlaneseq
    %v1167 = vshrl.u32 %v1166, 7
    %v1168 = vsub.s32 %v1165, %v1167
    %v1169 = vrot.slane %v1155, %v1168
    %v1170 = vcombine.high %v1162, %v1162
    %v1171 = vcombine.high %v1169, %v1169
    %v1173 = vunpack.c.l.s4 1966171168
    %v1174 = vunpack.c.0.s8 %v1173
    %v1175 = vlaneseq
    %v1176 = vshrl.u32 %v1175, 7
    %v1177 = vsub.s32 %v1174, %v1176
    %v1178 = vrot.slane %v1162, %v1177
    %v1180 = vunpack.c.l.s4 1966171168
    %v1181 = vunpack.c.0.s8 %v1180
    %v1182 = vlaneseq
    %v1183 = vshrl.u32 %v1182, 7
    %v1184 = vsub.s32 %v1181, %v1183
    %v1185 = vrot.slane %v1169, %v1184
    %v1187 = vunpack.c.l.s4 1966171168
    %v1188 = vunpack.c.0.s8 %v1187
    %v1189 = vlaneseq
    %v1190 = vshrl.u32 %v1189, 7
    %v1191 = vsub.s32 %v1188, %v1190
    %v1192 = vrot.slane %v1170, %v1191
    %v1194 = vunpack.c.l.s4 1966171168
    %v1195 = vunpack.c.0.s8 %v1194
    %v1196 = vlaneseq
    %v1197 = vshrl.u32 %v1196, 7
    %v1198 = vsub.s32 %v1195, %v1197
    %v1199 = vrot.slane %v1171, %v1198
    %v1200 = vcombine.high %v1178, %v1178
    %v1201 = vcombine.high %v1185, %v1185
    %v1202 = vcombine.high %v1192, %v1192
    %v1203 = vcombine.high %v1199, %v1199
    %v1204 = vcombine.high %v1152, %v1152
    %v1206 = vunpack.c.l.s4 1966171168
    %v1207 = vunpack.c.0.s8 %v1206
    %v1208 = vlaneseq
    %v1209 = vshrl.u32 %v1208, 7
    %v1210 = vsub.s32 %v1207, %v1209
    %v1211 = vrot.slane %v1152, %v1210
    %v1213 = vunpack.c.l.s4 1966171168
    %v1214 = vunpack.c.0.s8 %v1213
    %v1215 = vlaneseq
    %v1216 = vshrl.u32 %v1215, 7
    %v1217 = vsub.s32 %v1214, %v1216
    %v1218 = vrot.slane %v1204, %v1217
    %v1219 = vcombine.high %v1211, %v1211
    %v1221 = vunpack.c.l.s4 1966171168
    %v1222 = vunpack.c.0.s8 %v1221
    %v1223 = vlaneseq
    %v1224 = vshrl.u32 %v1223, 7
    %v1225 = vsub.s32 %v1222, %v1224
    %v1226 = vrot.slane %v1211, %v1225
    %v1228 = vunpack.c.l.s4 1966171168
    %v1229 = vunpack.c.0.s8 %v1228
    %v1230 = vlaneseq
    %v1231 = vshrl.u32 %v1230, 7
    %v1232 = vsub.s32 %v1229, %v1231
    %v1233 = vrot.slane %v1218, %v1232
    %v1235 = vunpack.c.l.s4 1966171168
    %v1236 = vunpack.c.0.s8 %v1235
    %v1237 = vlaneseq
    %v1238 = vshrl.u32 %v1237, 7
    %v1239 = vsub.s32 %v1236, %v1238
    %v1240 = vrot.slane %v1219, %v1239
    %v1241 = vcombine.high %v1226, %v1226
    %v1242 = vcombine.high %v1240, %v1240
    %vm1255 = vcmask 523264
    %v1257 = vsel %vm1255, %v1233, 0
    %1259 = vmatprep.subr.bf16.mxu0 %v452
    %1260 = vmatpush1.bf16.msra.mxu0 %v451
    %1261 = vmatprep.subr.bf16.mxu0 %v459
    %1262 = vmatpush1.bf16.msra.mxu0 %v458
    %1263 = vmatprep.subr.bf16.mxu0 %v466
    %1264 = vmatpush1.bf16.msra.mxu0 %v465
    %1265 = vmatprep.subr.bf16.mxu0 %v473
    %1266 = vmatpush1.bf16.msra.mxu0 %v472
    %1267 = vmatprep.subr.bf16.mxu0 %v480
    %1268 = vmatpush1.bf16.msra.mxu0 %v479
    %1269 = vmatprep.subr.bf16.mxu0 %v487
    %1270 = vmatpush1.bf16.msra.mxu0 %v486
    %1271 = vmatprep.subr.bf16.mxu0 %v494
    %1272 = vmatpush1.bf16.msra.mxu0 %v493
    %1273 = vmatprep.subr.bf16.mxu0 %v501
    %1274 = vmatpush1.bf16.msra.mxu0 %v500
    %1275 = vmatprep.subr.bf16.mxu0 %v508
    %1276 = vmatpush1.bf16.msra.mxu0 %v507
    %1277 = vmatprep.subr.bf16.mxu0 %v515
    %1278 = vmatpush1.bf16.msra.mxu0 %v514
    %1279 = vmatprep.subr.bf16.mxu0 %v522
    %1280 = vmatpush1.bf16.msra.mxu0 %v521
    %1281 = vmatprep.subr.bf16.mxu0 %v529
    %1282 = vmatpush1.bf16.msra.mxu0 %v528
    %1283 = vmatprep.subr.bf16.mxu0 %v536
    %1284 = vmatpush1.bf16.msra.mxu0 %v535
    %1285 = vmatprep.subr.bf16.mxu0 %v543
    %1286 = vmatpush1.bf16.msra.mxu0 %v542
    %1287 = vmatprep.subr.bf16.mxu0 %v550
    %1288 = vmatpush1.bf16.msra.mxu0 %v549
    %1289 = vmatprep.subr.bf16.mxu0 %v557
    %1290 = vmatpush1.bf16.msra.mxu0 %v556
    %1291 = vmatprep.mubr.bf16.mxu0 %v1192
    %1292 = vmatmul.mubr.bf16.gmra.mrb[0].mxu0 %v1178
    %v1293 = vpop.f32.mrb[0].mxu0
    %v1294 = vadd.f32 0.0, %v1293
    %v1295 = vpop.f32.mrb[0].mxu0
    %v1296 = vadd.f32 0.0, %v1295
    %v1297 = vpop.f32.mrb[0].mxu0
    %v1298 = vpop.f32.mrb[0].mxu0
    %1299 = vdwg.mxu0
    %1300 = vmatprep.subr.bf16.mxu0 %v564
    %1301 = vmatpush1.bf16.msra.mxu0 %v563
    %1302 = vmatprep.subr.bf16.mxu0 %v571
    %1303 = vmatpush1.bf16.msra.mxu0 %v570
    %1304 = vmatprep.subr.bf16.mxu0 %v578
    %1305 = vmatpush1.bf16.msra.mxu0 %v577
    %1306 = vmatprep.subr.bf16.mxu0 %v585
    %1307 = vmatpush1.bf16.msra.mxu0 %v584
    %1308 = vmatprep.subr.bf16.mxu0 %v592
    %1309 = vmatpush1.bf16.msra.mxu0 %v591
    %1310 = vmatprep.subr.bf16.mxu0 %v599
    %1311 = vmatpush1.bf16.msra.mxu0 %v598
    %1312 = vmatprep.subr.bf16.mxu0 %v606
    %1313 = vmatpush1.bf16.msra.mxu0 %v605
    %1314 = vmatprep.subr.bf16.mxu0 %v613
    %1315 = vmatpush1.bf16.msra.mxu0 %v612
    %1316 = vmatprep.subr.bf16.mxu0 %v620
    %1317 = vmatpush1.bf16.msra.mxu0 %v619
    %1318 = vmatprep.subr.bf16.mxu0 %v627
    %1319 = vmatpush1.bf16.msra.mxu0 %v626
    %1320 = vmatprep.subr.bf16.mxu0 %v634
    %1321 = vmatpush1.bf16.msra.mxu0 %v633
    %1322 = vmatprep.subr.bf16.mxu0 %v641
    %1323 = vmatpush1.bf16.msra.mxu0 %v640
    %1324 = vmatprep.subr.bf16.mxu0 %v648
    %1325 = vmatpush1.bf16.msra.mxu0 %v647
    %1326 = vmatprep.subr.bf16.mxu0 %v655
    %1327 = vmatpush1.bf16.msra.mxu0 %v654
    %1328 = vmatprep.subr.bf16.mxu0 %v662
    %1329 = vmatpush1.bf16.msra.mxu0 %v661
    %1330 = vmatprep.subr.bf16.mxu0 %v669
    %1331 = vmatpush1.bf16.msra.mxu0 %v668
    %1332 = vmatprep.mubr.bf16.mxu0 %v1202
    %1333 = vmatmul.mubr.bf16.gmra.mrb[0].mxu0 %v1200
    %v1334 = vpop.f32.mrb[0].mxu0
    %v1335 = vadd.f32 %v1294, %v1334
    %v1336 = vpop.f32.mrb[0].mxu0
    %v1337 = vadd.f32 %v1296, %v1336
    %v1338 = vpop.f32.mrb[0].mxu0
    %v1339 = vpop.f32.mrb[0].mxu0
    %1340 = vdwg.mxu0
    %1341 = vmatprep.subr.bf16.mxu0 %v676
    %1342 = vmatpush1.bf16.msra.mxu0 %v675
    %1343 = vmatprep.subr.bf16.mxu0 %v683
    %1344 = vmatpush1.bf16.msra.mxu0 %v682
    %1345 = vmatprep.subr.bf16.mxu0 %v690
    %1346 = vmatpush1.bf16.msra.mxu0 %v689
    %1347 = vmatprep.subr.bf16.mxu0 %v697
    %1348 = vmatpush1.bf16.msra.mxu0 %v696
    %1349 = vmatprep.subr.bf16.mxu0 %v704
    %1350 = vmatpush1.bf16.msra.mxu0 %v703
    %1351 = vmatprep.subr.bf16.mxu0 %v711
    %1352 = vmatpush1.bf16.msra.mxu0 %v710
    %1353 = vmatprep.subr.bf16.mxu0 %v718
    %1354 = vmatpush1.bf16.msra.mxu0 %v717
    %1355 = vmatprep.subr.bf16.mxu0 %v725
    %1356 = vmatpush1.bf16.msra.mxu0 %v724
    %1357 = vmatprep.subr.bf16.mxu0 %v732
    %1358 = vmatpush1.bf16.msra.mxu0 %v731
    %1359 = vmatprep.subr.bf16.mxu0 %v739
    %1360 = vmatpush1.bf16.msra.mxu0 %v738
    %1361 = vmatprep.subr.bf16.mxu0 %v746
    %1362 = vmatpush1.bf16.msra.mxu0 %v745
    %1363 = vmatprep.subr.bf16.mxu0 %v753
    %1364 = vmatpush1.bf16.msra.mxu0 %v752
    %1365 = vmatprep.subr.bf16.mxu0 %v760
    %1366 = vmatpush1.bf16.msra.mxu0 %v759
    %1367 = vmatprep.subr.bf16.mxu0 %v767
    %1368 = vmatpush1.bf16.msra.mxu0 %v766
    %1369 = vmatprep.subr.bf16.mxu0 %v774
    %1370 = vmatpush1.bf16.msra.mxu0 %v773
    %1371 = vmatprep.subr.bf16.mxu0 %v781
    %1372 = vmatpush1.bf16.msra.mxu0 %v780
    %1373 = vmatprep.mubr.bf16.mxu0 %v1199
    %1374 = vmatmul.mubr.bf16.gmra.mrb[0].mxu0 %v1185
    %v1375 = vpop.f32.mrb[0].mxu0
    %v1376 = vadd.f32 %v1335, %v1375
    %v1377 = vpop.f32.mrb[0].mxu0
    %v1378 = vadd.f32 %v1337, %v1377
    %v1379 = vpop.f32.mrb[0].mxu0
    %v1380 = vpop.f32.mrb[0].mxu0
    %1381 = vdwg.mxu0
    %1382 = vmatprep.subr.bf16.mxu0 %v788
    %1383 = vmatpush1.bf16.msra.mxu0 %v787
    %1384 = vmatprep.subr.bf16.mxu0 %v795
    %1385 = vmatpush1.bf16.msra.mxu0 %v794
    %1386 = vmatprep.subr.bf16.mxu0 %v802
    %1387 = vmatpush1.bf16.msra.mxu0 %v801
    %1388 = vmatprep.subr.bf16.mxu0 %v809
    %1389 = vmatpush1.bf16.msra.mxu0 %v808
    %1390 = vmatprep.subr.bf16.mxu0 %v816
    %1391 = vmatpush1.bf16.msra.mxu0 %v815
    %1392 = vmatprep.subr.bf16.mxu0 %v823
    %1393 = vmatpush1.bf16.msra.mxu0 %v822
    %1394 = vmatprep.subr.bf16.mxu0 %v830
    %1395 = vmatpush1.bf16.msra.mxu0 %v829
    %1396 = vmatprep.subr.bf16.mxu0 %v837
    %1397 = vmatpush1.bf16.msra.mxu0 %v836
    %1398 = vmatprep.subr.bf16.mxu0 %v844
    %1399 = vmatpush1.bf16.msra.mxu0 %v843
    %1400 = vmatprep.subr.bf16.mxu0 %v851
    %1401 = vmatpush1.bf16.msra.mxu0 %v850
    %1402 = vmatprep.subr.bf16.mxu0 %v858
    %1403 = vmatpush1.bf16.msra.mxu0 %v857
    %1404 = vmatprep.subr.bf16.mxu0 %v865
    %1405 = vmatpush1.bf16.msra.mxu0 %v864
    %1406 = vmatprep.subr.bf16.mxu0 %v872
    %1407 = vmatpush1.bf16.msra.mxu0 %v871
    %1408 = vmatprep.subr.bf16.mxu0 %v879
    %1409 = vmatpush1.bf16.msra.mxu0 %v878
    %1410 = vmatprep.subr.bf16.mxu0 %v886
    %1411 = vmatpush1.bf16.msra.mxu0 %v885
    %1412 = vmatprep.subr.bf16.mxu0 %v893
    %1413 = vmatpush1.bf16.msra.mxu0 %v892
    %1414 = vmatprep.mubr.bf16.mxu0 %v1203
    %1415 = vmatmul.mubr.bf16.gmra.mrb[0].mxu0 %v1201
    %v1416 = vpop.f32.mrb[0].mxu0
    %v1417 = vadd.f32 %v1376, %v1416
    %v1418 = vpop.f32.mrb[0].mxu0
    %v1419 = vadd.f32 %v1378, %v1418
    %v1420 = vpop.f32.mrb[0].mxu0
    %v1421 = vpop.f32.mrb[0].mxu0
    %1422 = vdwg.mxu0
    %1423 = vmatprep.subr.bf16.mxu0 %v900
    %1424 = vmatpush1.bf16.msra.mxu0 %v899
    %1425 = vmatprep.subr.bf16.mxu0 %v907
    %1426 = vmatpush1.bf16.msra.mxu0 %v906
    %1427 = vmatprep.subr.bf16.mxu0 %v914
    %1428 = vmatpush1.bf16.msra.mxu0 %v913
    %1429 = vmatprep.subr.bf16.mxu0 %v921
    %1430 = vmatpush1.bf16.msra.mxu0 %v920
    %1431 = vmatprep.subr.bf16.mxu0 %v928
    %1432 = vmatpush1.bf16.msra.mxu0 %v927
    %1433 = vmatprep.subr.bf16.mxu0 %v935
    %1434 = vmatpush1.bf16.msra.mxu0 %v934
    %1435 = vmatprep.subr.bf16.mxu0 %v942
    %1436 = vmatpush1.bf16.msra.mxu0 %v941
    %1437 = vmatprep.subr.bf16.mxu0 %v949
    %1438 = vmatpush1.bf16.msra.mxu0 %v948
    %1439 = vmatprep.subr.bf16.mxu0 %v956
    %1440 = vmatpush1.bf16.msra.mxu0 %v955
    %1441 = vmatprep.subr.bf16.mxu0 %v963
    %1442 = vmatpush1.bf16.msra.mxu0 %v962
    %1443 = vmatprep.subr.bf16.mxu0 %v970
    %1444 = vmatpush1.bf16.msra.mxu0 %v969
    %1445 = vmatprep.subr.bf16.mxu0 %v977
    %1446 = vmatpush1.bf16.msra.mxu0 %v976
    %1447 = vmatprep.subr.bf16.mxu0 %v984
    %1448 = vmatpush1.bf16.msra.mxu0 %v983
    %1449 = vmatprep.subr.bf16.mxu0 %v991
    %1450 = vmatpush1.bf16.msra.mxu0 %v990
    %1451 = vmatprep.subr.bf16.mxu0 %v998
    %1452 = vmatpush1.bf16.msra.mxu0 %v997
    %1453 = vmatprep.subr.bf16.mxu0 %v1005
    %1454 = vmatpush1.bf16.msra.mxu0 %v1004
    %1455 = vmatprep.mubr.bf16.mxu0 %v1240
    %1456 = vmatmul.mubr.bf16.gmra.mrb[0].mxu0 %v1226
    %v1457 = vpop.f32.mrb[0].mxu0
    %v1458 = vadd.f32 %v1417, %v1457
    %v1459 = vpop.f32.mrb[0].mxu0
    %v1460 = vadd.f32 %v1419, %v1459
    %v1461 = vpop.f32.mrb[0].mxu0
    %v1462 = vpop.f32.mrb[0].mxu0
    %1463 = vdwg.mxu0
    %1464 = vmatprep.subr.bf16.mxu0 %v1012
    %1465 = vmatpush1.bf16.msra.mxu0 %v1011
    %1466 = vmatprep.subr.bf16.mxu0 %v1019
    %1467 = vmatpush1.bf16.msra.mxu0 %v1018
    %1468 = vmatprep.subr.bf16.mxu0 %v1026
    %1469 = vmatpush1.bf16.msra.mxu0 %v1025
    %1470 = vmatprep.subr.bf16.mxu0 %v1033
    %1471 = vmatpush1.bf16.msra.mxu0 %v1032
    %1472 = vmatprep.subr.bf16.mxu0 %v1040
    %1473 = vmatpush1.bf16.msra.mxu0 %v1039
    %1474 = vmatprep.subr.bf16.mxu0 %v1047
    %1475 = vmatpush1.bf16.msra.mxu0 %v1046
    %1476 = vmatprep.subr.bf16.mxu0 %v1054
    %1477 = vmatpush1.bf16.msra.mxu0 %v1053
    %1478 = vmatprep.subr.bf16.mxu0 %v1061
    %1479 = vmatpush1.bf16.msra.mxu0 %v1060
    %1480 = vmatprep.subr.bf16.mxu0 %v1068
    %1481 = vmatpush1.bf16.msra.mxu0 %v1067
    %1482 = vmatprep.subr.bf16.mxu0 %v1075
    %1483 = vmatpush1.bf16.msra.mxu0 %v1074
    %1484 = vmatprep.subr.bf16.mxu0 %v1082
    %1485 = vmatpush1.bf16.msra.mxu0 %v1081
    %1486 = vmatprep.subr.bf16.mxu0 %v1089
    %1487 = vmatpush1.bf16.msra.mxu0 %v1088
    %1488 = vmatprep.subr.bf16.mxu0 %v1096
    %1489 = vmatpush1.bf16.msra.mxu0 %v1095
    %1490 = vmatprep.subr.bf16.mxu0 %v1103
    %1491 = vmatpush1.bf16.msra.mxu0 %v1102
    %1492 = vmatprep.subr.bf16.mxu0 %v1110
    %1493 = vmatpush1.bf16.msra.mxu0 %v1109
    %1494 = vmatprep.subr.bf16.mxu0 %v1117
    %1495 = vmatpush1.bf16.msra.mxu0 %v1116
    %1496 = vmatprep.mubr.bf16.mxu0 %v1242
    %1497 = vmatmul.mubr.bf16.gmra.mrb[0].mxu0 %v1241
    %v1498 = vpop.f32.mrb[0].mxu0
    %v1499 = vadd.f32 %v1458, %v1498
    %v1500 = vpop.f32.mrb[0].mxu0
    %v1501 = vadd.f32 %v1460, %v1500
    %v1502 = vpop.f32.mrb[0].mxu0
    %v1503 = vpop.f32.mrb[0].mxu0
    %1504 = vdwg.mxu0
    %1505 = vmatprep.subr.bf16.mxu0 %v1124
    %1506 = vmatpush1.bf16.msra.mxu0 %v1123
    %1507 = vmatprep.subr.bf16.mxu0 %v1131
    %1508 = vmatpush1.bf16.msra.mxu0 %v1130
    %1509 = vmatprep.subr.bf16.mxu0 %v1138
    %1510 = vmatpush1.bf16.msra.mxu0 %v1137
    %1511 = vmatprep.subr.bf16.mxu0 %v1145
    %1512 = vmatpush1.bf16.msra.mxu0 %v1144
    %1513 = vmatprep.subr.bf16.mxu0 0
    %1514 = vmatpush1.bf16.msra.mxu0 0
    %1515 = vmatprep.subr.bf16.mxu0 0
    %1516 = vmatpush1.bf16.msra.mxu0 0
    %1517 = vmatprep.subr.bf16.mxu0 0
    %1518 = vmatpush1.bf16.msra.mxu0 0
    %1519 = vmatprep.subr.bf16.mxu0 0
    %1520 = vmatpush1.bf16.msra.mxu0 0
    %1521 = vmatprep.subr.bf16.mxu0 0
    %1522 = vmatpush1.bf16.msra.mxu0 0
    %1523 = vmatprep.subr.bf16.mxu0 0
    %1524 = vmatpush1.bf16.msra.mxu0 0
    %1525 = vmatprep.subr.bf16.mxu0 0
    %1526 = vmatpush1.bf16.msra.mxu0 0
    %1527 = vmatprep.subr.bf16.mxu0 0
    %1528 = vmatpush1.bf16.msra.mxu0 0
    %1529 = vmatprep.subr.bf16.mxu0 0
    %1530 = vmatpush1.bf16.msra.mxu0 0
    %1531 = vmatprep.subr.bf16.mxu0 0
    %1532 = vmatpush1.bf16.msra.mxu0 0
    %1533 = vmatprep.subr.bf16.mxu0 0
    %1534 = vmatpush1.bf16.msra.mxu0 0
    %1535 = vmatprep.subr.bf16.mxu0 0
    %1536 = vmatpush1.bf16.msra.mxu0 0
    %1537 = vmatprep.mubr.bf16.mxu0 0
    %1538 = vmatmul.mubr.bf16.gmra.mrb[0].mxu0 %v1257
    %v1539 = vpop.f32.mrb[0].mxu0
    %v1540 = vadd.f32 %v1499, %v1539
    %v1541 = vpop.f32.mrb[0].mxu0
    %v1542 = vadd.f32 %v1501, %v1541
    %v1543 = vpop.f32.mrb[0].mxu0
    %v1544 = vpop.f32.mrb[0].mxu0
    %1545 = vdwg.mxu0
    %1546 = vmatprep.subr.bf16.mxu0 %v454
    %1547 = vmatpush1.bf16.msra.mxu0 %v453
    %1548 = vmatprep.subr.bf16.mxu0 %v461
    %1549 = vmatpush1.bf16.msra.mxu0 %v460
    %1550 = vmatprep.subr.bf16.mxu0 %v468
    %1551 = vmatpush1.bf16.msra.mxu0 %v467
    %1552 = vmatprep.subr.bf16.mxu0 %v475
    %1553 = vmatpush1.bf16.msra.mxu0 %v474
    %1554 = vmatprep.subr.bf16.mxu0 %v482
    %1555 = vmatpush1.bf16.msra.mxu0 %v481
    %1556 = vmatprep.subr.bf16.mxu0 %v489
    %1557 = vmatpush1.bf16.msra.mxu0 %v488
    %1558 = vmatprep.subr.bf16.mxu0 %v496
    %1559 = vmatpush1.bf16.msra.mxu0 %v495
    %1560 = vmatprep.subr.bf16.mxu0 %v503
    %1561 = vmatpush1.bf16.msra.mxu0 %v502
    %1562 = vmatprep.subr.bf16.mxu0 %v510
    %1563 = vmatpush1.bf16.msra.mxu0 %v509
    %1564 = vmatprep.subr.bf16.mxu0 %v517
    %1565 = vmatpush1.bf16.msra.mxu0 %v516
    %1566 = vmatprep.subr.bf16.mxu0 %v524
    %1567 = vmatpush1.bf16.msra.mxu0 %v523
    %1568 = vmatprep.subr.bf16.mxu0 %v531
    %1569 = vmatpush1.bf16.msra.mxu0 %v530
    %1570 = vmatprep.subr.bf16.mxu0 %v538
    %1571 = vmatpush1.bf16.msra.mxu0 %v537
    %1572 = vmatprep.subr.bf16.mxu0 %v545
    %1573 = vmatpush1.bf16.msra.mxu0 %v544
    %1574 = vmatprep.subr.bf16.mxu0 %v552
    %1575 = vmatpush1.bf16.msra.mxu0 %v551
    %1576 = vmatprep.subr.bf16.mxu0 %v559
    %1577 = vmatpush1.bf16.msra.mxu0 %v558
    %1578 = vmatprep.mubr.bf16.mxu0 %v1192
    %1579 = vmatmul.mubr.bf16.gmra.mrb[0].mxu0 %v1178
    %v1580 = vpop.f32.mrb[0].mxu0
    %v1581 = vadd.f32 0.0, %v1580
    %v1582 = vpop.f32.mrb[0].mxu0
    %v1583 = vadd.f32 0.0, %v1582
    %v1584 = vpop.f32.mrb[0].mxu0
    %v1585 = vpop.f32.mrb[0].mxu0
    %1586 = vdwg.mxu0
    %1587 = vmatprep.subr.bf16.mxu0 %v566
    %1588 = vmatpush1.bf16.msra.mxu0 %v565
    %1589 = vmatprep.subr.bf16.mxu0 %v573
    %1590 = vmatpush1.bf16.msra.mxu0 %v572
    %1591 = vmatprep.subr.bf16.mxu0 %v580
    %1592 = vmatpush1.bf16.msra.mxu0 %v579
    %1593 = vmatprep.subr.bf16.mxu0 %v587
    %1594 = vmatpush1.bf16.msra.mxu0 %v586
    %1595 = vmatprep.subr.bf16.mxu0 %v594
    %1596 = vmatpush1.bf16.msra.mxu0 %v593
    %1597 = vmatprep.subr.bf16.mxu0 %v601
    %1598 = vmatpush1.bf16.msra.mxu0 %v600
    %1599 = vmatprep.subr.bf16.mxu0 %v608
    %1600 = vmatpush1.bf16.msra.mxu0 %v607
    %1601 = vmatprep.subr.bf16.mxu0 %v615
    %1602 = vmatpush1.bf16.msra.mxu0 %v614
    %1603 = vmatprep.subr.bf16.mxu0 %v622
    %1604 = vmatpush1.bf16.msra.mxu0 %v621
    %1605 = vmatprep.subr.bf16.mxu0 %v629
    %1606 = vmatpush1.bf16.msra.mxu0 %v628
    %1607 = vmatprep.subr.bf16.mxu0 %v636
    %1608 = vmatpush1.bf16.msra.mxu0 %v635
    %1609 = vmatprep.subr.bf16.mxu0 %v643
    %1610 = vmatpush1.bf16.msra.mxu0 %v642
    %1611 = vmatprep.subr.bf16.mxu0 %v650
    %1612 = vmatpush1.bf16.msra.mxu0 %v649
    %1613 = vmatprep.subr.bf16.mxu0 %v657
    %1614 = vmatpush1.bf16.msra.mxu0 %v656
    %1615 = vmatprep.subr.bf16.mxu0 %v664
    %1616 = vmatpush1.bf16.msra.mxu0 %v663
    %1617 = vmatprep.subr.bf16.mxu0 %v671
    %1618 = vmatpush1.bf16.msra.mxu0 %v670
    %1619 = vmatprep.mubr.bf16.mxu0 %v1202
    %1620 = vmatmul.mubr.bf16.gmra.mrb[0].mxu0 %v1200
    %v1621 = vpop.f32.mrb[0].mxu0
    %v1622 = vadd.f32 %v1581, %v1621
    %v1623 = vpop.f32.mrb[0].mxu0
    %v1624 = vadd.f32 %v1583, %v1623
    %v1625 = vpop.f32.mrb[0].mxu0
    %v1626 = vpop.f32.mrb[0].mxu0
    %1627 = vdwg.mxu0
    %1628 = vmatprep.subr.bf16.mxu0 %v678
    %1629 = vmatpush1.bf16.msra.mxu0 %v677
    %1630 = vmatprep.subr.bf16.mxu0 %v685
    %1631 = vmatpush1.bf16.msra.mxu0 %v684
    %1632 = vmatprep.subr.bf16.mxu0 %v692
    %1633 = vmatpush1.bf16.msra.mxu0 %v691
    %1634 = vmatprep.subr.bf16.mxu0 %v699
    %1635 = vmatpush1.bf16.msra.mxu0 %v698
    %1636 = vmatprep.subr.bf16.mxu0 %v706
    %1637 = vmatpush1.bf16.msra.mxu0 %v705
    %1638 = vmatprep.subr.bf16.mxu0 %v713
    %1639 = vmatpush1.bf16.msra.mxu0 %v712
    %1640 = vmatprep.subr.bf16.mxu0 %v720
    %1641 = vmatpush1.bf16.msra.mxu0 %v719
    %1642 = vmatprep.subr.bf16.mxu0 %v727
    %1643 = vmatpush1.bf16.msra.mxu0 %v726
    %1644 = vmatprep.subr.bf16.mxu0 %v734
    %1645 = vmatpush1.bf16.msra.mxu0 %v733
    %1646 = vmatprep.subr.bf16.mxu0 %v741
    %1647 = vmatpush1.bf16.msra.mxu0 %v740
    %1648 = vmatprep.subr.bf16.mxu0 %v748
    %1649 = vmatpush1.bf16.msra.mxu0 %v747
    %1650 = vmatprep.subr.bf16.mxu0 %v755
    %1651 = vmatpush1.bf16.msra.mxu0 %v754
    %1652 = vmatprep.subr.bf16.mxu0 %v762
    %1653 = vmatpush1.bf16.msra.mxu0 %v761
    %1654 = vmatprep.subr.bf16.mxu0 %v769
    %1655 = vmatpush1.bf16.msra.mxu0 %v768
    %1656 = vmatprep.subr.bf16.mxu0 %v776
    %1657 = vmatpush1.bf16.msra.mxu0 %v775
    %1658 = vmatprep.subr.bf16.mxu0 %v783
    %1659 = vmatpush1.bf16.msra.mxu0 %v782
    %1660 = vmatprep.mubr.bf16.mxu0 %v1199
    %1661 = vmatmul.mubr.bf16.gmra.mrb[0].mxu0 %v1185
    %v1662 = vpop.f32.mrb[0].mxu0
    %v1663 = vadd.f32 %v1622, %v1662
    %v1664 = vpop.f32.mrb[0].mxu0
    %v1665 = vadd.f32 %v1624, %v1664
    %v1666 = vpop.f32.mrb[0].mxu0
    %v1667 = vpop.f32.mrb[0].mxu0
    %1668 = vdwg.mxu0
    %1669 = vmatprep.subr.bf16.mxu0 %v790
    %1670 = vmatpush1.bf16.msra.mxu0 %v789
    %1671 = vmatprep.subr.bf16.mxu0 %v797
    %1672 = vmatpush1.bf16.msra.mxu0 %v796
    %1673 = vmatprep.subr.bf16.mxu0 %v804
    %1674 = vmatpush1.bf16.msra.mxu0 %v803
    %1675 = vmatprep.subr.bf16.mxu0 %v811
    %1676 = vmatpush1.bf16.msra.mxu0 %v810
    %1677 = vmatprep.subr.bf16.mxu0 %v818
    %1678 = vmatpush1.bf16.msra.mxu0 %v817
    %1679 = vmatprep.subr.bf16.mxu0 %v825
    %1680 = vmatpush1.bf16.msra.mxu0 %v824
    %1681 = vmatprep.subr.bf16.mxu0 %v832
    %1682 = vmatpush1.bf16.msra.mxu0 %v831
    %1683 = vmatprep.subr.bf16.mxu0 %v839
    %1684 = vmatpush1.bf16.msra.mxu0 %v838
    %1685 = vmatprep.subr.bf16.mxu0 %v846
    %1686 = vmatpush1.bf16.msra.mxu0 %v845
    %1687 = vmatprep.subr.bf16.mxu0 %v853
    %1688 = vmatpush1.bf16.msra.mxu0 %v852
    %1689 = vmatprep.subr.bf16.mxu0 %v860
    %1690 = vmatpush1.bf16.msra.mxu0 %v859
    %1691 = vmatprep.subr.bf16.mxu0 %v867
    %1692 = vmatpush1.bf16.msra.mxu0 %v866
    %1693 = vmatprep.subr.bf16.mxu0 %v874
    %1694 = vmatpush1.bf16.msra.mxu0 %v873
    %1695 = vmatprep.subr.bf16.mxu0 %v881
    %1696 = vmatpush1.bf16.msra.mxu0 %v880
    %1697 = vmatprep.subr.bf16.mxu0 %v888
    %1698 = vmatpush1.bf16.msra.mxu0 %v887
    %1699 = vmatprep.subr.bf16.mxu0 %v895
    %1700 = vmatpush1.bf16.msra.mxu0 %v894
    %1701 = vmatprep.mubr.bf16.mxu0 %v1203
    %1702 = vmatmul.mubr.bf16.gmra.mrb[0].mxu0 %v1201
    %v1703 = vpop.f32.mrb[0].mxu0
    %v1704 = vadd.f32 %v1663, %v1703
    %v1705 = vpop.f32.mrb[0].mxu0
    %v1706 = vadd.f32 %v1665, %v1705
    %v1707 = vpop.f32.mrb[0].mxu0
    %v1708 = vpop.f32.mrb[0].mxu0
    %1709 = vdwg.mxu0
    %1710 = vmatprep.subr.bf16.mxu0 %v902
    %1711 = vmatpush1.bf16.msra.mxu0 %v901
    %1712 = vmatprep.subr.bf16.mxu0 %v909
    %1713 = vmatpush1.bf16.msra.mxu0 %v908
    %1714 = vmatprep.subr.bf16.mxu0 %v916
    %1715 = vmatpush1.bf16.msra.mxu0 %v915
    %1716 = vmatprep.subr.bf16.mxu0 %v923
    %1717 = vmatpush1.bf16.msra.mxu0 %v922
    %1718 = vmatprep.subr.bf16.mxu0 %v930
    %1719 = vmatpush1.bf16.msra.mxu0 %v929
    %1720 = vmatprep.subr.bf16.mxu0 %v937
    %1721 = vmatpush1.bf16.msra.mxu0 %v936
    %1722 = vmatprep.subr.bf16.mxu0 %v944
    %1723 = vmatpush1.bf16.msra.mxu0 %v943
    %1724 = vmatprep.subr.bf16.mxu0 %v951
    %1725 = vmatpush1.bf16.msra.mxu0 %v950
    %1726 = vmatprep.subr.bf16.mxu0 %v958
    %1727 = vmatpush1.bf16.msra.mxu0 %v957
    %1728 = vmatprep.subr.bf16.mxu0 %v965
    %1729 = vmatpush1.bf16.msra.mxu0 %v964
    %1730 = vmatprep.subr.bf16.mxu0 %v972
    %1731 = vmatpush1.bf16.msra.mxu0 %v971
    %1732 = vmatprep.subr.bf16.mxu0 %v979
    %1733 = vmatpush1.bf16.msra.mxu0 %v978
    %1734 = vmatprep.subr.bf16.mxu0 %v986
    %1735 = vmatpush1.bf16.msra.mxu0 %v985
    %1736 = vmatprep.subr.bf16.mxu0 %v993
    %1737 = vmatpush1.bf16.msra.mxu0 %v992
    %1738 = vmatprep.subr.bf16.mxu0 %v1000
    %1739 = vmatpush1.bf16.msra.mxu0 %v999
    %1740 = vmatprep.subr.bf16.mxu0 %v1007
    %1741 = vmatpush1.bf16.msra.mxu0 %v1006
    %1742 = vmatprep.mubr.bf16.mxu0 %v1240
    %1743 = vmatmul.mubr.bf16.gmra.mrb[0].mxu0 %v1226
    %v1744 = vpop.f32.mrb[0].mxu0
    %v1745 = vadd.f32 %v1704, %v1744
    %v1746 = vpop.f32.mrb[0].mxu0
    %v1747 = vadd.f32 %v1706, %v1746
    %v1748 = vpop.f32.mrb[0].mxu0
    %v1749 = vpop.f32.mrb[0].mxu0
    %1750 = vdwg.mxu0
    %1751 = vmatprep.subr.bf16.mxu0 %v1014
    %1752 = vmatpush1.bf16.msra.mxu0 %v1013
    %1753 = vmatprep.subr.bf16.mxu0 %v1021
    %1754 = vmatpush1.bf16.msra.mxu0 %v1020
    %1755 = vmatprep.subr.bf16.mxu0 %v1028
    %1756 = vmatpush1.bf16.msra.mxu0 %v1027
    %1757 = vmatprep.subr.bf16.mxu0 %v1035
    %1758 = vmatpush1.bf16.msra.mxu0 %v1034
    %1759 = vmatprep.subr.bf16.mxu0 %v1042
    %1760 = vmatpush1.bf16.msra.mxu0 %v1041
    %1761 = vmatprep.subr.bf16.mxu0 %v1049
    %1762 = vmatpush1.bf16.msra.mxu0 %v1048
    %1763 = vmatprep.subr.bf16.mxu0 %v1056
    %1764 = vmatpush1.bf16.msra.mxu0 %v1055
    %1765 = vmatprep.subr.bf16.mxu0 %v1063
    %1766 = vmatpush1.bf16.msra.mxu0 %v1062
    %1767 = vmatprep.subr.bf16.mxu0 %v1070
    %1768 = vmatpush1.bf16.msra.mxu0 %v1069
    %1769 = vmatprep.subr.bf16.mxu0 %v1077
    %1770 = vmatpush1.bf16.msra.mxu0 %v1076
    %1771 = vmatprep.subr.bf16.mxu0 %v1084
    %1772 = vmatpush1.bf16.msra.mxu0 %v1083
    %1773 = vmatprep.subr.bf16.mxu0 %v1091
    %1774 = vmatpush1.bf16.msra.mxu0 %v1090
    %1775 = vmatprep.subr.bf16.mxu0 %v1098
    %1776 = vmatpush1.bf16.msra.mxu0 %v1097
    %1777 = vmatprep.subr.bf16.mxu0 %v1105
    %1778 = vmatpush1.bf16.msra.mxu0 %v1104
    %1779 = vmatprep.subr.bf16.mxu0 %v1112
    %1780 = vmatpush1.bf16.msra.mxu0 %v1111
    %1781 = vmatprep.subr.bf16.mxu0 %v1119
    %1782 = vmatpush1.bf16.msra.mxu0 %v1118
    %1783 = vmatprep.mubr.bf16.mxu0 %v1242
    %1784 = vmatmul.mubr.bf16.gmra.mrb[0].mxu0 %v1241
    %v1785 = vpop.f32.mrb[0].mxu0
    %v1786 = vadd.f32 %v1745, %v1785
    %v1787 = vpop.f32.mrb[0].mxu0
    %v1788 = vadd.f32 %v1747, %v1787
    %v1789 = vpop.f32.mrb[0].mxu0
    %v1790 = vpop.f32.mrb[0].mxu0
    %1791 = vdwg.mxu0
    %1792 = vmatprep.subr.bf16.mxu0 %v1126
    %1793 = vmatpush1.bf16.msra.mxu0 %v1125
    %1794 = vmatprep.subr.bf16.mxu0 %v1133
    %1795 = vmatpush1.bf16.msra.mxu0 %v1132
    %1796 = vmatprep.subr.bf16.mxu0 %v1140
    %1797 = vmatpush1.bf16.msra.mxu0 %v1139
    %1798 = vmatprep.subr.bf16.mxu0 %v1147
    %1799 = vmatpush1.bf16.msra.mxu0 %v1146
    %1800 = vmatprep.subr.bf16.mxu0 0
    %1801 = vmatpush1.bf16.msra.mxu0 0
    %1802 = vmatprep.subr.bf16.mxu0 0
    %1803 = vmatpush1.bf16.msra.mxu0 0
    %1804 = vmatprep.subr.bf16.mxu0 0
    %1805 = vmatpush1.bf16.msra.mxu0 0
    %1806 = vmatprep.subr.bf16.mxu0 0
    %1807 = vmatpush1.bf16.msra.mxu0 0
    %1808 = vmatprep.subr.bf16.mxu0 0
    %1809 = vmatpush1.bf16.msra.mxu0 0
    %1810 = vmatprep.subr.bf16.mxu0 0
    %1811 = vmatpush1.bf16.msra.mxu0 0
    %1812 = vmatprep.subr.bf16.mxu0 0
    %1813 = vmatpush1.bf16.msra.mxu0 0
    %1814 = vmatprep.subr.bf16.mxu0 0
    %1815 = vmatpush1.bf16.msra.mxu0 0
    %1816 = vmatprep.subr.bf16.mxu0 0
    %1817 = vmatpush1.bf16.msra.mxu0 0
    %1818 = vmatprep.subr.bf16.mxu0 0
    %1819 = vmatpush1.bf16.msra.mxu0 0
    %1820 = vmatprep.subr.bf16.mxu0 0
    %1821 = vmatpush1.bf16.msra.mxu0 0
    %1822 = vmatprep.subr.bf16.mxu0 0
    %1823 = vmatpush1.bf16.msra.mxu0 0
    %1824 = vmatprep.mubr.bf16.mxu0 0
    %1825 = vmatmul.mubr.bf16.gmra.mrb[0].mxu0 %v1257
    %v1826 = vpop.f32.mrb[0].mxu0
    %v1827 = vadd.f32 %v1786, %v1826
    %v1828 = vpop.f32.mrb[0].mxu0
    %v1829 = vadd.f32 %v1788, %v1828
    %v1830 = vpop.f32.mrb[0].mxu0
    %v1831 = vpop.f32.mrb[0].mxu0
    %1832 = vdwg.mxu0
    %1833 = vmatprep.subr.bf16.mxu0 %v456
    %1834 = vmatpush1.bf16.msra.mxu0 %v455
    %1835 = vmatprep.subr.bf16.mxu0 %v463
    %1836 = vmatpush1.bf16.msra.mxu0 %v462
    %1837 = vmatprep.subr.bf16.mxu0 %v470
    %1838 = vmatpush1.bf16.msra.mxu0 %v469
    %1839 = vmatprep.subr.bf16.mxu0 %v477
    %1840 = vmatpush1.bf16.msra.mxu0 %v476
    %1841 = vmatprep.subr.bf16.mxu0 %v484
    %1842 = vmatpush1.bf16.msra.mxu0 %v483
    %1843 = vmatprep.subr.bf16.mxu0 %v491
    %1844 = vmatpush1.bf16.msra.mxu0 %v490
    %1845 = vmatprep.subr.bf16.mxu0 %v498
    %1846 = vmatpush1.bf16.msra.mxu0 %v497
    %1847 = vmatprep.subr.bf16.mxu0 %v505
    %1848 = vmatpush1.bf16.msra.mxu0 %v504
    %1849 = vmatprep.subr.bf16.mxu0 %v512
    %1850 = vmatpush1.bf16.msra.mxu0 %v511
    %1851 = vmatprep.subr.bf16.mxu0 %v519
    %1852 = vmatpush1.bf16.msra.mxu0 %v518
    %1853 = vmatprep.subr.bf16.mxu0 %v526
    %1854 = vmatpush1.bf16.msra.mxu0 %v525
    %1855 = vmatprep.subr.bf16.mxu0 %v533
    %1856 = vmatpush1.bf16.msra.mxu0 %v532
    %1857 = vmatprep.subr.bf16.mxu0 %v540
    %1858 = vmatpush1.bf16.msra.mxu0 %v539
    %1859 = vmatprep.subr.bf16.mxu0 %v547
    %1860 = vmatpush1.bf16.msra.mxu0 %v546
    %1861 = vmatprep.subr.bf16.mxu0 %v554
    %1862 = vmatpush1.bf16.msra.mxu0 %v553
    %1863 = vmatprep.subr.bf16.mxu0 %v561
    %1864 = vmatpush1.bf16.msra.mxu0 %v560
    %1865 = vmatprep.mubr.bf16.mxu0 %v1192
    %1866 = vmatmul.mubr.bf16.gmra.mrb[0].mxu0 %v1178
    %v1867 = vpop.f32.mrb[0].mxu0
    %v1868 = vadd.f32 0.0, %v1867
    %v1869 = vpop.f32.mrb[0].mxu0
    %v1870 = vadd.f32 0.0, %v1869
    %v1871 = vpop.f32.mrb[0].mxu0
    %v1872 = vpop.f32.mrb[0].mxu0
    %1873 = vdwg.mxu0
    %1874 = vmatprep.subr.bf16.mxu0 %v568
    %1875 = vmatpush1.bf16.msra.mxu0 %v567
    %1876 = vmatprep.subr.bf16.mxu0 %v575
    %1877 = vmatpush1.bf16.msra.mxu0 %v574
    %1878 = vmatprep.subr.bf16.mxu0 %v582
    %1879 = vmatpush1.bf16.msra.mxu0 %v581
    %1880 = vmatprep.subr.bf16.mxu0 %v589
    %1881 = vmatpush1.bf16.msra.mxu0 %v588
    %1882 = vmatprep.subr.bf16.mxu0 %v596
    %1883 = vmatpush1.bf16.msra.mxu0 %v595
    %1884 = vmatprep.subr.bf16.mxu0 %v603
    %1885 = vmatpush1.bf16.msra.mxu0 %v602
    %1886 = vmatprep.subr.bf16.mxu0 %v610
    %1887 = vmatpush1.bf16.msra.mxu0 %v609
    %1888 = vmatprep.subr.bf16.mxu0 %v617
    %1889 = vmatpush1.bf16.msra.mxu0 %v616
    %1890 = vmatprep.subr.bf16.mxu0 %v624
    %1891 = vmatpush1.bf16.msra.mxu0 %v623
    %1892 = vmatprep.subr.bf16.mxu0 %v631
    %1893 = vmatpush1.bf16.msra.mxu0 %v630
    %1894 = vmatprep.subr.bf16.mxu0 %v638
    %1895 = vmatpush1.bf16.msra.mxu0 %v637
    %1896 = vmatprep.subr.bf16.mxu0 %v645
    %1897 = vmatpush1.bf16.msra.mxu0 %v644
    %1898 = vmatprep.subr.bf16.mxu0 %v652
    %1899 = vmatpush1.bf16.msra.mxu0 %v651
    %1900 = vmatprep.subr.bf16.mxu0 %v659
    %1901 = vmatpush1.bf16.msra.mxu0 %v658
    %1902 = vmatprep.subr.bf16.mxu0 %v666
    %1903 = vmatpush1.bf16.msra.mxu0 %v665
    %1904 = vmatprep.subr.bf16.mxu0 %v673
    %1905 = vmatpush1.bf16.msra.mxu0 %v672
    %1906 = vmatprep.mubr.bf16.mxu0 %v1202
    %1907 = vmatmul.mubr.bf16.gmra.mrb[0].mxu0 %v1200
    %v1908 = vpop.f32.mrb[0].mxu0
    %v1909 = vadd.f32 %v1868, %v1908
    %v1910 = vpop.f32.mrb[0].mxu0
    %v1911 = vadd.f32 %v1870, %v1910
    %v1912 = vpop.f32.mrb[0].mxu0
    %v1913 = vpop.f32.mrb[0].mxu0
    %1914 = vdwg.mxu0
    %1915 = vmatprep.subr.bf16.mxu0 %v680
    %1916 = vmatpush1.bf16.msra.mxu0 %v679
    %1917 = vmatprep.subr.bf16.mxu0 %v687
    %1918 = vmatpush1.bf16.msra.mxu0 %v686
    %1919 = vmatprep.subr.bf16.mxu0 %v694
    %1920 = vmatpush1.bf16.msra.mxu0 %v693
    %1921 = vmatprep.subr.bf16.mxu0 %v701
    %1922 = vmatpush1.bf16.msra.mxu0 %v700
    %1923 = vmatprep.subr.bf16.mxu0 %v708
    %1924 = vmatpush1.bf16.msra.mxu0 %v707
    %1925 = vmatprep.subr.bf16.mxu0 %v715
    %1926 = vmatpush1.bf16.msra.mxu0 %v714
    %1927 = vmatprep.subr.bf16.mxu0 %v722
    %1928 = vmatpush1.bf16.msra.mxu0 %v721
    %1929 = vmatprep.subr.bf16.mxu0 %v729
    %1930 = vmatpush1.bf16.msra.mxu0 %v728
    %1931 = vmatprep.subr.bf16.mxu0 %v736
    %1932 = vmatpush1.bf16.msra.mxu0 %v735
    %1933 = vmatprep.subr.bf16.mxu0 %v743
    %1934 = vmatpush1.bf16.msra.mxu0 %v742
    %1935 = vmatprep.subr.bf16.mxu0 %v750
    %1936 = vmatpush1.bf16.msra.mxu0 %v749
    %1937 = vmatprep.subr.bf16.mxu0 %v757
    %1938 = vmatpush1.bf16.msra.mxu0 %v756
    %1939 = vmatprep.subr.bf16.mxu0 %v764
    %1940 = vmatpush1.bf16.msra.mxu0 %v763
    %1941 = vmatprep.subr.bf16.mxu0 %v771
    %1942 = vmatpush1.bf16.msra.mxu0 %v770
    %1943 = vmatprep.subr.bf16.mxu0 %v778
    %1944 = vmatpush1.bf16.msra.mxu0 %v777
    %1945 = vmatprep.subr.bf16.mxu0 %v785
    %1946 = vmatpush1.bf16.msra.mxu0 %v784
    %1947 = vmatprep.mubr.bf16.mxu0 %v1199
    %1948 = vmatmul.mubr.bf16.gmra.mrb[0].mxu0 %v1185
    %v1949 = vpop.f32.mrb[0].mxu0
    %v1950 = vadd.f32 %v1909, %v1949
    %v1951 = vpop.f32.mrb[0].mxu0
    %v1952 = vadd.f32 %v1911, %v1951
    %v1953 = vpop.f32.mrb[0].mxu0
    %v1954 = vpop.f32.mrb[0].mxu0
    %1955 = vdwg.mxu0
    %1956 = vmatprep.subr.bf16.mxu0 %v792
    %1957 = vmatpush1.bf16.msra.mxu0 %v791
    %1958 = vmatprep.subr.bf16.mxu0 %v799
    %1959 = vmatpush1.bf16.msra.mxu0 %v798
    %1960 = vmatprep.subr.bf16.mxu0 %v806
    %1961 = vmatpush1.bf16.msra.mxu0 %v805
    %1962 = vmatprep.subr.bf16.mxu0 %v813
    %1963 = vmatpush1.bf16.msra.mxu0 %v812
    %1964 = vmatprep.subr.bf16.mxu0 %v820
    %1965 = vmatpush1.bf16.msra.mxu0 %v819
    %1966 = vmatprep.subr.bf16.mxu0 %v827
    %1967 = vmatpush1.bf16.msra.mxu0 %v826
    %1968 = vmatprep.subr.bf16.mxu0 %v834
    %1969 = vmatpush1.bf16.msra.mxu0 %v833
    %1970 = vmatprep.subr.bf16.mxu0 %v841
    %1971 = vmatpush1.bf16.msra.mxu0 %v840
    %1972 = vmatprep.subr.bf16.mxu0 %v848
    %1973 = vmatpush1.bf16.msra.mxu0 %v847
    %1974 = vmatprep.subr.bf16.mxu0 %v855
    %1975 = vmatpush1.bf16.msra.mxu0 %v854
    %1976 = vmatprep.subr.bf16.mxu0 %v862
    %1977 = vmatpush1.bf16.msra.mxu0 %v861
    %1978 = vmatprep.subr.bf16.mxu0 %v869
    %1979 = vmatpush1.bf16.msra.mxu0 %v868
    %1980 = vmatprep.subr.bf16.mxu0 %v876
    %1981 = vmatpush1.bf16.msra.mxu0 %v875
    %1982 = vmatprep.subr.bf16.mxu0 %v883
    %1983 = vmatpush1.bf16.msra.mxu0 %v882
    %1984 = vmatprep.subr.bf16.mxu0 %v890
    %1985 = vmatpush1.bf16.msra.mxu0 %v889
    %1986 = vmatprep.subr.bf16.mxu0 %v897
    %1987 = vmatpush1.bf16.msra.mxu0 %v896
    %1988 = vmatprep.mubr.bf16.mxu0 %v1203
    %1989 = vmatmul.mubr.bf16.gmra.mrb[0].mxu0 %v1201
    %v1990 = vpop.f32.mrb[0].mxu0
    %v1991 = vadd.f32 %v1950, %v1990
    %v1992 = vpop.f32.mrb[0].mxu0
    %v1993 = vadd.f32 %v1952, %v1992
    %v1994 = vpop.f32.mrb[0].mxu0
    %v1995 = vpop.f32.mrb[0].mxu0
    %1996 = vdwg.mxu0
    %1997 = vmatprep.subr.bf16.mxu0 %v904
    %1998 = vmatpush1.bf16.msra.mxu0 %v903
    %1999 = vmatprep.subr.bf16.mxu0 %v911
    %2000 = vmatpush1.bf16.msra.mxu0 %v910
    %2001 = vmatprep.subr.bf16.mxu0 %v918
    %2002 = vmatpush1.bf16.msra.mxu0 %v917
    %2003 = vmatprep.subr.bf16.mxu0 %v925
    %2004 = vmatpush1.bf16.msra.mxu0 %v924
    %2005 = vmatprep.subr.bf16.mxu0 %v932
    %2006 = vmatpush1.bf16.msra.mxu0 %v931
    %2007 = vmatprep.subr.bf16.mxu0 %v939
    %2008 = vmatpush1.bf16.msra.mxu0 %v938
    %2009 = vmatprep.subr.bf16.mxu0 %v946
    %2010 = vmatpush1.bf16.msra.mxu0 %v945
    %2011 = vmatprep.subr.bf16.mxu0 %v953
    %2012 = vmatpush1.bf16.msra.mxu0 %v952
    %2013 = vmatprep.subr.bf16.mxu0 %v960
    %2014 = vmatpush1.bf16.msra.mxu0 %v959
    %2015 = vmatprep.subr.bf16.mxu0 %v967
    %2016 = vmatpush1.bf16.msra.mxu0 %v966
    %2017 = vmatprep.subr.bf16.mxu0 %v974
    %2018 = vmatpush1.bf16.msra.mxu0 %v973
    %2019 = vmatprep.subr.bf16.mxu0 %v981
    %2020 = vmatpush1.bf16.msra.mxu0 %v980
    %2021 = vmatprep.subr.bf16.mxu0 %v988
    %2022 = vmatpush1.bf16.msra.mxu0 %v987
    %2023 = vmatprep.subr.bf16.mxu0 %v995
    %2024 = vmatpush1.bf16.msra.mxu0 %v994
    %2025 = vmatprep.subr.bf16.mxu0 %v1002
    %2026 = vmatpush1.bf16.msra.mxu0 %v1001
    %2027 = vmatprep.subr.bf16.mxu0 %v1009
    %2028 = vmatpush1.bf16.msra.mxu0 %v1008
    %2029 = vmatprep.mubr.bf16.mxu0 %v1240
    %2030 = vmatmul.mubr.bf16.gmra.mrb[0].mxu0 %v1226
    %v2031 = vpop.f32.mrb[0].mxu0
    %v2032 = vadd.f32 %v1991, %v2031
    %v2033 = vpop.f32.mrb[0].mxu0
    %v2034 = vadd.f32 %v1993, %v2033
    %v2035 = vpop.f32.mrb[0].mxu0
    %v2036 = vpop.f32.mrb[0].mxu0
    %2037 = vdwg.mxu0
    %2038 = vmatprep.subr.bf16.mxu0 %v1016
    %2039 = vmatpush1.bf16.msra.mxu0 %v1015
    %2040 = vmatprep.subr.bf16.mxu0 %v1023
    %2041 = vmatpush1.bf16.msra.mxu0 %v1022
    %2042 = vmatprep.subr.bf16.mxu0 %v1030
    %2043 = vmatpush1.bf16.msra.mxu0 %v1029
    %2044 = vmatprep.subr.bf16.mxu0 %v1037
    %2045 = vmatpush1.bf16.msra.mxu0 %v1036
    %2046 = vmatprep.subr.bf16.mxu0 %v1044
    %2047 = vmatpush1.bf16.msra.mxu0 %v1043
    %2048 = vmatprep.subr.bf16.mxu0 %v1051
    %2049 = vmatpush1.bf16.msra.mxu0 %v1050
    %2050 = vmatprep.subr.bf16.mxu0 %v1058
    %2051 = vmatpush1.bf16.msra.mxu0 %v1057
    %2052 = vmatprep.subr.bf16.mxu0 %v1065
    %2053 = vmatpush1.bf16.msra.mxu0 %v1064
    %2054 = vmatprep.subr.bf16.mxu0 %v1072
    %2055 = vmatpush1.bf16.msra.mxu0 %v1071
    %2056 = vmatprep.subr.bf16.mxu0 %v1079
    %2057 = vmatpush1.bf16.msra.mxu0 %v1078
    %2058 = vmatprep.subr.bf16.mxu0 %v1086
    %2059 = vmatpush1.bf16.msra.mxu0 %v1085
    %2060 = vmatprep.subr.bf16.mxu0 %v1093
    %2061 = vmatpush1.bf16.msra.mxu0 %v1092
    %2062 = vmatprep.subr.bf16.mxu0 %v1100
    %2063 = vmatpush1.bf16.msra.mxu0 %v1099
    %2064 = vmatprep.subr.bf16.mxu0 %v1107
    %2065 = vmatpush1.bf16.msra.mxu0 %v1106
    %2066 = vmatprep.subr.bf16.mxu0 %v1114
    %2067 = vmatpush1.bf16.msra.mxu0 %v1113
    %2068 = vmatprep.subr.bf16.mxu0 %v1121
    %2069 = vmatpush1.bf16.msra.mxu0 %v1120
    %2070 = vmatprep.mubr.bf16.mxu0 %v1242
    %2071 = vmatmul.mubr.bf16.gmra.mrb[0].mxu0 %v1241
    %v2072 = vpop.f32.mrb[0].mxu0
    %v2073 = vadd.f32 %v2032, %v2072
    %v2074 = vpop.f32.mrb[0].mxu0
    %v2075 = vadd.f32 %v2034, %v2074
    %v2076 = vpop.f32.mrb[0].mxu0
    %v2077 = vpop.f32.mrb[0].mxu0
    %2078 = vdwg.mxu0
    %2079 = vmatprep.subr.bf16.mxu0 %v1128
    %2080 = vmatpush1.bf16.msra.mxu0 %v1127
    %2081 = vmatprep.subr.bf16.mxu0 %v1135
    %2082 = vmatpush1.bf16.msra.mxu0 %v1134
    %2083 = vmatprep.subr.bf16.mxu0 %v1142
    %2084 = vmatpush1.bf16.msra.mxu0 %v1141
    %2085 = vmatprep.subr.bf16.mxu0 %v1149
    %2086 = vmatpush1.bf16.msra.mxu0 %v1148
    %2087 = vmatprep.subr.bf16.mxu0 0
    %2088 = vmatpush1.bf16.msra.mxu0 0
    %2089 = vmatprep.subr.bf16.mxu0 0
    %2090 = vmatpush1.bf16.msra.mxu0 0
    %2091 = vmatprep.subr.bf16.mxu0 0
    %2092 = vmatpush1.bf16.msra.mxu0 0
    %2093 = vmatprep.subr.bf16.mxu0 0
    %2094 = vmatpush1.bf16.msra.mxu0 0
    %2095 = vmatprep.subr.bf16.mxu0 0
    %2096 = vmatpush1.bf16.msra.mxu0 0
    %2097 = vmatprep.subr.bf16.mxu0 0
    %2098 = vmatpush1.bf16.msra.mxu0 0
    %2099 = vmatprep.subr.bf16.mxu0 0
    %2100 = vmatpush1.bf16.msra.mxu0 0
    %2101 = vmatprep.subr.bf16.mxu0 0
    %2102 = vmatpush1.bf16.msra.mxu0 0
    %2103 = vmatprep.subr.bf16.mxu0 0
    %2104 = vmatpush1.bf16.msra.mxu0 0
    %2105 = vmatprep.subr.bf16.mxu0 0
    %2106 = vmatpush1.bf16.msra.mxu0 0
    %2107 = vmatprep.subr.bf16.mxu0 0
    %2108 = vmatpush1.bf16.msra.mxu0 0
    %2109 = vmatprep.subr.bf16.mxu0 0
    %2110 = vmatpush1.bf16.msra.mxu0 0
    %2111 = vmatprep.mubr.bf16.mxu0 0
    %2112 = vmatmul.mubr.bf16.gmra.mrb[0].mxu0 %v1257
    %v2113 = vpop.f32.mrb[0].mxu0
    %v2114 = vadd.f32 %v2073, %v2113
    %v2115 = vpop.f32.mrb[0].mxu0
    %v2116 = vadd.f32 %v2075, %v2115
    %v2117 = vpop.f32.mrb[0].mxu0
    %v2118 = vpop.f32.mrb[0].mxu0
    %2119 = vdwg.mxu0
    %2120 = vmatprep.subr.bf16.mxu0 0
    %2121 = vmatpush1.bf16.msra.mxu0 %v457
    %2122 = vmatprep.subr.bf16.mxu0 0
    %2123 = vmatpush1.bf16.msra.mxu0 %v464
    %2124 = vmatprep.subr.bf16.mxu0 0
    %2125 = vmatpush1.bf16.msra.mxu0 %v471
    %2126 = vmatprep.subr.bf16.mxu0 0
    %2127 = vmatpush1.bf16.msra.mxu0 %v478
    %2128 = vmatprep.subr.bf16.mxu0 0
    %2129 = vmatpush1.bf16.msra.mxu0 %v485
    %2130 = vmatprep.subr.bf16.mxu0 0
    %2131 = vmatpush1.bf16.msra.mxu0 %v492
    %2132 = vmatprep.subr.bf16.mxu0 0
    %2133 = vmatpush1.bf16.msra.mxu0 %v499
    %2134 = vmatprep.subr.bf16.mxu0 0
    %2135 = vmatpush1.bf16.msra.mxu0 %v506
    %2136 = vmatprep.subr.bf16.mxu0 0
    %2137 = vmatpush1.bf16.msra.mxu0 %v513
    %2138 = vmatprep.subr.bf16.mxu0 0
    %2139 = vmatpush1.bf16.msra.mxu0 %v520
    %2140 = vmatprep.subr.bf16.mxu0 0
    %2141 = vmatpush1.bf16.msra.mxu0 %v527
    %2142 = vmatprep.subr.bf16.mxu0 0
    %2143 = vmatpush1.bf16.msra.mxu0 %v534
    %2144 = vmatprep.subr.bf16.mxu0 0
    %2145 = vmatpush1.bf16.msra.mxu0 %v541
    %2146 = vmatprep.subr.bf16.mxu0 0
    %2147 = vmatpush1.bf16.msra.mxu0 %v548
    %2148 = vmatprep.subr.bf16.mxu0 0
    %2149 = vmatpush1.bf16.msra.mxu0 %v555
    %2150 = vmatprep.subr.bf16.mxu0 0
    %2151 = vmatpush1.bf16.msra.mxu0 %v562
    %2152 = vmatprep.mubr.bf16.mxu0 %v1192
    %2153 = vmatmul.mubr.bf16.gmra.mrb[0].mxu0 %v1178
    %v2154 = vpop.f32.mrb[0].mxu0
    %v2155 = vadd.f32 0.0, %v2154
    %v2156 = vpop.f32.mrb[0].mxu0
    %v2157 = vpop.f32.mrb[0].mxu0
    %v2158 = vpop.f32.mrb[0].mxu0
    %2159 = vdwg.mxu0
    %2160 = vmatprep.subr.bf16.mxu0 0
    %2161 = vmatpush1.bf16.msra.mxu0 %v569
    %2162 = vmatprep.subr.bf16.mxu0 0
    %2163 = vmatpush1.bf16.msra.mxu0 %v576
    %2164 = vmatprep.subr.bf16.mxu0 0
    %2165 = vmatpush1.bf16.msra.mxu0 %v583
    %2166 = vmatprep.subr.bf16.mxu0 0
    %2167 = vmatpush1.bf16.msra.mxu0 %v590
    %2168 = vmatprep.subr.bf16.mxu0 0
    %2169 = vmatpush1.bf16.msra.mxu0 %v597
    %2170 = vmatprep.subr.bf16.mxu0 0
    %2171 = vmatpush1.bf16.msra.mxu0 %v604
    %2172 = vmatprep.subr.bf16.mxu0 0
    %2173 = vmatpush1.bf16.msra.mxu0 %v611
    %2174 = vmatprep.subr.bf16.mxu0 0
    %2175 = vmatpush1.bf16.msra.mxu0 %v618
    %2176 = vmatprep.subr.bf16.mxu0 0
    %2177 = vmatpush1.bf16.msra.mxu0 %v625
    %2178 = vmatprep.subr.bf16.mxu0 0
    %2179 = vmatpush1.bf16.msra.mxu0 %v632
    %2180 = vmatprep.subr.bf16.mxu0 0
    %2181 = vmatpush1.bf16.msra.mxu0 %v639
    %2182 = vmatprep.subr.bf16.mxu0 0
    %2183 = vmatpush1.bf16.msra.mxu0 %v646
    %2184 = vmatprep.subr.bf16.mxu0 0
    %2185 = vmatpush1.bf16.msra.mxu0 %v653
    %2186 = vmatprep.subr.bf16.mxu0 0
    %2187 = vmatpush1.bf16.msra.mxu0 %v660
    %2188 = vmatprep.subr.bf16.mxu0 0
    %2189 = vmatpush1.bf16.msra.mxu0 %v667
    %2190 = vmatprep.subr.bf16.mxu0 0
    %2191 = vmatpush1.bf16.msra.mxu0 %v674
    %2192 = vmatprep.mubr.bf16.mxu0 %v1202
    %2193 = vmatmul.mubr.bf16.gmra.mrb[0].mxu0 %v1200
    %v2194 = vpop.f32.mrb[0].mxu0
    %v2195 = vadd.f32 %v2155, %v2194
    %v2196 = vpop.f32.mrb[0].mxu0
    %v2197 = vpop.f32.mrb[0].mxu0
    %v2198 = vpop.f32.mrb[0].mxu0
    %2199 = vdwg.mxu0
    %2200 = vmatprep.subr.bf16.mxu0 0
    %2201 = vmatpush1.bf16.msra.mxu0 %v681
    %2202 = vmatprep.subr.bf16.mxu0 0
    %2203 = vmatpush1.bf16.msra.mxu0 %v688
    %2204 = vmatprep.subr.bf16.mxu0 0
    %2205 = vmatpush1.bf16.msra.mxu0 %v695
    %2206 = vmatprep.subr.bf16.mxu0 0
    %2207 = vmatpush1.bf16.msra.mxu0 %v702
    %2208 = vmatprep.subr.bf16.mxu0 0
    %2209 = vmatpush1.bf16.msra.mxu0 %v709
    %2210 = vmatprep.subr.bf16.mxu0 0
    %2211 = vmatpush1.bf16.msra.mxu0 %v716
    %2212 = vmatprep.subr.bf16.mxu0 0
    %2213 = vmatpush1.bf16.msra.mxu0 %v723
    %2214 = vmatprep.subr.bf16.mxu0 0
    %2215 = vmatpush1.bf16.msra.mxu0 %v730
    %2216 = vmatprep.subr.bf16.mxu0 0
    %2217 = vmatpush1.bf16.msra.mxu0 %v737
    %2218 = vmatprep.subr.bf16.mxu0 0
    %2219 = vmatpush1.bf16.msra.mxu0 %v744
    %2220 = vmatprep.subr.bf16.mxu0 0
    %2221 = vmatpush1.bf16.msra.mxu0 %v751
    %2222 = vmatprep.subr.bf16.mxu0 0
    %2223 = vmatpush1.bf16.msra.mxu0 %v758
    %2224 = vmatprep.subr.bf16.mxu0 0
    %2225 = vmatpush1.bf16.msra.mxu0 %v765
    %2226 = vmatprep.subr.bf16.mxu0 0
    %2227 = vmatpush1.bf16.msra.mxu0 %v772
    %2228 = vmatprep.subr.bf16.mxu0 0
    %2229 = vmatpush1.bf16.msra.mxu0 %v779
    %2230 = vmatprep.subr.bf16.mxu0 0
    %2231 = vmatpush1.bf16.msra.mxu0 %v786
    %2232 = vmatprep.mubr.bf16.mxu0 %v1199
    %2233 = vmatmul.mubr.bf16.gmra.mrb[0].mxu0 %v1185
    %v2234 = vpop.f32.mrb[0].mxu0
    %v2235 = vadd.f32 %v2195, %v2234
    %v2236 = vpop.f32.mrb[0].mxu0
    %v2237 = vpop.f32.mrb[0].mxu0
    %v2238 = vpop.f32.mrb[0].mxu0
    %2239 = vdwg.mxu0
    %2240 = vmatprep.subr.bf16.mxu0 0
    %2241 = vmatpush1.bf16.msra.mxu0 %v793
    %2242 = vmatprep.subr.bf16.mxu0 0
    %2243 = vmatpush1.bf16.msra.mxu0 %v800
    %2244 = vmatprep.subr.bf16.mxu0 0
    %2245 = vmatpush1.bf16.msra.mxu0 %v807
    %2246 = vmatprep.subr.bf16.mxu0 0
    %2247 = vmatpush1.bf16.msra.mxu0 %v814
    %2248 = vmatprep.subr.bf16.mxu0 0
    %2249 = vmatpush1.bf16.msra.mxu0 %v821
    %2250 = vmatprep.subr.bf16.mxu0 0
    %2251 = vmatpush1.bf16.msra.mxu0 %v828
    %2252 = vmatprep.subr.bf16.mxu0 0
    %2253 = vmatpush1.bf16.msra.mxu0 %v835
    %2254 = vmatprep.subr.bf16.mxu0 0
    %2255 = vmatpush1.bf16.msra.mxu0 %v842
    %2256 = vmatprep.subr.bf16.mxu0 0
    %2257 = vmatpush1.bf16.msra.mxu0 %v849
    %2258 = vmatprep.subr.bf16.mxu0 0
    %2259 = vmatpush1.bf16.msra.mxu0 %v856
    %2260 = vmatprep.subr.bf16.mxu0 0
    %2261 = vmatpush1.bf16.msra.mxu0 %v863
    %2262 = vmatprep.subr.bf16.mxu0 0
    %2263 = vmatpush1.bf16.msra.mxu0 %v870
    %2264 = vmatprep.subr.bf16.mxu0 0
    %2265 = vmatpush1.bf16.msra.mxu0 %v877
    %2266 = vmatprep.subr.bf16.mxu0 0
    %2267 = vmatpush1.bf16.msra.mxu0 %v884
    %2268 = vmatprep.subr.bf16.mxu0 0
    %2269 = vmatpush1.bf16.msra.mxu0 %v891
    %2270 = vmatprep.subr.bf16.mxu0 0
    %2271 = vmatpush1.bf16.msra.mxu0 %v898
    %2272 = vmatprep.mubr.bf16.mxu0 %v1203
    %2273 = vmatmul.mubr.bf16.gmra.mrb[0].mxu0 %v1201
    %v2274 = vpop.f32.mrb[0].mxu0
    %v2275 = vadd.f32 %v2235, %v2274
    %v2276 = vpop.f32.mrb[0].mxu0
    %v2277 = vpop.f32.mrb[0].mxu0
    %v2278 = vpop.f32.mrb[0].mxu0
    %2279 = vdwg.mxu0
    %2280 = vmatprep.subr.bf16.mxu0 0
    %2281 = vmatpush1.bf16.msra.mxu0 %v905
    %2282 = vmatprep.subr.bf16.mxu0 0
    %2283 = vmatpush1.bf16.msra.mxu0 %v912
    %2284 = vmatprep.subr.bf16.mxu0 0
    %2285 = vmatpush1.bf16.msra.mxu0 %v919
    %2286 = vmatprep.subr.bf16.mxu0 0
    %2287 = vmatpush1.bf16.msra.mxu0 %v926
    %2288 = vmatprep.subr.bf16.mxu0 0
    %2289 = vmatpush1.bf16.msra.mxu0 %v933
    %2290 = vmatprep.subr.bf16.mxu0 0
    %2291 = vmatpush1.bf16.msra.mxu0 %v940
    %2292 = vmatprep.subr.bf16.mxu0 0
    %2293 = vmatpush1.bf16.msra.mxu0 %v947
    %2294 = vmatprep.subr.bf16.mxu0 0
    %2295 = vmatpush1.bf16.msra.mxu0 %v954
    %2296 = vmatprep.subr.bf16.mxu0 0
    %2297 = vmatpush1.bf16.msra.mxu0 %v961
    %2298 = vmatprep.subr.bf16.mxu0 0
    %2299 = vmatpush1.bf16.msra.mxu0 %v968
    %2300 = vmatprep.subr.bf16.mxu0 0
    %2301 = vmatpush1.bf16.msra.mxu0 %v975
    %2302 = vmatprep.subr.bf16.mxu0 0
    %2303 = vmatpush1.bf16.msra.mxu0 %v982
    %2304 = vmatprep.subr.bf16.mxu0 0
    %2305 = vmatpush1.bf16.msra.mxu0 %v989
    %2306 = vmatprep.subr.bf16.mxu0 0
    %2307 = vmatpush1.bf16.msra.mxu0 %v996
    %2308 = vmatprep.subr.bf16.mxu0 0
    %2309 = vmatpush1.bf16.msra.mxu0 %v1003
    %2310 = vmatprep.subr.bf16.mxu0 0
    %2311 = vmatpush1.bf16.msra.mxu0 %v1010
    %2312 = vmatprep.mubr.bf16.mxu0 %v1240
    %2313 = vmatmul.mubr.bf16.gmra.mrb[0].mxu0 %v1226
    %v2314 = vpop.f32.mrb[0].mxu0
    %v2315 = vadd.f32 %v2275, %v2314
    %v2316 = vpop.f32.mrb[0].mxu0
    %v2317 = vpop.f32.mrb[0].mxu0
    %v2318 = vpop.f32.mrb[0].mxu0
    %2319 = vdwg.mxu0
    %2320 = vmatprep.subr.bf16.mxu0 0
    %2321 = vmatpush1.bf16.msra.mxu0 %v1017
    %2322 = vmatprep.subr.bf16.mxu0 0
    %2323 = vmatpush1.bf16.msra.mxu0 %v1024
    %2324 = vmatprep.subr.bf16.mxu0 0
    %2325 = vmatpush1.bf16.msra.mxu0 %v1031
    %2326 = vmatprep.subr.bf16.mxu0 0
    %2327 = vmatpush1.bf16.msra.mxu0 %v1038
    %2328 = vmatprep.subr.bf16.mxu0 0
    %2329 = vmatpush1.bf16.msra.mxu0 %v1045
    %2330 = vmatprep.subr.bf16.mxu0 0
    %2331 = vmatpush1.bf16.msra.mxu0 %v1052
    %2332 = vmatprep.subr.bf16.mxu0 0
    %2333 = vmatpush1.bf16.msra.mxu0 %v1059
    %2334 = vmatprep.subr.bf16.mxu0 0
    %2335 = vmatpush1.bf16.msra.mxu0 %v1066
    %2336 = vmatprep.subr.bf16.mxu0 0
    %2337 = vmatpush1.bf16.msra.mxu0 %v1073
    %2338 = vmatprep.subr.bf16.mxu0 0
    %2339 = vmatpush1.bf16.msra.mxu0 %v1080
    %2340 = vmatprep.subr.bf16.mxu0 0
    %2341 = vmatpush1.bf16.msra.mxu0 %v1087
    %2342 = vmatprep.subr.bf16.mxu0 0
    %2343 = vmatpush1.bf16.msra.mxu0 %v1094
    %2344 = vmatprep.subr.bf16.mxu0 0
    %2345 = vmatpush1.bf16.msra.mxu0 %v1101
    %2346 = vmatprep.subr.bf16.mxu0 0
    %2347 = vmatpush1.bf16.msra.mxu0 %v1108
    %2348 = vmatprep.subr.bf16.mxu0 0
    %2349 = vmatpush1.bf16.msra.mxu0 %v1115
    %2350 = vmatprep.subr.bf16.mxu0 0
    %2351 = vmatpush1.bf16.msra.mxu0 %v1122
    %2352 = vmatprep.mubr.bf16.mxu0 %v1242
    %2353 = vmatmul.mubr.bf16.gmra.mrb[0].mxu0 %v1241
    %v2354 = vpop.f32.mrb[0].mxu0
    %v2355 = vadd.f32 %v2315, %v2354
    %v2356 = vpop.f32.mrb[0].mxu0
    %v2357 = vpop.f32.mrb[0].mxu0
    %v2358 = vpop.f32.mrb[0].mxu0
    %2359 = vdwg.mxu0
    %2360 = vmatprep.subr.bf16.mxu0 0
    %2361 = vmatpush1.bf16.msra.mxu0 %v1129
    %2362 = vmatprep.subr.bf16.mxu0 0
    %2363 = vmatpush1.bf16.msra.mxu0 %v1136
    %2364 = vmatprep.subr.bf16.mxu0 0
    %2365 = vmatpush1.bf16.msra.mxu0 %v1143
    %2366 = vmatprep.subr.bf16.mxu0 0
    %2367 = vmatpush1.bf16.msra.mxu0 %v1150
    %2368 = vmatprep.subr.bf16.mxu0 0
    %2369 = vmatpush1.bf16.msra.mxu0 0
    %2370 = vmatprep.subr.bf16.mxu0 0
    %2371 = vmatpush1.bf16.msra.mxu0 0
    %2372 = vmatprep.subr.bf16.mxu0 0
    %2373 = vmatpush1.bf16.msra.mxu0 0
    %2374 = vmatprep.subr.bf16.mxu0 0
    %2375 = vmatpush1.bf16.msra.mxu0 0
    %2376 = vmatprep.subr.bf16.mxu0 0
    %2377 = vmatpush1.bf16.msra.mxu0 0
    %2378 = vmatprep.subr.bf16.mxu0 0
    %2379 = vmatpush1.bf16.msra.mxu0 0
    %2380 = vmatprep.subr.bf16.mxu0 0
    %2381 = vmatpush1.bf16.msra.mxu0 0
    %2382 = vmatprep.subr.bf16.mxu0 0
    %2383 = vmatpush1.bf16.msra.mxu0 0
    %2384 = vmatprep.subr.bf16.mxu0 0
    %2385 = vmatpush1.bf16.msra.mxu0 0
    %2386 = vmatprep.subr.bf16.mxu0 0
    %2387 = vmatpush1.bf16.msra.mxu0 0
    %2388 = vmatprep.subr.bf16.mxu0 0
    %2389 = vmatpush1.bf16.msra.mxu0 0
    %2390 = vmatprep.subr.bf16.mxu0 0
    %2391 = vmatpush1.bf16.msra.mxu0 0
    %2392 = vmatprep.mubr.bf16.mxu0 0
    %2393 = vmatmul.mubr.bf16.gmra.mrb[0].mxu0 %v1257
    %v2394 = vpop.f32.mrb[0].mxu0
    %v2395 = vadd.f32 %v2355, %v2394
    %v2396 = vpop.f32.mrb[0].mxu0
    %v2397 = vpop.f32.mrb[0].mxu0
    %v2398 = vpop.f32.mrb[0].mxu0
    %2399 = vdwg.mxu0
    %v2400 = vlaneseq
    %v2401 = vshrl.u32 %v2400, 7
    %v2402 = vsub.s32 7, %v2401
    %v2403 = vrot.slane %v92, %v2402
    %v2404 = vlaneseq
    %v2405 = vshrl.u32 %v2404, 7
    %v2406 = vsub.s32 7, %v2405
    %v2407 = vrot.slane %v93, %v2406
    %v2408 = vlaneseq
    %v2409 = vshrl.u32 %v2408, 7
    %v2410 = vsub.s32 7, %v2409
    %v2411 = vrot.slane %v94, %v2410
    %v2412 = vlaneseq
    %v2413 = vshrl.u32 %v2412, 7
    %v2414 = vsub.s32 7, %v2413
    %v2415 = vrot.slane %v95, %v2414
    %v2416 = vlaneseq
    %v2417 = vshrl.u32 %v2416, 7
    %v2418 = vsub.s32 7, %v2417
    %v2419 = vrot.slane %v96, %v2418
    %v2420 = vlaneseq
    %v2421 = vshrl.u32 %v2420, 7
    %v2422 = vsub.s32 7, %v2421
    %v2423 = vrot.slane %v97, %v2422
    %v2424 = vlaneseq
    %v2425 = vshrl.u32 %v2424, 7
    %v2426 = vsub.s32 7, %v2425
    %v2427 = vrot.slane %v98, %v2426
    %v2428 = vmul.f32 %v1540, %v2403
    %v2429 = vmul.f32 %v1542, %v2407
    %v2430 = vmul.f32 %v1827, %v2411
    %v2431 = vmul.f32 %v1829, %v2415
    %v2432 = vmul.f32 %v2114, %v2419
    %v2433 = vmul.f32 %v2116, %v2423
    %v2434 = vmul.f32 %v2395, %v2427
    %v2435 = vlaneseq
    %v2436 = vshrl.u32 %v2435, 7
    %v2437 = vsub.s32 0, %v2436
    %v2438 = vrot.slane %v92, %v2437
    %v2439 = vlaneseq
    %v2440 = vshrl.u32 %v2439, 7
    %v2441 = vsub.s32 0, %v2440
    %v2442 = vrot.slane %v93, %v2441
    %v2443 = vlaneseq
    %v2444 = vshrl.u32 %v2443, 7
    %v2445 = vsub.s32 0, %v2444
    %v2446 = vrot.slane %v94, %v2445
    %v2447 = vlaneseq
    %v2448 = vshrl.u32 %v2447, 7
    %v2449 = vsub.s32 0, %v2448
    %v2450 = vrot.slane %v95, %v2449
    %v2451 = vlaneseq
    %v2452 = vshrl.u32 %v2451, 7
    %v2453 = vsub.s32 0, %v2452
    %v2454 = vrot.slane %v96, %v2453
    %v2455 = vlaneseq
    %v2456 = vshrl.u32 %v2455, 7
    %v2457 = vsub.s32 0, %v2456
    %v2458 = vrot.slane %v97, %v2457
    %v2459 = vlaneseq
    %v2460 = vshrl.u32 %v2459, 7
    %v2461 = vsub.s32 0, %v2460
    %v2462 = vrot.slane %v98, %v2461
    %v2463 = vadd.f32 %v2428, %v2438
    %v2464 = vadd.f32 %v2429, %v2442
    %v2465 = vadd.f32 %v2430, %v2446
    %v2466 = vadd.f32 %v2431, %v2450
    %v2467 = vadd.f32 %v2432, %v2454
    %v2468 = vadd.f32 %v2433, %v2458
    %v2469 = vadd.f32 %v2434, %v2462
    %v2470 = vmax.f32 %v2463, 0.0
    %v2471 = vmax.f32 %v2464, 0.0
    %v2472 = vmax.f32 %v2465, 0.0
    %v2473 = vmax.f32 %v2466, 0.0
    %v2474 = vmax.f32 %v2467, 0.0
    %v2475 = vmax.f32 %v2468, 0.0
    %v2476 = vmax.f32 %v2469, 0.0
    %v2477 = vld [vmem:[#allocation8] sm:$0xff]
    %v2478 = vld [vmem:[#allocation8 + $0x8] sm:$0xff]
    %v2479 = vld [vmem:[#allocation8 + $0x10] sm:$0xff]
    %v2480 = vld [vmem:[#allocation8 + $0x18] sm:$0xff]
    %v2481 = vld [vmem:[#allocation8 + $0x20] sm:$0xff]
    %v2482 = vld [vmem:[#allocation8 + $0x28] sm:$0xff]
    %v2483 = vld [vmem:[#allocation8 + $0x30] sm:$0xff]
    %v2484 = vld [vmem:[#allocation8 + $0x38] sm:$0xff]
    %v2485 = vld [vmem:[#allocation8 + $0x40] sm:$0xff]
    %v2486 = vld [vmem:[#allocation8 + $0x48] sm:$0xff]
    %v2487 = vld [vmem:[#allocation8 + $0x50] sm:$0xff]
    %v2488 = vld [vmem:[#allocation8 + $0x58] sm:$0xff]
    %v2489 = vld [vmem:[#allocation8 + $0x60] sm:$0xff]
    %v2490 = vld [vmem:[#allocation8 + $0x68] sm:$0xff]
    %v2491 = vld [vmem:[#allocation8 + $0x70] sm:$0xff]
    %v2492 = vld [vmem:[#allocation8 + $0x78] sm:$0xff]
    %v2493 = vld [vmem:[#allocation8 + $0x80] sm:$0xff]
    %v2494 = vld [vmem:[#allocation8 + $0x88] sm:$0xff]
    %v2495 = vld [vmem:[#allocation8 + $0x90] sm:$0xff]
    %v2496 = vld [vmem:[#allocation8 + $0x98] sm:$0xff]
    %v2497 = vld [vmem:[#allocation8 + $0xa0] sm:$0xff]
    %v2498 = vld [vmem:[#allocation8 + $0xa8] sm:$0xff]
    %v2499 = vld [vmem:[#allocation8 + $0xb0] sm:$0xff]
    %v2500 = vld [vmem:[#allocation8 + $0xb8] sm:$0xff]
    %v2501 = vld [vmem:[#allocation8 + $0xc0] sm:$0xff]
    %v2502 = vld [vmem:[#allocation8 + $0xc8] sm:$0xff]
    %v2503 = vld [vmem:[#allocation8 + $0xd0] sm:$0xff]
    %v2504 = vld [vmem:[#allocation8 + $0xd8] sm:$0xff]
    %v2505 = vld [vmem:[#allocation8 + $0xe0] sm:$0xff]
    %v2506 = vld [vmem:[#allocation8 + $0xe8] sm:$0xff]
    %v2507 = vld [vmem:[#allocation8 + $0xf0] sm:$0xff]
    %v2508 = vld [vmem:[#allocation8 + $0xf8] sm:$0xff]
    %v2509 = vld [vmem:[#allocation8 + $0x100] sm:$0xff]
    %v2510 = vld [vmem:[#allocation8 + $0x108] sm:$0xff]
    %v2511 = vld [vmem:[#allocation8 + $0x110] sm:$0xff]
    %v2512 = vld [vmem:[#allocation8 + $0x118] sm:$0xff]
    %v2513 = vld [vmem:[#allocation8 + $0x120] sm:$0xff]
    %v2514 = vld [vmem:[#allocation8 + $0x128] sm:$0xff]
    %v2515 = vld [vmem:[#allocation8 + $0x130] sm:$0xff]
    %v2516 = vld [vmem:[#allocation8 + $0x138] sm:$0xff]
    %v2517 = vld [vmem:[#allocation8 + $0x140] sm:$0xff]
    %v2518 = vld [vmem:[#allocation8 + $0x148] sm:$0xff]
    %v2519 = vld [vmem:[#allocation8 + $0x150] sm:$0xff]
    %v2520 = vld [vmem:[#allocation8 + $0x158] sm:$0xff]
    %v2521 = vld [vmem:[#allocation8 + $0x160] sm:$0xff]
    %v2522 = vld [vmem:[#allocation8 + $0x168] sm:$0xff]
    %v2523 = vld [vmem:[#allocation8 + $0x170] sm:$0xff]
    %v2524 = vld [vmem:[#allocation8 + $0x178] sm:$0xff]
    %v2525 = vld [vmem:[#allocation8 + $0x180] sm:$0xff]
    %v2526 = vld [vmem:[#allocation8 + $0x188] sm:$0xff]
    %v2527 = vld [vmem:[#allocation8 + $0x190] sm:$0xff]
    %v2528 = vld [vmem:[#allocation8 + $0x198] sm:$0xff]
    %v2529 = vld [vmem:[#allocation8 + $0x1a0] sm:$0xff]
    %v2530 = vld [vmem:[#allocation8 + $0x1a8] sm:$0xff]
    %v2531 = vld [vmem:[#allocation8 + $0x1b0] sm:$0xff]
    %v2532 = vld [vmem:[#allocation8 + $0x1b8] sm:$0xff]
    %v2533 = vunpack.c.l.s8.bf16 %v2477
    %v2534 = vunpack.c.l.s8.bf16 %v2478
    %v2535 = vunpack.c.h.s8.bf16 %v2477
    %v2536 = vunpack.c.h.s8.bf16 %v2478
    %v2537 = vunpack.c.l.s8.bf16 %v2479
    %v2538 = vunpack.c.l.s8.bf16 %v2480
    %v2539 = vunpack.c.h.s8.bf16 %v2479
    %v2540 = vunpack.c.h.s8.bf16 %v2480
    %v2541 = vunpack.c.l.s8.bf16 %v2481
    %v2542 = vunpack.c.l.s8.bf16 %v2482
    %v2543 = vunpack.c.h.s8.bf16 %v2481
    %v2544 = vunpack.c.h.s8.bf16 %v2482
    %v2545 = vunpack.c.l.s8.bf16 %v2483
    %v2546 = vunpack.c.l.s8.bf16 %v2484
    %v2547 = vunpack.c.h.s8.bf16 %v2483
    %v2548 = vunpack.c.h.s8.bf16 %v2484
    %v2549 = vunpack.c.l.s8.bf16 %v2485
    %v2550 = vunpack.c.l.s8.bf16 %v2486
    %v2551 = vunpack.c.h.s8.bf16 %v2485
    %v2552 = vunpack.c.h.s8.bf16 %v2486
    %v2553 = vunpack.c.l.s8.bf16 %v2487
    %v2554 = vunpack.c.l.s8.bf16 %v2488
    %v2555 = vunpack.c.h.s8.bf16 %v2487
    %v2556 = vunpack.c.h.s8.bf16 %v2488
    %v2557 = vunpack.c.l.s8.bf16 %v2489
    %v2558 = vunpack.c.l.s8.bf16 %v2490
    %v2559 = vunpack.c.h.s8.bf16 %v2489
    %v2560 = vunpack.c.h.s8.bf16 %v2490
    %v2561 = vunpack.c.l.s8.bf16 %v2491
    %v2562 = vunpack.c.l.s8.bf16 %v2492
    %v2563 = vunpack.c.h.s8.bf16 %v2491
    %v2564 = vunpack.c.h.s8.bf16 %v2492
    %v2565 = vunpack.c.l.s8.bf16 %v2493
    %v2566 = vunpack.c.l.s8.bf16 %v2494
    %v2567 = vunpack.c.h.s8.bf16 %v2493
    %v2568 = vunpack.c.h.s8.bf16 %v2494
    %v2569 = vunpack.c.l.s8.bf16 %v2495
    %v2570 = vunpack.c.l.s8.bf16 %v2496
    %v2571 = vunpack.c.h.s8.bf16 %v2495
    %v2572 = vunpack.c.h.s8.bf16 %v2496
    %v2573 = vunpack.c.l.s8.bf16 %v2497
    %v2574 = vunpack.c.l.s8.bf16 %v2498
    %v2575 = vunpack.c.h.s8.bf16 %v2497
    %v2576 = vunpack.c.h.s8.bf16 %v2498
    %v2577 = vunpack.c.l.s8.bf16 %v2499
    %v2578 = vunpack.c.l.s8.bf16 %v2500
    %v2579 = vunpack.c.h.s8.bf16 %v2499
    %v2580 = vunpack.c.h.s8.bf16 %v2500
    %v2581 = vunpack.c.l.s8.bf16 %v2501
    %v2582 = vunpack.c.l.s8.bf16 %v2502
    %v2583 = vunpack.c.h.s8.bf16 %v2501
    %v2584 = vunpack.c.h.s8.bf16 %v2502
    %v2585 = vunpack.c.l.s8.bf16 %v2503
    %v2586 = vunpack.c.l.s8.bf16 %v2504
    %v2587 = vunpack.c.h.s8.bf16 %v2503
    %v2588 = vunpack.c.h.s8.bf16 %v2504
    %v2589 = vunpack.c.l.s8.bf16 %v2505
    %v2590 = vunpack.c.l.s8.bf16 %v2506
    %v2591 = vunpack.c.h.s8.bf16 %v2505
    %v2592 = vunpack.c.h.s8.bf16 %v2506
    %v2593 = vunpack.c.l.s8.bf16 %v2507
    %v2594 = vunpack.c.l.s8.bf16 %v2508
    %v2595 = vunpack.c.h.s8.bf16 %v2507
    %v2596 = vunpack.c.h.s8.bf16 %v2508
    %v2597 = vunpack.c.l.s8.bf16 %v2509
    %v2598 = vunpack.c.l.s8.bf16 %v2510
    %v2599 = vunpack.c.h.s8.bf16 %v2509
    %v2600 = vunpack.c.h.s8.bf16 %v2510
    %v2601 = vunpack.c.l.s8.bf16 %v2511
    %v2602 = vunpack.c.l.s8.bf16 %v2512
    %v2603 = vunpack.c.h.s8.bf16 %v2511
    %v2604 = vunpack.c.h.s8.bf16 %v2512
    %v2605 = vunpack.c.l.s8.bf16 %v2513
    %v2606 = vunpack.c.l.s8.bf16 %v2514
    %v2607 = vunpack.c.h.s8.bf16 %v2513
    %v2608 = vunpack.c.h.s8.bf16 %v2514
    %v2609 = vunpack.c.l.s8.bf16 %v2515
    %v2610 = vunpack.c.l.s8.bf16 %v2516
    %v2611 = vunpack.c.h.s8.bf16 %v2515
    %v2612 = vunpack.c.h.s8.bf16 %v2516
    %v2613 = vunpack.c.l.s8.bf16 %v2517
    %v2614 = vunpack.c.l.s8.bf16 %v2518
    %v2615 = vunpack.c.h.s8.bf16 %v2517
    %v2616 = vunpack.c.h.s8.bf16 %v2518
    %v2617 = vunpack.c.l.s8.bf16 %v2519
    %v2618 = vunpack.c.l.s8.bf16 %v2520
    %v2619 = vunpack.c.h.s8.bf16 %v2519
    %v2620 = vunpack.c.h.s8.bf16 %v2520
    %v2621 = vunpack.c.l.s8.bf16 %v2521
    %v2622 = vunpack.c.l.s8.bf16 %v2522
    %v2623 = vunpack.c.h.s8.bf16 %v2521
    %v2624 = vunpack.c.h.s8.bf16 %v2522
    %v2625 = vunpack.c.l.s8.bf16 %v2523
    %v2626 = vunpack.c.l.s8.bf16 %v2524
    %v2627 = vunpack.c.h.s8.bf16 %v2523
    %v2628 = vunpack.c.h.s8.bf16 %v2524
    %v2629 = vunpack.c.l.s8.bf16 %v2525
    %v2630 = vunpack.c.l.s8.bf16 %v2526
    %v2631 = vunpack.c.h.s8.bf16 %v2525
    %v2632 = vunpack.c.h.s8.bf16 %v2526
    %v2633 = vunpack.c.l.s8.bf16 %v2527
    %v2634 = vunpack.c.l.s8.bf16 %v2528
    %v2635 = vunpack.c.h.s8.bf16 %v2527
    %v2636 = vunpack.c.h.s8.bf16 %v2528
    %v2637 = vunpack.c.l.s8.bf16 %v2529
    %v2638 = vunpack.c.l.s8.bf16 %v2530
    %v2639 = vunpack.c.h.s8.bf16 %v2529
    %v2640 = vunpack.c.h.s8.bf16 %v2530
    %v2641 = vunpack.c.l.s8.bf16 %v2531
    %v2642 = vunpack.c.l.s8.bf16 %v2532
    %v2643 = vunpack.c.h.s8.bf16 %v2531
    %v2644 = vunpack.c.h.s8.bf16 %v2532
    %v2645 = vpack.c.bf16 %v2470, %v2470
    %v2646 = vpack.c.bf16 %v2471, %v2471
    %v2647 = vpack.c.bf16 %v2472, %v2472
    %v2648 = vpack.c.bf16 %v2473, %v2473
    %v2649 = vpack.c.bf16 %v2474, %v2474
    %v2650 = vpack.c.bf16 %v2475, %v2475
    %v2651 = vpack.c.bf16 %v2476, %v2476
    %2652 = vmatprep.subr.bf16.mxu0 %v2534
    %2653 = vmatpush1.bf16.msra.mxu0 %v2533
    %2654 = vmatprep.subr.bf16.mxu0 %v2536
    %2655 = vmatpush1.bf16.msra.mxu0 %v2535
    %2656 = vmatprep.subr.bf16.mxu0 %v2538
    %2657 = vmatpush1.bf16.msra.mxu0 %v2537
    %2658 = vmatprep.subr.bf16.mxu0 %v2540
    %2659 = vmatpush1.bf16.msra.mxu0 %v2539
    %2660 = vmatprep.subr.bf16.mxu0 %v2542
    %2661 = vmatpush1.bf16.msra.mxu0 %v2541
    %2662 = vmatprep.subr.bf16.mxu0 %v2544
    %2663 = vmatpush1.bf16.msra.mxu0 %v2543
    %2664 = vmatprep.subr.bf16.mxu0 %v2546
    %2665 = vmatpush1.bf16.msra.mxu0 %v2545
    %2666 = vmatprep.subr.bf16.mxu0 %v2548
    %2667 = vmatpush1.bf16.msra.mxu0 %v2547
    %2668 = vmatprep.subr.bf16.mxu0 %v2550
    %2669 = vmatpush1.bf16.msra.mxu0 %v2549
    %2670 = vmatprep.subr.bf16.mxu0 %v2552
    %2671 = vmatpush1.bf16.msra.mxu0 %v2551
    %2672 = vmatprep.subr.bf16.mxu0 %v2554
    %2673 = vmatpush1.bf16.msra.mxu0 %v2553
    %2674 = vmatprep.subr.bf16.mxu0 %v2556
    %2675 = vmatpush1.bf16.msra.mxu0 %v2555
    %2676 = vmatprep.subr.bf16.mxu0 %v2558
    %2677 = vmatpush1.bf16.msra.mxu0 %v2557
    %2678 = vmatprep.subr.bf16.mxu0 %v2560
    %2679 = vmatpush1.bf16.msra.mxu0 %v2559
    %2680 = vmatprep.subr.bf16.mxu0 %v2562
    %2681 = vmatpush1.bf16.msra.mxu0 %v2561
    %2682 = vmatprep.subr.bf16.mxu0 %v2564
    %2683 = vmatpush1.bf16.msra.mxu0 %v2563
    %2684 = vmatprep.mubr.bf16.mxu0 %v2646
    %2685 = vmatmul.mubr.bf16.gmra.mrb[0].mxu0 %v2645
    %v2686 = vpop.f32.mrb[0].mxu0
    %v2687 = vadd.f32 0.0, %v2686
    %v2688 = vpop.f32.mrb[0].mxu0
    %v2689 = vadd.f32 0.0, %v2688
    %v2690 = vpop.f32.mrb[0].mxu0
    %v2691 = vpop.f32.mrb[0].mxu0
    %2692 = vdwg.mxu0
    %2693 = vmatprep.subr.bf16.mxu0 %v2566
    %2694 = vmatpush1.bf16.msra.mxu0 %v2565
    %2695 = vmatprep.subr.bf16.mxu0 %v2568
    %2696 = vmatpush1.bf16.msra.mxu0 %v2567
    %2697 = vmatprep.subr.bf16.mxu0 %v2570
    %2698 = vmatpush1.bf16.msra.mxu0 %v2569
    %2699 = vmatprep.subr.bf16.mxu0 %v2572
    %2700 = vmatpush1.bf16.msra.mxu0 %v2571
    %2701 = vmatprep.subr.bf16.mxu0 %v2574
    %2702 = vmatpush1.bf16.msra.mxu0 %v2573
    %2703 = vmatprep.subr.bf16.mxu0 %v2576
    %2704 = vmatpush1.bf16.msra.mxu0 %v2575
    %2705 = vmatprep.subr.bf16.mxu0 %v2578
    %2706 = vmatpush1.bf16.msra.mxu0 %v2577
    %2707 = vmatprep.subr.bf16.mxu0 %v2580
    %2708 = vmatpush1.bf16.msra.mxu0 %v2579
    %2709 = vmatprep.subr.bf16.mxu0 %v2582
    %2710 = vmatpush1.bf16.msra.mxu0 %v2581
    %2711 = vmatprep.subr.bf16.mxu0 %v2584
    %2712 = vmatpush1.bf16.msra.mxu0 %v2583
    %2713 = vmatprep.subr.bf16.mxu0 %v2586
    %2714 = vmatpush1.bf16.msra.mxu0 %v2585
    %2715 = vmatprep.subr.bf16.mxu0 %v2588
    %2716 = vmatpush1.bf16.msra.mxu0 %v2587
    %2717 = vmatprep.subr.bf16.mxu0 %v2590
    %2718 = vmatpush1.bf16.msra.mxu0 %v2589
    %2719 = vmatprep.subr.bf16.mxu0 %v2592
    %2720 = vmatpush1.bf16.msra.mxu0 %v2591
    %2721 = vmatprep.subr.bf16.mxu0 %v2594
    %2722 = vmatpush1.bf16.msra.mxu0 %v2593
    %2723 = vmatprep.subr.bf16.mxu0 %v2596
    %2724 = vmatpush1.bf16.msra.mxu0 %v2595
    %2725 = vmatprep.mubr.bf16.mxu0 %v2648
    %2726 = vmatmul.mubr.bf16.gmra.mrb[0].mxu0 %v2647
    %v2727 = vpop.f32.mrb[0].mxu0
    %v2728 = vadd.f32 %v2687, %v2727
    %v2729 = vpop.f32.mrb[0].mxu0
    %v2730 = vadd.f32 %v2689, %v2729
    %v2731 = vpop.f32.mrb[0].mxu0
    %v2732 = vpop.f32.mrb[0].mxu0
    %2733 = vdwg.mxu0
    %2734 = vmatprep.subr.bf16.mxu0 %v2598
    %2735 = vmatpush1.bf16.msra.mxu0 %v2597
    %2736 = vmatprep.subr.bf16.mxu0 %v2600
    %2737 = vmatpush1.bf16.msra.mxu0 %v2599
    %2738 = vmatprep.subr.bf16.mxu0 %v2602
    %2739 = vmatpush1.bf16.msra.mxu0 %v2601
    %2740 = vmatprep.subr.bf16.mxu0 %v2604
    %2741 = vmatpush1.bf16.msra.mxu0 %v2603
    %2742 = vmatprep.subr.bf16.mxu0 %v2606
    %2743 = vmatpush1.bf16.msra.mxu0 %v2605
    %2744 = vmatprep.subr.bf16.mxu0 %v2608
    %2745 = vmatpush1.bf16.msra.mxu0 %v2607
    %2746 = vmatprep.subr.bf16.mxu0 %v2610
    %2747 = vmatpush1.bf16.msra.mxu0 %v2609
    %2748 = vmatprep.subr.bf16.mxu0 %v2612
    %2749 = vmatpush1.bf16.msra.mxu0 %v2611
    %2750 = vmatprep.subr.bf16.mxu0 %v2614
    %2751 = vmatpush1.bf16.msra.mxu0 %v2613
    %2752 = vmatprep.subr.bf16.mxu0 %v2616
    %2753 = vmatpush1.bf16.msra.mxu0 %v2615
    %2754 = vmatprep.subr.bf16.mxu0 %v2618
    %2755 = vmatpush1.bf16.msra.mxu0 %v2617
    %2756 = vmatprep.subr.bf16.mxu0 %v2620
    %2757 = vmatpush1.bf16.msra.mxu0 %v2619
    %2758 = vmatprep.subr.bf16.mxu0 %v2622
    %2759 = vmatpush1.bf16.msra.mxu0 %v2621
    %2760 = vmatprep.subr.bf16.mxu0 %v2624
    %2761 = vmatpush1.bf16.msra.mxu0 %v2623
    %2762 = vmatprep.subr.bf16.mxu0 %v2626
    %2763 = vmatpush1.bf16.msra.mxu0 %v2625
    %2764 = vmatprep.subr.bf16.mxu0 %v2628
    %2765 = vmatpush1.bf16.msra.mxu0 %v2627
    %2766 = vmatprep.mubr.bf16.mxu0 %v2650
    %2767 = vmatmul.mubr.bf16.gmra.mrb[0].mxu0 %v2649
    %v2768 = vpop.f32.mrb[0].mxu0
    %v2769 = vadd.f32 %v2728, %v2768
    %v2770 = vpop.f32.mrb[0].mxu0
    %v2771 = vadd.f32 %v2730, %v2770
    %v2772 = vpop.f32.mrb[0].mxu0
    %v2773 = vpop.f32.mrb[0].mxu0
    %2774 = vdwg.mxu0
    %2775 = vmatprep.subr.bf16.mxu0 %v2630
    %2776 = vmatpush1.bf16.msra.mxu0 %v2629
    %2777 = vmatprep.subr.bf16.mxu0 %v2632
    %2778 = vmatpush1.bf16.msra.mxu0 %v2631
    %2779 = vmatprep.subr.bf16.mxu0 %v2634
    %2780 = vmatpush1.bf16.msra.mxu0 %v2633
    %2781 = vmatprep.subr.bf16.mxu0 %v2636
    %2782 = vmatpush1.bf16.msra.mxu0 %v2635
    %2783 = vmatprep.subr.bf16.mxu0 %v2638
    %2784 = vmatpush1.bf16.msra.mxu0 %v2637
    %2785 = vmatprep.subr.bf16.mxu0 %v2640
    %2786 = vmatpush1.bf16.msra.mxu0 %v2639
    %2787 = vmatprep.subr.bf16.mxu0 %v2642
    %2788 = vmatpush1.bf16.msra.mxu0 %v2641
    %2789 = vmatprep.subr.bf16.mxu0 %v2644
    %2790 = vmatpush1.bf16.msra.mxu0 %v2643
    %2791 = vmatprep.subr.bf16.mxu0 0
    %2792 = vmatpush1.bf16.msra.mxu0 0
    %2793 = vmatprep.subr.bf16.mxu0 0
    %2794 = vmatpush1.bf16.msra.mxu0 0
    %2795 = vmatprep.subr.bf16.mxu0 0
    %2796 = vmatpush1.bf16.msra.mxu0 0
    %2797 = vmatprep.subr.bf16.mxu0 0
    %2798 = vmatpush1.bf16.msra.mxu0 0
    %2799 = vmatprep.subr.bf16.mxu0 0
    %2800 = vmatpush1.bf16.msra.mxu0 0
    %2801 = vmatprep.subr.bf16.mxu0 0
    %2802 = vmatpush1.bf16.msra.mxu0 0
    %2803 = vmatprep.subr.bf16.mxu0 0
    %2804 = vmatpush1.bf16.msra.mxu0 0
    %2805 = vmatprep.subr.bf16.mxu0 0
    %2806 = vmatpush1.bf16.msra.mxu0 0
    %2807 = vmatprep.mubr.bf16.mxu0 0
    %2808 = vmatmul.mubr.bf16.gmra.mrb[0].mxu0 %v2651
    %v2809 = vpop.f32.mrb[0].mxu0
    %v2810 = vadd.f32 %v2769, %v2809
    %v2811 = vpop.f32.mrb[0].mxu0
    %v2812 = vadd.f32 %v2771, %v2811
    %v2813 = vpop.f32.mrb[0].mxu0
    %v2814 = vpop.f32.mrb[0].mxu0
    %2815 = vdwg.mxu0
    %v2816 = vlaneseq
    %v2817 = vshrl.u32 %v2816, 7
    %v2818 = vsub.s32 0, %v2817
    %v2819 = vrot.slane %v99, %v2818
    %v2820 = vlaneseq
    %v2821 = vshrl.u32 %v2820, 7
    %v2822 = vsub.s32 0, %v2821
    %v2823 = vrot.slane %v100, %v2822
    %v2824 = vmul.f32 %v2810, %v2819
    %v2825 = vmul.f32 %v2812, %v2823
    %v2826 = vlaneseq
    %v2827 = vshrl.u32 %v2826, 7
    %v2828 = vsub.s32 1, %v2827
    %v2829 = vrot.slane %v92, %v2828
    %v2830 = vlaneseq
    %v2831 = vshrl.u32 %v2830, 7
    %v2832 = vsub.s32 1, %v2831
    %v2833 = vrot.slane %v93, %v2832
    %v2834 = vadd.f32 %v2824, %v2829
    %v2835 = vadd.f32 %v2825, %v2833
    %v2836 = vmax.f32 %v2834, 0.0
    %v2837 = vmax.f32 %v2835, 0.0
    %v2838 = vpack.c.bf16 %v2836, %v2836
    %v2839 = vpack.c.bf16 %v2837, %v2837
    %v2840 = vld [vmem:[%s4] sm:$0xf]
    %v2841 = vld [vmem:[%s4 + $0x4] sm:$0xf]
    %v2842 = vld [vmem:[%s4 + $0x8] sm:$0xf]
    %v2843 = vld [vmem:[%s4 + $0xc] sm:$0xf]
    %v2844 = vld [vmem:[%s4 + $0x10] sm:$0xf]
    %v2845 = vld [vmem:[%s4 + $0x14] sm:$0xf]
    %v2846 = vld [vmem:[%s4 + $0x18] sm:$0xf]
    %v2847 = vld [vmem:[%s4 + $0x1c] sm:$0xf]
    %v2848 = vld [vmem:[%s4 + $0x20] sm:$0xf]
    %v2849 = vld [vmem:[%s4 + $0x24] sm:$0xf]
    %v2850 = vld [vmem:[%s4 + $0x28] sm:$0xf]
    %v2851 = vld [vmem:[%s4 + $0x2c] sm:$0xf]
    %v2852 = vld [vmem:[%s4 + $0x30] sm:$0xf]
    %v2853 = vld [vmem:[%s4 + $0x34] sm:$0xf]
    %v2854 = vld [vmem:[%s4 + $0x38] sm:$0xf]
    %v2855 = vld [vmem:[%s4 + $0x3c] sm:$0xf]
    %v2856 = vld [vmem:[%s4 + $0x40] sm:$0xf]
    %v2857 = vld [vmem:[%s4 + $0x44] sm:$0xf]
    %v2858 = vld [vmem:[%s4 + $0x48] sm:$0xf]
    %v2859 = vld [vmem:[%s4 + $0x4c] sm:$0xf]
    %v2860 = vld [vmem:[%s4 + $0x50] sm:$0xf]
    %v2861 = vld [vmem:[%s4 + $0x54] sm:$0xf]
    %v2862 = vld [vmem:[%s4 + $0x58] sm:$0xf]
    %v2863 = vld [vmem:[%s4 + $0x5c] sm:$0xf]
    %v2864 = vld [vmem:[%s4 + $0x60] sm:$0xf]
    %v2865 = vld [vmem:[%s4 + $0x64] sm:$0xf]
    %v2866 = vld [vmem:[%s4 + $0x68] sm:$0xf]
    %v2867 = vld [vmem:[%s4 + $0x6c] sm:$0xf]
    %v2868 = vld [vmem:[%s4 + $0x70] sm:$0xf]
    %v2869 = vld [vmem:[%s4 + $0x74] sm:$0xf]
    %v2870 = vld [vmem:[%s4 + $0x78] sm:$0xf]
    %v2871 = vld [vmem:[%s4 + $0x7c] sm:$0xf]
    %v2872 = vlaneseq
    %v2873 = vshrl.u32 %v2872, 7
    %v2874 = vsub.s32 2, %v2873
    %v2875 = vrot.slane %v92, %v2874
    %v2908 = vunpack.c.l.b16 %v2840
    %v2909 = vunpack.c.l.b16 %v2841
    %v2910 = vunpack.c.l.b16 %v2842
    %v2911 = vunpack.c.l.b16 %v2843
    %v2912 = vunpack.c.l.b16 %v2844
    %v2913 = vunpack.c.l.b16 %v2845
    %v2914 = vunpack.c.l.b16 %v2846
    %v2915 = vunpack.c.l.b16 %v2847
    %v2916 = vunpack.c.l.b16 %v2848
    %v2917 = vunpack.c.l.b16 %v2849
    %v2918 = vunpack.c.l.b16 %v2850
    %v2919 = vunpack.c.l.b16 %v2851
    %v2920 = vunpack.c.l.b16 %v2852
    %v2921 = vunpack.c.l.b16 %v2853
    %v2922 = vunpack.c.l.b16 %v2854
    %v2923 = vunpack.c.l.b16 %v2855
    %v2924 = vunpack.c.l.b16 %v2856
    %v2925 = vunpack.c.l.b16 %v2857
    %v2926 = vunpack.c.l.b16 %v2858
    %v2927 = vunpack.c.l.b16 %v2859
    %v2928 = vunpack.c.l.b16 %v2860
    %v2929 = vunpack.c.l.b16 %v2861
    %v2930 = vunpack.c.l.b16 %v2862
    %v2931 = vunpack.c.l.b16 %v2863
    %v2932 = vunpack.c.l.b16 %v2864
    %v2933 = vunpack.c.l.b16 %v2865
    %v2934 = vunpack.c.l.b16 %v2866
    %v2935 = vunpack.c.l.b16 %v2867
    %v2936 = vunpack.c.l.b16 %v2868
    %v2937 = vunpack.c.l.b16 %v2869
    %v2938 = vunpack.c.l.b16 %v2870
    %v2939 = vunpack.c.l.b16 %v2871
    %v2940 = vpack.c.b16 %v2909, %v2908
    %v2941 = vpack.c.b16 %v2911, %v2910
    %v2942 = vpack.c.b16 %v2913, %v2912
    %v2943 = vpack.c.b16 %v2915, %v2914
    %v2944 = vpack.c.b16 %v2917, %v2916
    %v2945 = vpack.c.b16 %v2919, %v2918
    %v2946 = vpack.c.b16 %v2921, %v2920
    %v2947 = vpack.c.b16 %v2923, %v2922
    %v2948 = vpack.c.b16 %v2925, %v2924
    %v2949 = vpack.c.b16 %v2927, %v2926
    %v2950 = vpack.c.b16 %v2929, %v2928
    %v2951 = vpack.c.b16 %v2931, %v2930
    %v2952 = vpack.c.b16 %v2933, %v2932
    %v2953 = vpack.c.b16 %v2935, %v2934
    %v2954 = vpack.c.b16 %v2937, %v2936
    %v2955 = vpack.c.b16 %v2939, %v2938
    %2972 = vmatprep.subr.bf16.mxu0 0
    %2973 = vmatpush1.bf16.msra.mxu0 %v2940
    %2974 = vmatprep.subr.bf16.mxu0 0
    %2975 = vmatpush1.bf16.msra.mxu0 %v2941
    %2976 = vmatprep.subr.bf16.mxu0 0
    %2977 = vmatpush1.bf16.msra.mxu0 %v2942
    %2978 = vmatprep.subr.bf16.mxu0 0
    %2979 = vmatpush1.bf16.msra.mxu0 %v2943
    %2980 = vmatprep.subr.bf16.mxu0 0
    %2981 = vmatpush1.bf16.msra.mxu0 %v2944
    %2982 = vmatprep.subr.bf16.mxu0 0
    %2983 = vmatpush1.bf16.msra.mxu0 %v2945
    %2984 = vmatprep.subr.bf16.mxu0 0
    %2985 = vmatpush1.bf16.msra.mxu0 %v2946
    %2986 = vmatprep.subr.bf16.mxu0 0
    %2987 = vmatpush1.bf16.msra.mxu0 %v2947
    %2988 = vmatprep.subr.bf16.mxu0 0
    %2989 = vmatpush1.bf16.msra.mxu0 %v2948
    %2990 = vmatprep.subr.bf16.mxu0 0
    %2991 = vmatpush1.bf16.msra.mxu0 %v2949
    %2992 = vmatprep.subr.bf16.mxu0 0
    %2993 = vmatpush1.bf16.msra.mxu0 %v2950
    %2994 = vmatprep.subr.bf16.mxu0 0
    %2995 = vmatpush1.bf16.msra.mxu0 %v2951
    %2996 = vmatprep.subr.bf16.mxu0 0
    %2997 = vmatpush1.bf16.msra.mxu0 %v2952
    %2998 = vmatprep.subr.bf16.mxu0 0
    %2999 = vmatpush1.bf16.msra.mxu0 %v2953
    %3000 = vmatprep.subr.bf16.mxu0 0
    %3001 = vmatpush1.bf16.msra.mxu0 %v2954
    %3002 = vmatprep.subr.bf16.mxu0 0
    %3003 = vmatpush1.bf16.msra.mxu0 %v2955
    %3004 = vmatprep.mubr.bf16.mxu0 %v2839
    %3005 = vmatmul.mubr.bf16.gmra.mrb[0].mxu0 %v2838
    %v3006 = vpop.f32.mrb[0].mxu0
    %v3007 = vadd.f32 %v2875, %v3006
    %v3008 = vpop.f32.mrb[0].mxu0
    %v3009 = vpop.f32.mrb[0].mxu0
    %v3010 = vpop.f32.mrb[0].mxu0
    %3011 = vdwg.mxu0
    %v3012 = vmax.f32 %v3007, 0.0
    %v3013 = vld [vmem:[#allocation5] sm:$0x3]
    %3015 = vset.pattern.permute.xlu0 0
    %3016 = vperm.xlu0 %3015, %v3013
    %v3017 = vpop.permute.xlu0 %3016
    %v3019 = vlaneseq
    %v3020 = vshrl.u32 %v3019, 7
    %v3021 = vsub.s32 5, %v3020
    %v3022 = vrot.slane %v92, %v3021
    %v3023 = vmul.f32 %v3017, %v3022
    %3024 = vset.pattern.permute.xlu0 1
    %3025 = vperm.xlu0 %3024, %v3013
    %v3026 = vpop.permute.xlu0 %3025
    %v3028 = vlaneseq
    %v3029 = vshrl.u32 %v3028, 7
    %v3030 = vsub.s32 6, %v3029
    %v3031 = vrot.slane %v92, %v3030
    %v3032 = vmul.f32 %v3026, %v3031
    %v3033 = vadd.f32 %v3023, %v3032
    %v3034 = vlaneseq
    %v3035 = vshrl.u32 %v3034, 7
    %v3036 = vsub.s32 3, %v3035
    %v3037 = vrot.slane %v92, %v3036
    %v3038 = vadd.f32 %v3033, %v3037
    %v3039 = vmax.f32 %v3038, 0.0
    %v3040 = vld [vmem:[%s5] sm:$0xf]
    %v3041 = vld [vmem:[%s5 + $0x4] sm:$0xf]
    %v3042 = vld [vmem:[%s5 + $0x8] sm:$0xf]
    %v3043 = vld [vmem:[%s5 + $0xc] sm:$0xf]
    %v3044 = vld [vmem:[%s5 + $0x10] sm:$0xf]
    %v3045 = vld [vmem:[%s5 + $0x14] sm:$0xf]
    %v3046 = vld [vmem:[%s5 + $0x18] sm:$0xf]
    %v3047 = vld [vmem:[%s5 + $0x1c] sm:$0xf]
    %v3048 = vpack.c.bf16 %v3012, %v3012
    %v3049 = vpack.c.bf16 %v3039, %v3039
    %v3054 = vunpack.c.l.b16 %v3044
    %v3055 = vunpack.c.l.b16 %v3045
    %v3056 = vunpack.c.l.b16 %v3046
    %v3057 = vunpack.c.l.b16 %v3047
    %v3058 = vpack.c.b16 %v3055, %v3054
    %v3059 = vpack.c.b16 %v3057, %v3056
    %vm3062 = vcmask 261120
    %v3064 = vsel %vm3062, %v3049, 0
    %3066 = vmatprep.subr.bf16.mxu0 0
    %3067 = vmatpush1.bf16.msra.mxu0 %v3058
    %3068 = vmatprep.subr.bf16.mxu0 0
    %3069 = vmatpush1.bf16.msra.mxu0 %v3059
    %3070 = vmatprep.subr.bf16.mxu0 0
    %3071 = vmatpush1.bf16.msra.mxu0 0
    %3072 = vmatprep.subr.bf16.mxu0 0
    %3073 = vmatpush1.bf16.msra.mxu0 0
    %3074 = vmatprep.subr.bf16.mxu0 0
    %3075 = vmatpush1.bf16.msra.mxu0 0
    %3076 = vmatprep.subr.bf16.mxu0 0
    %3077 = vmatpush1.bf16.msra.mxu0 0
    %3078 = vmatprep.subr.bf16.mxu0 0
    %3079 = vmatpush1.bf16.msra.mxu0 0
    %3080 = vmatprep.subr.bf16.mxu0 0
    %3081 = vmatpush1.bf16.msra.mxu0 0
    %3082 = vmatprep.subr.bf16.mxu0 0
    %3083 = vmatpush1.bf16.msra.mxu0 0
    %3084 = vmatprep.subr.bf16.mxu0 0
    %3085 = vmatpush1.bf16.msra.mxu0 0
    %3086 = vmatprep.subr.bf16.mxu0 0
    %3087 = vmatpush1.bf16.msra.mxu0 0
    %3088 = vmatprep.subr.bf16.mxu0 0
    %3089 = vmatpush1.bf16.msra.mxu0 0
    %3090 = vmatprep.subr.bf16.mxu0 0
    %3091 = vmatpush1.bf16.msra.mxu0 0
    %3092 = vmatprep.subr.bf16.mxu0 0
    %3093 = vmatpush1.bf16.msra.mxu0 0
    %3094 = vmatprep.subr.bf16.mxu0 0
    %3095 = vmatpush1.bf16.msra.mxu0 0
    %3096 = vmatprep.subr.bf16.mxu0 0
    %3097 = vmatpush1.bf16.msra.mxu0 0
    %3098 = vmatprep.mubr.bf16.mxu0 0
    %3099 = vmatmul.mubr.bf16.gmra.mrb[0].mxu0 %v3064
    %v3100 = vpop.f32.mrb[0].mxu0
    %v3101 = vadd.f32 0.0, %v3100
    %v3102 = vpop.f32.mrb[0].mxu0
    %v3103 = vpop.f32.mrb[0].mxu0
    %v3104 = vpop.f32.mrb[0].mxu0
    %3105 = vdwg.mxu0
    %v3110 = vunpack.c.l.b16 %v3040
    %v3111 = vunpack.c.l.b16 %v3041
    %v3112 = vunpack.c.l.b16 %v3042
    %v3113 = vunpack.c.l.b16 %v3043
    %v3114 = vpack.c.b16 %v3111, %v3110
    %v3115 = vpack.c.b16 %v3113, %v3112
    %v3119 = vsel %vm3062, %v3048, 0
    %3121 = vmatprep.subr.bf16.mxu0 0
    %3122 = vmatpush1.bf16.msra.mxu0 %v3114
    %3123 = vmatprep.subr.bf16.mxu0 0
    %3124 = vmatpush1.bf16.msra.mxu0 %v3115
    %3125 = vmatprep.subr.bf16.mxu0 0
    %3126 = vmatpush1.bf16.msra.mxu0 0
    %3127 = vmatprep.subr.bf16.mxu0 0
    %3128 = vmatpush1.bf16.msra.mxu0 0
    %3129 = vmatprep.subr.bf16.mxu0 0
    %3130 = vmatpush1.bf16.msra.mxu0 0
    %3131 = vmatprep.subr.bf16.mxu0 0
    %3132 = vmatpush1.bf16.msra.mxu0 0
    %3133 = vmatprep.subr.bf16.mxu0 0
    %3134 = vmatpush1.bf16.msra.mxu0 0
    %3135 = vmatprep.subr.bf16.mxu0 0
    %3136 = vmatpush1.bf16.msra.mxu0 0
    %3137 = vmatprep.subr.bf16.mxu0 0
    %3138 = vmatpush1.bf16.msra.mxu0 0
    %3139 = vmatprep.subr.bf16.mxu0 0
    %3140 = vmatpush1.bf16.msra.mxu0 0
    %3141 = vmatprep.subr.bf16.mxu0 0
    %3142 = vmatpush1.bf16.msra.mxu0 0
    %3143 = vmatprep.subr.bf16.mxu0 0
    %3144 = vmatpush1.bf16.msra.mxu0 0
    %3145 = vmatprep.subr.bf16.mxu0 0
    %3146 = vmatpush1.bf16.msra.mxu0 0
    %3147 = vmatprep.subr.bf16.mxu0 0
    %3148 = vmatpush1.bf16.msra.mxu0 0
    %3149 = vmatprep.subr.bf16.mxu0 0
    %3150 = vmatpush1.bf16.msra.mxu0 0
    %3151 = vmatprep.subr.bf16.mxu0 0
    %3152 = vmatpush1.bf16.msra.mxu0 0
    %3153 = vmatprep.mubr.bf16.mxu0 0
    %3154 = vmatmul.mubr.bf16.gmra.mrb[0].mxu0 %v3119
    %v3155 = vpop.f32.mrb[0].mxu0
    %v3156 = vadd.f32 %v3101, %v3155
    %v3157 = vpop.f32.mrb[0].mxu0
    %v3158 = vpop.f32.mrb[0].mxu0
    %v3159 = vpop.f32.mrb[0].mxu0
    %3160 = vdwg.mxu0
    %v3161 = vlaneseq
    %v3162 = vshrl.u32 %v3161, 7
    %v3163 = vsub.s32 4, %v3162
    %v3164 = vrot.slane %v92, %v3163
    %v3165 = vadd.f32 %v3156, %v3164
    %vm3166 = vcmask 25600
    %3167 = vst.msk [vmem:[#allocation11] sm:$0x3] %vm3166, %v3165
    // Predicated region
    $region50: #{tpu_custom_call.1} parent=1 // pred_check
      _
    $region51: #{tpu_custom_call.1} parent=1 // pred_check_branch
      %3169 = sbr.rel (0) target = $region53
    $region52: #{tpu_custom_call.1} parent=1 // pred_region
      %s3171 = ssub.s32 32, 32
      %3172 = vsyncadd [#allocation4], %s3171
      %s3174 = sshll.u32 [#allocation11], 4
      %s3175 = int_to_ptr.vmem [resolvable:$true] %s3174
      %3177 = dma.vmem_to_hbm [thread:$0]  %s3175, 32, %s7, [#allocation4]
    $region53: #{tpu_custom_call.1} parent=1 // pred_fallthru
      _
    // Predicated region
    $region54: #{tpu_custom_call.1} parent=1 // pred_check
      _
    $region55: #{tpu_custom_call.1} parent=1 // pred_check_branch
      %3179 = sbr.rel (0) target = $region57
    $region56: #{tpu_custom_call.1} parent=1 // pred_region
      %3180 = dma.done [#allocation4], 32
    $region57: #{tpu_custom_call.1} parent=1 // pred_fallthru
      _
    %3181 = vsyncpa [#allocation3], 1
    %3182 = vsyncpa [#allocation6], 1
    %3183 = vsyncpa [#allocation9], 1
    %3184 = vsyncpa [#allocation4], 1

</llo_original>
